<compile_context>
chip_gen: v7x
topology: tpu7x:2x2x1
jax: 0.10.0
libtpu: 0.0.40
codegen_flags: <defaults>
</compile_context>

<pallas_src>
import functools

import jax
import jax.numpy as jnp
import numpy as np
from jax.experimental import pallas as pl
from jax.experimental.pallas import tpu as pltpu


def _round_up(x, m):
    return ((x + m - 1) // m) * m


# ---------------------------------------------------------------------------
# Kernel
# ---------------------------------------------------------------------------
def _decoder_step_kernel(
    emb_ref, h0_ref, c0_ref, enc_ref,
    w_att_enc_ref, w_att_state_ref, att_b_ref,
    inl_w_ctx_ref, inl_w_emb_ref, inl_b_ref,
    lstm_wih_ref, lstm_whh_ref, lstm_b_ref,
    out_w_ref, out_b_ref,
    logp_ref, lse_ref, h1_ref, c1_ref,
    hid_ref, m_ref, s_ref,
    *, fuse_logsoftmax,
):
    j = pl.program_id(0)
    nj = pl.num_programs(0)
    Bp, W, Hp = enc_ref.shape
    L = h0_ref.shape[0]

    # ---- attention + input_line + LSTM: computed once, on the first vocab tile
    @pl.when(j == 0)
    def _():
        h0 = h0_ref[...]                                   # (L, Bp, Hp)
        c0 = c0_ref[...]
        enc = enc_ref[...]                                 # (Bp, W, Hp)
        emb = emb_ref[...]                                 # (Bp, Hp)

        # attention scores with split weights (no (Bp, W, 2Hp) concat)
        att_state = h0[L - 1] * c0[L - 1]                  # (Bp, Hp)
        w_enc = w_att_enc_ref[...]                         # (1, Hp)
        w_st = w_att_state_ref[...]                        # (1, Hp)
        s_enc = jnp.sum(enc * w_enc[None, :, :], axis=-1)               # (Bp, W)
        s_state = jnp.sum(att_state * w_st, axis=-1, keepdims=True)     # (Bp, 1)
        scores = s_enc + s_state + att_b_ref[0, 0]                      # (Bp, W)

        # reproduce the original shifted-score bug:
        # softmax over [0, s_0, ..., s_{W-2}]
        shifted = jnp.concatenate(
            [jnp.zeros((Bp, 1), jnp.float32), scores[:, : W - 1]], axis=1)
        mx = jnp.max(shifted, axis=1, keepdims=True)
        e = jnp.exp(shifted - mx)
        attn = e / jnp.sum(e, axis=1, keepdims=True)        # (Bp, W)

        # context = bmm(attn, encoder_output); enc lanes are 128-aligned
        ctx = jnp.sum(attn[:, :, None] * enc, axis=1)       # (Bp, Hp)

        # input_line with split weights (no (Bp, 2Hp) concat)
        xin = (jnp.dot(ctx, inl_w_ctx_ref[...], preferred_element_type=jnp.float32)
               + jnp.dot(emb, inl_w_emb_ref[...], preferred_element_type=jnp.float32)
               + inl_b_ref[...])                            # (Bp, Hp)

        # n_layers LSTM, single time step; W_ih / W_hh as two dots (no concat copy)
        layer_in = xin
        for l in range(L):
            h_prev = h0[l]
            c_prev = c0[l]
            gates = (jnp.dot(layer_in, lstm_wih_ref[l], preferred_element_type=jnp.float32)
                     + jnp.dot(h_prev, lstm_whh_ref[l], preferred_element_type=jnp.float32)
                     + lstm_b_ref[l])                       # (Bp, 4Hp), [i,f,g,o]
            i_g = jax.nn.sigmoid(gates[:, 0 * Hp:1 * Hp])
            f_g = jax.nn.sigmoid(gates[:, 1 * Hp:2 * Hp])
            g_g = jnp.tanh(gates[:, 2 * Hp:3 * Hp])
            o_g = jax.nn.sigmoid(gates[:, 3 * Hp:4 * Hp])
            c_new = f_g * c_prev + i_g * g_g
            h_new = o_g * jnp.tanh(c_new)
            h1_ref[l] = h_new
            c1_ref[l] = c_new
            layer_in = h_new

        # bf16 copy of the top hidden state: feeds the MXU directly on every
        # vocab tile (no per-tile f32 upcast of the streamed bf16 weight).
        hid_ref[...] = layer_in.astype(jnp.bfloat16)
        if not fuse_logsoftmax:
            m_ref[...] = jnp.full(m_ref.shape, -jnp.inf, jnp.float32)
            s_ref[...] = jnp.zeros(s_ref.shape, jnp.float32)

    # ---- per-vocab-tile output projection: native bf16 x bf16 -> f32 MXU dot
    logits = (jnp.dot(hid_ref[...], out_w_ref[...],
                      preferred_element_type=jnp.float32)
              + out_b_ref[...])                             # (Bp, tV) f32

    if fuse_logsoftmax:
        # single-tile path: full log_softmax fused in-kernel (no extra XLA op,
        # no HBM round-trip of the raw logits)
        mx = jnp.max(logits, axis=1, keepdims=True)
        lse = mx + jnp.log(jnp.sum(jnp.exp(logits - mx), axis=1, keepdims=True))
        logp_ref[...] = logits - lse                        # lane-dense store
        lse_ref[...] = lse
    else:
        # streamed path: lane-dense logits store + online logsumexp (f32 math,
        # v5e-friendly); wrapper does the final `logits - lse`.
        logp_ref[...] = logits
        m_prev = m_ref[...]
        t_max = jnp.max(logits, axis=1, keepdims=True)
        m_new = jnp.maximum(m_prev, t_max)
        s_ref[...] = (s_ref[...] * jnp.exp(m_prev - m_new)
                      + jnp.sum(jnp.exp(logits - m_new), axis=1, keepdims=True))
        m_ref[...] = m_new

        @pl.when(j == nj - 1)
        def _():
            lse_ref[...] = m_ref[...] + jnp.log(s_ref[...])


# ---------------------------------------------------------------------------
# Packing (done once) + wrapper
# ---------------------------------------------------------------------------
def choose_tile_v(n_words, max_tile_v=4096):
    """Single resident tile for small/moderate vocabs; large (>=2048) streamed
    tiles otherwise so per-step DMA time dominates grid-step overhead."""
    return min(_round_up(n_words, 128), max_tile_v)


def _estimate_vmem_bytes(Bp, W, Hp, L, tile_v):
    f32, bf16 = 4, 2
    const_in = (Bp * Hp                      # emb
                + 2 * L * Bp * Hp            # h0, c0
                + Bp * W * Hp                # encoder_output
                + 2 * Hp + 1                 # attention weights / bias
                + 2 * Hp * Hp + Hp           # input_line
                + 2 * L * Hp * 4 * Hp        # lstm W_ih / W_hh
                + L * 4 * Hp) * f32          # lstm bias
    streamed = Hp * tile_v * bf16 + tile_v * f32            # out_w, out_b
    outs = (Bp * tile_v + Bp + 2 * L * Bp * Hp) * f32
    scratch = Bp * Hp * bf16 + 2 * Bp * f32
    # inputs / streamed tiles / tiled output are double-buffered by the pipeline
    return 2 * (const_in + streamed) + 2 * outs + scratch


def _vmem_limit_bytes(est_bytes):
    """Generation-aware scoped-VMEM limit: cover the working set with headroom
    but stay under physical VMEM (64 MiB on v7x, 128 MiB on v5e/v6e)."""
    cap = 100 * 1024 * 1024
    try:  # best effort; fall back to a conservative cap if the query fails
        info = pltpu.get_tpu_info()
        cap = min(cap, int(getattr(info, "vmem_capacity_bytes")) * 7 // 8)
    except Exception:
        pass
    return int(min(max(2 * est_bytes, 32 * 1024 * 1024), cap))


def pack_params(params, *, tile_v):
    """Pad / split / cast the module parameters into the kernel layout."""
    V, H = params["emb_w"].shape
    L = params["wih"].shape[0]
    Hp = _round_up(H, 128)
    Vp = _round_up(V, tile_v)

    def pad_to(a, shape):
        return jnp.pad(a, [(0, s - d) for s, d in zip(shape, a.shape)])

    att_w = params["att_w"]                                  # (1, 2H): [enc | att_state]
    packed = {
        "emb_w": params["emb_w"],                            # gathered in XLA wrapper
        "w_att_enc": pad_to(att_w[:, :H], (1, Hp)),
        "w_att_state": pad_to(att_w[:, H:], (1, Hp)),
        "att_b": params["att_b"],                            # (1, 1)
        "inl_w_ctx": pad_to(params["inl_w"][:H, :], (Hp, Hp)),
        "inl_w_emb": pad_to(params["inl_w"][H:, :], (Hp, Hp)),
        "inl_b": pad_to(params["inl_b"], (1, Hp)),
    }

    # LSTM: pad each [i|f|g|o] gate block to Hp lanes; keep W_ih / W_hh separate.
    def pad_gate_cols(w):                                    # (R, 4H) -> (R, 4Hp)
        r = w.shape[0]
        w4 = w.reshape(r, 4, H)
        return jnp.pad(w4, ((0, 0), (0, 0), (0, Hp - H))).reshape(r, 4 * Hp)

    wih, whh, lb = [], [], []
    for l in range(L):
        wih.append(pad_to(pad_gate_cols(params["wih"][l]), (Hp, 4 * Hp)))
        whh.append(pad_to(pad_gate_cols(params["whh"][l]), (Hp, 4 * Hp)))
        lb.append(pad_gate_cols(params["lstm_b"][l]))        # (1, 4Hp)
    packed["lstm_wih"] = jnp.stack(wih)
    packed["lstm_whh"] = jnp.stack(whh)
    packed["lstm_b"] = jnp.stack(lb)

    # Output projection: bf16 storage, consumed natively by the MXU (f32 acc).
    packed["out_w"] = pad_to(params["out_w"], (Hp, Vp)).astype(jnp.bfloat16)
    out_b = jnp.full((1, Vp), -1e30, jnp.float32)            # padded vocab ~ -inf
    packed["out_b"] = out_b.at[:, :V].set(params["out_b"])
    return packed


def arrdecoder_forward(packed, ids, state, encoder_output, *, tile_v):
    h0, c0 = state
    B, W, H = encoder_output.shape
    L = h0.shape[0]
    V = packed["emb_w"].shape[0]
    Hp = packed["inl_b"].shape[1]
    Vp = packed["out_b"].shape[1]
    Bp = _round_up(B, 8)
    n_tiles = Vp // tile_v
    fuse = (n_tiles == 1)

    # Embedding row gather in XLA (no one-hot matmul, no (V,H) table in VMEM).
    emb = packed["emb_w"][ids[:, 0]]                                     # (B, H)

    # Zero-pad batch to sublane multiple and hidden to lane multiple (exact).
    emb_p = jnp.pad(emb, ((0, Bp - B), (0, Hp - H)))
    enc_p = jnp.pad(encoder_output, ((0, Bp - B), (0, 0), (0, Hp - H)))
    h0_p = jnp.pad(h0, ((0, 0), (0, Bp - B), (0, Hp - H)))
    c0_p = jnp.pad(c0, ((0, 0), (0, Bp - B), (0, Hp - H)))

    vmem_limit = _vmem_limit_bytes(_estimate_vmem_bytes(Bp, W, Hp, L, tile_v))

    grid_spec = pltpu.PrefetchScalarGridSpec(
        num_scalar_prefetch=0,
        grid=(n_tiles,),
        in_specs=[
            pl.BlockSpec((Bp, Hp), lambda j: (0, 0)),                    # emb
            pl.BlockSpec((L, Bp, Hp), lambda j: (0, 0, 0)),              # h0
            pl.BlockSpec((L, Bp, Hp), lambda j: (0, 0, 0)),              # c0
            pl.BlockSpec((Bp, W, Hp), lambda j: (0, 0, 0)),              # encoder_output
            pl.BlockSpec((1, Hp), lambda j: (0, 0)),                     # att_w (enc half)
            pl.BlockSpec((1, Hp), lambda j: (0, 0)),                     # att_w (state half)
            pl.BlockSpec((1, 1), lambda j: (0, 0)),                      # att_b
            pl.BlockSpec((Hp, Hp), lambda j: (0, 0)),                    # inl_w (ctx half)
            pl.BlockSpec((Hp, Hp), lambda j: (0, 0)),                    # inl_w (emb half)
            pl.BlockSpec((1, Hp), lambda j: (0, 0)),                     # inl_b
            pl.BlockSpec((L, Hp, 4 * Hp), lambda j: (0, 0, 0)),          # lstm W_ih
            pl.BlockSpec((L, Hp, 4 * Hp), lambda j: (0, 0, 0)),          # lstm W_hh
            pl.BlockSpec((L, 1, 4 * Hp), lambda j: (0, 0, 0)),           # lstm bias
            pl.BlockSpec((Hp, tile_v), lambda j: (0, j)),                # out_w (bf16 stream)
            pl.BlockSpec((1, tile_v), lambda j: (0, j)),                 # out_b (streamed)
        ],
        out_specs=(
            pl.BlockSpec((Bp, tile_v), lambda j: (0, j)),                # logp / logits tiles
            pl.BlockSpec((Bp, 1), lambda j: (0, 0)),                     # logsumexp
            pl.BlockSpec((L, Bp, Hp), lambda j: (0, 0, 0)),              # h1
            pl.BlockSpec((L, Bp, Hp), lambda j: (0, 0, 0)),              # c1
        ),
        scratch_shapes=[
            pltpu.VMEM((Bp, Hp), jnp.bfloat16),                          # bf16 top hidden
            pltpu.VMEM((Bp, 1), jnp.float32),                            # running max
            pltpu.VMEM((Bp, 1), jnp.float32),                            # running sum
        ],
    )

    kernel = functools.partial(_decoder_step_kernel, fuse_logsoftmax=fuse)

    out, lse, h1_p, c1_p = pl.pallas_call(
        kernel,
        grid_spec=grid_spec,
        out_shape=(
            jax.ShapeDtypeStruct((Bp, Vp), jnp.float32),
            jax.ShapeDtypeStruct((Bp, 1), jnp.float32),
            jax.ShapeDtypeStruct((L, Bp, Hp), jnp.float32),
            jax.ShapeDtypeStruct((L, Bp, Hp), jnp.float32),
        ),
        compiler_params=pltpu.CompilerParams(
            dimension_semantics=("arbitrary",),
            vmem_limit_bytes=vmem_limit),
    )(emb_p, h0_p, c0_p, enc_p,
      packed["w_att_enc"], packed["w_att_state"], packed["att_b"],
      packed["inl_w_ctx"], packed["inl_w_emb"], packed["inl_b"],
      packed["lstm_wih"], packed["lstm_whh"], packed["lstm_b"],
      packed["out_w"], packed["out_b"])

    if fuse:
        logp = out[:B, :V][:, None, :]                        # already log_softmax'd
    else:
        logp = (out[:B, :V] - lse[:B])[:, None, :]
    return logp, (h1_p[:, :B, :H], c1_p[:, :B, :H])


# ---------------------------------------------------------------------------
# Pure-JAX reference (mirrors the PyTorch forward, eval mode)
# ---------------------------------------------------------------------------
def reference_forward(params, ids, state, encoder_output):
    h0, c0 = state
    B, W, H = encoder_output.shape
    L = h0.shape[0]
    emb = params["emb_w"][ids[:, 0]]                           # (B, H)
    att_state = h0[-1] * c0[-1]
    cols = [jnp.zeros((B, 1), jnp.float32)]
    for w in range(W):
        l = jnp.concatenate([encoder_output[:, w, :], att_state], axis=1)
        cols.append(l @ params["att_w"][0][:, None] + params["att_b"][0, 0])
    weigth = jnp.concatenate(cols, axis=1)                     # (B, W+1)
    attn = jax.nn.softmax(weigth[:, :-1], axis=1)              # (B, W)
    ctx = jnp.einsum("bw,bwh->bh", attn, encoder_output)
    xin = jnp.concatenate([ctx, emb], axis=-1) @ params["inl_w"] + params["inl_b"]
    layer_in = xin
    h1, c1 = [], []
    for l in range(L):
        gates = layer_in @ params["wih"][l] + h0[l] @ params["whh"][l] + params["lstm_b"][l]
        i_g = jax.nn.sigmoid(gates[:, 0 * H:1 * H])
        f_g = jax.nn.sigmoid(gates[:, 1 * H:2 * H])
        g_g = jnp.tanh(gates[:, 2 * H:3 * H])
        o_g = jax.nn.sigmoid(gates[:, 3 * H:4 * H])
        c_new = f_g * c0[l] + i_g * g_g
        h_new = o_g * jnp.tanh(c_new)
        h1.append(h_new); c1.append(c_new)
        layer_in = h_new
    # Mirror the kernel's deliberate quantization: bf16 out_w storage and bf16
    # feed of the top hidden state into the MXU (f32 accumulation), so the
    # check isolates kernel math from the quantization choice.
    hid = layer_in.astype(jnp.bfloat16).astype(jnp.float32)
    out_w = params["out_w"].astype(jnp.bfloat16).astype(jnp.float32)
    logits = hid @ out_w + params["out_b"]
    logp = jax.nn.log_softmax(logits, axis=-1)[:, None, :]
    return logp, (jnp.stack(h1), jnp.stack(c1))


def init_params(key, n_words, input_size, hidden_size, n_layers):
    assert input_size == hidden_size
    H, V = hidden_size, n_words
    k = 1.0 / np.sqrt(H)
    keys = jax.random.split(key, 12)
    u = lambda kk, shape: jax.random.uniform(kk, shape, jnp.float32, -k, k)
    return {
        "emb_w": jax.random.normal(keys[0], (V, H), jnp.float32),
        "att_w": u(keys[1], (1, 2 * H)),                      # nn.Linear(2H, 1).weight
        "att_b": u(keys[2], (1, 1)),
        "inl_w": u(keys[3], (2 * H, H)),                      # Linear(2H, H).weight^T
        "inl_b": u(keys[4], (1, H)),
        "wih": u(keys[5], (n_layers, H, 4 * H)),              # weight_ih_l{k}^T
        "whh": u(keys[6], (n_layers, H, 4 * H)),              # weight_hh_l{k}^T
        "lstm_b": u(keys[7], (n_layers, 1, 4 * H)) + u(keys[8], (n_layers, 1, 4 * H)),
        "out_w": u(keys[9], (H, V)),                          # Linear(H, V).weight^T
        "out_b": u(keys[10], (1, V)),
    }


if __name__ == "__main__":
    B, W, H, V, n_layers = 4, 8, 32, 2000, 2
    key = jax.random.PRNGKey(0)
    kp, k1, k2, k3, k4 = jax.random.split(key, 5)

    params = init_params(kp, n_words=V, input_size=H, hidden_size=H, n_layers=n_layers)
    ids = jax.random.randint(k1, (B, 1), 0, V, dtype=jnp.int32)
    h0 = jax.random.normal(k2, (n_layers, B, H), jnp.float32)
    c0 = jax.random.normal(k3, (n_layers, B, H), jnp.float32)
    enc = jax.random.normal(k4, (B, W, H), jnp.float32)

    with jax.default_matmul_precision("highest"):
        ref_logp, (ref_h1, ref_c1) = reference_forward(params, ids, (h0, c0), enc)
    jax.block_until_ready((ref_logp, ref_h1, ref_c1))

    # ---- primary path: single fully VMEM-resident vocab tile, fused log_softmax
    tile_v = choose_tile_v(V)                                 # -> 2048, n_tiles == 1
    packed = pack_params(params, tile_v=tile_v)
    logp, (h1, c1) = arrdecoder_forward(packed, ids, (h0, c0), enc, tile_v=tile_v)
    jax.block_until_ready((logp, h1, c1))

    # log-probs carry the deliberate bf16 activation/weight quantization of the
    # output projection, so they get a slightly looser tolerance than the f32 state.
    np.testing.assert_allclose(np.asarray(logp), np.asarray(ref_logp), atol=5e-3, rtol=1e-4)
    np.testing.assert_allclose(np.asarray(h1), np.asarray(ref_h1), atol=1e-4, rtol=1e-4)
    np.testing.assert_allclose(np.asarray(c1), np.asarray(ref_c1), atol=1e-4, rtol=1e-4)

    # ---- also exercise the streamed multi-tile path (online logsumexp)
    tile_v2 = 1024                                            # Vp = 2048 -> 2 tiles
    packed2 = pack_params(params, tile_v=tile_v2)
    logp2, (h1b, c1b) = arrdecoder_forward(packed2, ids, (h0, c0), enc, tile_v=tile_v2)
    jax.block_until_ready((logp2, h1b, c1b))
    np.testing.assert_allclose(np.asarray(logp2), np.asarray(ref_logp), atol=5e-3, rtol=1e-4)
    np.testing.assert_allclose(np.asarray(h1b), np.asarray(ref_h1), atol=1e-4, rtol=1e-4)

    print("KERNEL_OK")
</pallas_src>

<mosaic_0001>
module attributes {stable_mosaic.version = 11 : i64} {
  func.func @_decoder_step_kernel(%arg0: i32, %arg1: memref<8x128xf32, #tpu.memory_space<vmem>>, %arg2: memref<2x8x128xf32, #tpu.memory_space<vmem>>, %arg3: memref<2x8x128xf32, #tpu.memory_space<vmem>>, %arg4: memref<8x8x128xf32, #tpu.memory_space<vmem>>, %arg5: memref<1x128xf32, #tpu.memory_space<vmem>>, %arg6: memref<1x128xf32, #tpu.memory_space<vmem>>, %arg7: memref<1x1xf32, #tpu.memory_space<vmem>>, %arg8: memref<128x128xf32, #tpu.memory_space<vmem>>, %arg9: memref<128x128xf32, #tpu.memory_space<vmem>>, %arg10: memref<1x128xf32, #tpu.memory_space<vmem>>, %arg11: memref<2x128x512xf32, #tpu.memory_space<vmem>>, %arg12: memref<2x128x512xf32, #tpu.memory_space<vmem>>, %arg13: memref<2x1x512xf32, #tpu.memory_space<vmem>>, %arg14: memref<128x2048xbf16, #tpu.memory_space<vmem>>, %arg15: memref<1x2048xf32, #tpu.memory_space<vmem>>, %arg16: memref<8x2048xf32, #tpu.memory_space<vmem>>, %arg17: memref<8x1xf32, #tpu.memory_space<vmem>>, %arg18: memref<2x8x128xf32, #tpu.memory_space<vmem>>, %arg19: memref<2x8x128xf32, #tpu.memory_space<vmem>>, %arg20: memref<8x128xbf16, #tpu.memory_space<vmem>>, %arg21: memref<8x1xf32, #tpu.memory_space<vmem>>, %arg22: memref<8x1xf32, #tpu.memory_space<vmem>>) attributes {dimension_semantics = [#tpu.dimension_semantics<arbitrary>], iteration_bounds = array<i64: 1>, scalar_prefetch = 0 : i64, scratch_operands = 3 : i64, tpu.core_type = #tpu.core_type<tc>, window_params = [{pipeline_mode = #tpu.pipeline_mode<synchronous>, transform_indices = @transform_0, window_bounds = array<i64: 8, 128>}, {pipeline_mode = #tpu.pipeline_mode<synchronous>, transform_indices = @transform_1, window_bounds = array<i64: 2, 8, 128>}, {pipeline_mode = #tpu.pipeline_mode<synchronous>, transform_indices = @transform_2, window_bounds = array<i64: 2, 8, 128>}, {pipeline_mode = #tpu.pipeline_mode<synchronous>, transform_indices = @transform_3, window_bounds = array<i64: 8, 8, 128>}, {pipeline_mode = #tpu.pipeline_mode<synchronous>, transform_indices = @transform_4, window_bounds = array<i64: 1, 128>}, {pipeline_mode = #tpu.pipeline_mode<synchronous>, transform_indices = @transform_5, window_bounds = array<i64: 1, 128>}, {pipeline_mode = #tpu.pipeline_mode<synchronous>, transform_indices = @transform_6, window_bounds = array<i64: 1, 1>}, {pipeline_mode = #tpu.pipeline_mode<synchronous>, transform_indices = @transform_7, window_bounds = array<i64: 128, 128>}, {pipeline_mode = #tpu.pipeline_mode<synchronous>, transform_indices = @transform_8, window_bounds = array<i64: 128, 128>}, {pipeline_mode = #tpu.pipeline_mode<synchronous>, transform_indices = @transform_9, window_bounds = array<i64: 1, 128>}, {pipeline_mode = #tpu.pipeline_mode<synchronous>, transform_indices = @transform_10, window_bounds = array<i64: 2, 128, 512>}, {pipeline_mode = #tpu.pipeline_mode<synchronous>, transform_indices = @transform_11, window_bounds = array<i64: 2, 128, 512>}, {pipeline_mode = #tpu.pipeline_mode<synchronous>, transform_indices = @transform_12, window_bounds = array<i64: 2, 1, 512>}, {transform_indices = @transform_13, window_bounds = array<i64: 128, 2048>}, {transform_indices = @transform_14, window_bounds = array<i64: 1, 2048>}, {transform_indices = @transform_15, window_bounds = array<i64: 8, 2048>}, {pipeline_mode = #tpu.pipeline_mode<synchronous>, transform_indices = @transform_16, window_bounds = array<i64: 8, 1>}, {pipeline_mode = #tpu.pipeline_mode<synchronous>, transform_indices = @transform_17, window_bounds = array<i64: 2, 8, 128>}, {pipeline_mode = #tpu.pipeline_mode<synchronous>, transform_indices = @transform_18, window_bounds = array<i64: 2, 8, 128>}]} {
    %c0_i32 = arith.constant 0 : i32
    %0 = arith.cmpi eq, %arg0, %c0_i32 : i32
    %1 = arith.extui %0 : i1 to i32
    %c0_i32_0 = arith.constant 0 : i32
    %2 = arith.cmpi ne, %1, %c0_i32_0 : i32
    scf.if %2 {
      %c0_12 = arith.constant 0 : index
      %c0_13 = arith.constant 0 : index
      %c0_14 = arith.constant 0 : index
      %22 = vector.load %arg2[%c0_12, %c0_13, %c0_14] : memref<2x8x128xf32, #tpu.memory_space<vmem>>, vector<2x8x128xf32>
      %c0_15 = arith.constant 0 : index
      %c0_16 = arith.constant 0 : index
      %c0_17 = arith.constant 0 : index
      %23 = vector.load %arg3[%c0_15, %c0_16, %c0_17] : memref<2x8x128xf32, #tpu.memory_space<vmem>>, vector<2x8x128xf32>
      %c0_18 = arith.constant 0 : index
      %c0_19 = arith.constant 0 : index
      %c0_20 = arith.constant 0 : index
      %24 = vector.load %arg4[%c0_18, %c0_19, %c0_20] : memref<8x8x128xf32, #tpu.memory_space<vmem>>, vector<8x8x128xf32>
      %c0_21 = arith.constant 0 : index
      %c0_22 = arith.constant 0 : index
      %25 = vector.load %arg1[%c0_21, %c0_22] : memref<8x128xf32, #tpu.memory_space<vmem>>, vector<8x128xf32>
      %26 = vector.extract_strided_slice %22 {offsets = [1, 0, 0], sizes = [1, 8, 128], strides = [1, 1, 1]} : vector<2x8x128xf32> to vector<1x8x128xf32>
      %27 = vector.shape_cast %26 : vector<1x8x128xf32> to vector<8x128xf32>
      %28 = vector.extract_strided_slice %23 {offsets = [1, 0, 0], sizes = [1, 8, 128], strides = [1, 1, 1]} : vector<2x8x128xf32> to vector<1x8x128xf32>
      %29 = vector.shape_cast %28 : vector<1x8x128xf32> to vector<8x128xf32>
      %30 = arith.mulf %27, %29 : vector<8x128xf32>
      %c0_23 = arith.constant 0 : index
      %c0_24 = arith.constant 0 : index
      %31 = vector.load %arg5[%c0_23, %c0_24] : memref<1x128xf32, #tpu.memory_space<vmem>>, vector<1x128xf32>
      %c0_25 = arith.constant 0 : index
      %c0_26 = arith.constant 0 : index
      %32 = vector.load %arg6[%c0_25, %c0_26] : memref<1x128xf32, #tpu.memory_space<vmem>>, vector<1x128xf32>
      %33 = vector.shape_cast %31 : vector<1x128xf32> to vector<1x1x128xf32>
      %34 = vector.broadcast %33 : vector<1x1x128xf32> to vector<8x8x128xf32>
      %35 = arith.mulf %24, %34 : vector<8x8x128xf32>
      %cst_27 = arith.constant dense<0.000000e+00> : vector<8x8xf32>
      %36 = vector.multi_reduction <add>, %35, %cst_27 [2] : vector<8x8x128xf32> to vector<8x8xf32>
      %37 = vector.broadcast %32 : vector<1x128xf32> to vector<8x128xf32>
      %38 = arith.mulf %30, %37 : vector<8x128xf32>
      %cst_28 = arith.constant dense<0.000000e+00> : vector<8xf32>
      %39 = vector.multi_reduction <add>, %38, %cst_28 [1] : vector<8x128xf32> to vector<8xf32>
      %40 = vector.shape_cast %39 : vector<8xf32> to vector<8x1xf32>
      %41 = vector.broadcast %40 : vector<8x1xf32> to vector<8x8xf32>
      %42 = arith.addf %36, %41 : vector<8x8xf32>
      %c0_29 = arith.constant 0 : index
      %c0_30 = arith.constant 0 : index
      %43 = vector.load %arg7[%c0_29, %c0_30] : memref<1x1xf32, #tpu.memory_space<vmem>>, vector<1x1xf32>
      %44 = vector.extract %43[0, 0] : f32 from vector<1x1xf32>
      %45 = vector.broadcast %44 : f32 to vector<8x8xf32>
      %46 = arith.addf %42, %45 : vector<8x8xf32>
      %cst_31 = arith.constant 0.000000e+00 : f32
      %47 = vector.broadcast %cst_31 : f32 to vector<8x1xf32>
      %48 = vector.extract_strided_slice %46 {offsets = [0, 0], sizes = [8, 7], strides = [1, 1]} : vector<8x8xf32> to vector<8x7xf32>
      %49 = tpu.concatenate %47, %48 in 1 : vector<8x1xf32>, vector<8x7xf32> -> vector<8x8xf32>
      %cst_32 = arith.constant dense<0xFF800000> : vector<8xf32>
      %50 = vector.multi_reduction <maximumf>, %49, %cst_32 [1] : vector<8x8xf32> to vector<8xf32>
      %51 = vector.shape_cast %50 : vector<8xf32> to vector<8x1xf32>
      %52 = vector.broadcast %51 : vector<8x1xf32> to vector<8x8xf32>
      %53 = arith.subf %49, %52 : vector<8x8xf32>
      %54 = math.exp %53 : vector<8x8xf32>
      %cst_33 = arith.constant dense<0.000000e+00> : vector<8xf32>
      %55 = vector.multi_reduction <add>, %54, %cst_33 [1] : vector<8x8xf32> to vector<8xf32>
      %56 = vector.shape_cast %55 : vector<8xf32> to vector<8x1xf32>
      %57 = vector.broadcast %56 : vector<8x1xf32> to vector<8x8xf32>
      %58 = arith.divf %54, %57 : vector<8x8xf32>
      %59 = vector.shape_cast %58 : vector<8x8xf32> to vector<8x8x1xf32>
      %60 = vector.broadcast %59 : vector<8x8x1xf32> to vector<8x8x128xf32>
      %61 = arith.mulf %60, %24 : vector<8x8x128xf32>
      %cst_34 = arith.constant dense<0.000000e+00> : vector<8x128xf32>
      %62 = vector.multi_reduction <add>, %61, %cst_34 [1] : vector<8x8x128xf32> to vector<8x128xf32>
      %c0_35 = arith.constant 0 : index
      %c0_36 = arith.constant 0 : index
      %63 = vector.load %arg8[%c0_35, %c0_36] : memref<128x128xf32, #tpu.memory_space<vmem>>, vector<128x128xf32>
      %cst_37 = arith.constant dense<0.000000e+00> : vector<8x128xf32>
      %64 = tpu.matmul %62, %63, %cst_37 {dimension_numbers = #tpu.dot_dimension_numbers<[1], [0], [0], [1], [0, 0, 1, 1], [], []>} : vector<8x128xf32>, vector<128x128xf32>, vector<8x128xf32> -> vector<8x128xf32>
      %c0_38 = arith.constant 0 : index
      %c0_39 = arith.constant 0 : index
      %65 = vector.load %arg9[%c0_38, %c0_39] : memref<128x128xf32, #tpu.memory_space<vmem>>, vector<128x128xf32>
      %cst_40 = arith.constant dense<0.000000e+00> : vector<8x128xf32>
      %66 = tpu.matmul %25, %65, %cst_40 {dimension_numbers = #tpu.dot_dimension_numbers<[1], [0], [0], [1], [0, 0, 1, 1], [], []>} : vector<8x128xf32>, vector<128x128xf32>, vector<8x128xf32> -> vector<8x128xf32>
      %67 = arith.addf %64, %66 : vector<8x128xf32>
      %c0_41 = arith.constant 0 : index
      %c0_42 = arith.constant 0 : index
      %68 = vector.load %arg10[%c0_41, %c0_42] : memref<1x128xf32, #tpu.memory_space<vmem>>, vector<1x128xf32>
      %69 = vector.broadcast %68 : vector<1x128xf32> to vector<8x128xf32>
      %70 = arith.addf %67, %69 : vector<8x128xf32>
      %71 = vector.extract_strided_slice %22 {offsets = [0, 0, 0], sizes = [1, 8, 128], strides = [1, 1, 1]} : vector<2x8x128xf32> to vector<1x8x128xf32>
      %72 = vector.shape_cast %71 : vector<1x8x128xf32> to vector<8x128xf32>
      %73 = vector.extract_strided_slice %23 {offsets = [0, 0, 0], sizes = [1, 8, 128], strides = [1, 1, 1]} : vector<2x8x128xf32> to vector<1x8x128xf32>
      %74 = vector.shape_cast %73 : vector<1x8x128xf32> to vector<8x128xf32>
      %c0_43 = arith.constant 0 : index
      %c0_44 = arith.constant 0 : index
      %c0_45 = arith.constant 0 : index
      %75 = vector.load %arg11[%c0_43, %c0_44, %c0_45] : memref<2x128x512xf32, #tpu.memory_space<vmem>>, vector<1x128x512xf32>
      %76 = vector.shape_cast %75 : vector<1x128x512xf32> to vector<128x512xf32>
      %cst_46 = arith.constant dense<0.000000e+00> : vector<8x512xf32>
      %77 = tpu.matmul %70, %76, %cst_46 {dimension_numbers = #tpu.dot_dimension_numbers<[1], [0], [0], [1], [0, 0, 1, 1], [], []>} : vector<8x128xf32>, vector<128x512xf32>, vector<8x512xf32> -> vector<8x512xf32>
      %c0_47 = arith.constant 0 : index
      %c0_48 = arith.constant 0 : index
      %c0_49 = arith.constant 0 : index
      %78 = vector.load %arg12[%c0_47, %c0_48, %c0_49] : memref<2x128x512xf32, #tpu.memory_space<vmem>>, vector<1x128x512xf32>
      %79 = vector.shape_cast %78 : vector<1x128x512xf32> to vector<128x512xf32>
      %cst_50 = arith.constant dense<0.000000e+00> : vector<8x512xf32>
      %80 = tpu.matmul %72, %79, %cst_50 {dimension_numbers = #tpu.dot_dimension_numbers<[1], [0], [0], [1], [0, 0, 1, 1], [], []>} : vector<8x128xf32>, vector<128x512xf32>, vector<8x512xf32> -> vector<8x512xf32>
      %81 = arith.addf %77, %80 : vector<8x512xf32>
      %c0_51 = arith.constant 0 : index
      %c0_52 = arith.constant 0 : index
      %c0_53 = arith.constant 0 : index
      %82 = vector.load %arg13[%c0_51, %c0_52, %c0_53] : memref<2x1x512xf32, #tpu.memory_space<vmem>>, vector<1x1x512xf32>
      %83 = vector.shape_cast %82 : vector<1x1x512xf32> to vector<1x512xf32>
      %84 = vector.broadcast %83 : vector<1x512xf32> to vector<8x512xf32>
      %85 = arith.addf %81, %84 : vector<8x512xf32>
      %86 = vector.extract_strided_slice %85 {offsets = [0, 0], sizes = [8, 128], strides = [1, 1]} : vector<8x512xf32> to vector<8x128xf32>
      %87 = arith.negf %86 : vector<8x128xf32>
      %88 = math.exp %87 : vector<8x128xf32>
      %cst_54 = arith.constant 1.000000e+00 : f32
      %89 = vector.broadcast %cst_54 : f32 to vector<8x128xf32>
      %90 = arith.addf %89, %88 : vector<8x128xf32>
      %91 = arith.divf %89, %90 : vector<8x128xf32>
      %92 = vector.extract_strided_slice %85 {offsets = [0, 128], sizes = [8, 128], strides = [1, 1]} : vector<8x512xf32> to vector<8x128xf32>
      %93 = arith.negf %92 : vector<8x128xf32>
      %94 = math.exp %93 : vector<8x128xf32>
      %cst_55 = arith.constant 1.000000e+00 : f32
      %95 = vector.broadcast %cst_55 : f32 to vector<8x128xf32>
      %96 = arith.addf %95, %94 : vector<8x128xf32>
      %97 = arith.divf %95, %96 : vector<8x128xf32>
      %98 = vector.extract_strided_slice %85 {offsets = [0, 256], sizes = [8, 128], strides = [1, 1]} : vector<8x512xf32> to vector<8x128xf32>
      %99 = math.tanh %98 : vector<8x128xf32>
      %100 = vector.extract_strided_slice %85 {offsets = [0, 384], sizes = [8, 128], strides = [1, 1]} : vector<8x512xf32> to vector<8x128xf32>
      %101 = arith.negf %100 : vector<8x128xf32>
      %102 = math.exp %101 : vector<8x128xf32>
      %cst_56 = arith.constant 1.000000e+00 : f32
      %103 = vector.broadcast %cst_56 : f32 to vector<8x128xf32>
      %104 = arith.addf %103, %102 : vector<8x128xf32>
      %105 = arith.divf %103, %104 : vector<8x128xf32>
      %106 = arith.mulf %97, %74 : vector<8x128xf32>
      %107 = arith.mulf %91, %99 : vector<8x128xf32>
      %108 = arith.addf %106, %107 : vector<8x128xf32>
      %109 = math.tanh %108 : vector<8x128xf32>
      %110 = arith.mulf %105, %109 : vector<8x128xf32>
      %c0_57 = arith.constant 0 : index
      %c0_58 = arith.constant 0 : index
      %c0_59 = arith.constant 0 : index
      %111 = vector.load %arg18[%c0_57, %c0_58, %c0_59] : memref<2x8x128xf32, #tpu.memory_space<vmem>>, vector<1x8x128xf32>
      %112 = vector.shape_cast %111 : vector<1x8x128xf32> to vector<8x128xf32>
      %113 = vector.shape_cast %110 : vector<8x128xf32> to vector<1x8x128xf32>
      tpu.vector_store %arg18[%c0_57, %c0_58, %c0_59], %113 {strides = array<i32>} : memref<2x8x128xf32, #tpu.memory_space<vmem>>, vector<1x8x128xf32>,
      %c0_60 = arith.constant 0 : index
      %c0_61 = arith.constant 0 : index
      %c0_62 = arith.constant 0 : index
      %114 = vector.load %arg19[%c0_60, %c0_61, %c0_62] : memref<2x8x128xf32, #tpu.memory_space<vmem>>, vector<1x8x128xf32>
      %115 = vector.shape_cast %114 : vector<1x8x128xf32> to vector<8x128xf32>
      %116 = vector.shape_cast %108 : vector<8x128xf32> to vector<1x8x128xf32>
      tpu.vector_store %arg19[%c0_60, %c0_61, %c0_62], %116 {strides = array<i32>} : memref<2x8x128xf32, #tpu.memory_space<vmem>>, vector<1x8x128xf32>,
      %117 = vector.extract_strided_slice %22 {offsets = [1, 0, 0], sizes = [1, 8, 128], strides = [1, 1, 1]} : vector<2x8x128xf32> to vector<1x8x128xf32>
      %118 = vector.shape_cast %117 : vector<1x8x128xf32> to vector<8x128xf32>
      %119 = vector.extract_strided_slice %23 {offsets = [1, 0, 0], sizes = [1, 8, 128], strides = [1, 1, 1]} : vector<2x8x128xf32> to vector<1x8x128xf32>
      %120 = vector.shape_cast %119 : vector<1x8x128xf32> to vector<8x128xf32>
      %c1 = arith.constant 1 : index
      %c0_63 = arith.constant 0 : index
      %c0_64 = arith.constant 0 : index
      %121 = vector.load %arg11[%c1, %c0_63, %c0_64] : memref<2x128x512xf32, #tpu.memory_space<vmem>>, vector<1x128x512xf32>
      %122 = vector.shape_cast %121 : vector<1x128x512xf32> to vector<128x512xf32>
      %cst_65 = arith.constant dense<0.000000e+00> : vector<8x512xf32>
      %123 = tpu.matmul %110, %122, %cst_65 {dimension_numbers = #tpu.dot_dimension_numbers<[1], [0], [0], [1], [0, 0, 1, 1], [], []>} : vector<8x128xf32>, vector<128x512xf32>, vector<8x512xf32> -> vector<8x512xf32>
      %c1_66 = arith.constant 1 : index
      %c0_67 = arith.constant 0 : index
      %c0_68 = arith.constant 0 : index
      %124 = vector.load %arg12[%c1_66, %c0_67, %c0_68] : memref<2x128x512xf32, #tpu.memory_space<vmem>>, vector<1x128x512xf32>
      %125 = vector.shape_cast %124 : vector<1x128x512xf32> to vector<128x512xf32>
      %cst_69 = arith.constant dense<0.000000e+00> : vector<8x512xf32>
      %126 = tpu.matmul %118, %125, %cst_69 {dimension_numbers = #tpu.dot_dimension_numbers<[1], [0], [0], [1], [0, 0, 1, 1], [], []>} : vector<8x128xf32>, vector<128x512xf32>, vector<8x512xf32> -> vector<8x512xf32>
      %127 = arith.addf %123, %126 : vector<8x512xf32>
      %c1_70 = arith.constant 1 : index
      %c0_71 = arith.constant 0 : index
      %c0_72 = arith.constant 0 : index
      %128 = vector.load %arg13[%c1_70, %c0_71, %c0_72] : memref<2x1x512xf32, #tpu.memory_space<vmem>>, vector<1x1x512xf32>
      %129 = vector.shape_cast %128 : vector<1x1x512xf32> to vector<1x512xf32>
      %130 = vector.broadcast %129 : vector<1x512xf32> to vector<8x512xf32>
      %131 = arith.addf %127, %130 : vector<8x512xf32>
      %132 = vector.extract_strided_slice %131 {offsets = [0, 0], sizes = [8, 128], strides = [1, 1]} : vector<8x512xf32> to vector<8x128xf32>
      %133 = arith.negf %132 : vector<8x128xf32>
      %134 = math.exp %133 : vector<8x128xf32>
      %cst_73 = arith.constant 1.000000e+00 : f32
      %135 = vector.broadcast %cst_73 : f32 to vector<8x128xf32>
      %136 = arith.addf %135, %134 : vector<8x128xf32>
      %137 = arith.divf %135, %136 : vector<8x128xf32>
      %138 = vector.extract_strided_slice %131 {offsets = [0, 128], sizes = [8, 128], strides = [1, 1]} : vector<8x512xf32> to vector<8x128xf32>
      %139 = arith.negf %138 : vector<8x128xf32>
      %140 = math.exp %139 : vector<8x128xf32>
      %cst_74 = arith.constant 1.000000e+00 : f32
      %141 = vector.broadcast %cst_74 : f32 to vector<8x128xf32>
      %142 = arith.addf %141, %140 : vector<8x128xf32>
      %143 = arith.divf %141, %142 : vector<8x128xf32>
      %144 = vector.extract_strided_slice %131 {offsets = [0, 256], sizes = [8, 128], strides = [1, 1]} : vector<8x512xf32> to vector<8x128xf32>
      %145 = math.tanh %144 : vector<8x128xf32>
      %146 = vector.extract_strided_slice %131 {offsets = [0, 384], sizes = [8, 128], strides = [1, 1]} : vector<8x512xf32> to vector<8x128xf32>
      %147 = arith.negf %146 : vector<8x128xf32>
      %148 = math.exp %147 : vector<8x128xf32>
      %cst_75 = arith.constant 1.000000e+00 : f32
      %149 = vector.broadcast %cst_75 : f32 to vector<8x128xf32>
      %150 = arith.addf %149, %148 : vector<8x128xf32>
      %151 = arith.divf %149, %150 : vector<8x128xf32>
      %152 = arith.mulf %143, %120 : vector<8x128xf32>
      %153 = arith.mulf %137, %145 : vector<8x128xf32>
      %154 = arith.addf %152, %153 : vector<8x128xf32>
      %155 = math.tanh %154 : vector<8x128xf32>
      %156 = arith.mulf %151, %155 : vector<8x128xf32>
      %c1_76 = arith.constant 1 : index
      %c0_77 = arith.constant 0 : index
      %c0_78 = arith.constant 0 : index
      %157 = vector.load %arg18[%c1_76, %c0_77, %c0_78] : memref<2x8x128xf32, #tpu.memory_space<vmem>>, vector<1x8x128xf32>
      %158 = vector.shape_cast %157 : vector<1x8x128xf32> to vector<8x128xf32>
      %159 = vector.shape_cast %156 : vector<8x128xf32> to vector<1x8x128xf32>
      tpu.vector_store %arg18[%c1_76, %c0_77, %c0_78], %159 {strides = array<i32>} : memref<2x8x128xf32, #tpu.memory_space<vmem>>, vector<1x8x128xf32>,
      %c1_79 = arith.constant 1 : index
      %c0_80 = arith.constant 0 : index
      %c0_81 = arith.constant 0 : index
      %160 = vector.load %arg19[%c1_79, %c0_80, %c0_81] : memref<2x8x128xf32, #tpu.memory_space<vmem>>, vector<1x8x128xf32>
      %161 = vector.shape_cast %160 : vector<1x8x128xf32> to vector<8x128xf32>
      %162 = vector.shape_cast %154 : vector<8x128xf32> to vector<1x8x128xf32>
      tpu.vector_store %arg19[%c1_79, %c0_80, %c0_81], %162 {strides = array<i32>} : memref<2x8x128xf32, #tpu.memory_space<vmem>>, vector<1x8x128xf32>,
      %163 = arith.truncf %156 : vector<8x128xf32> to vector<8x128xbf16>
      %c0_82 = arith.constant 0 : index
      %c0_83 = arith.constant 0 : index
      %164 = vector.load %arg20[%c0_82, %c0_83] : memref<8x128xbf16, #tpu.memory_space<vmem>>, vector<8x128xbf16>
      tpu.vector_store %arg20[%c0_82, %c0_83], %163 {strides = array<i32>} : memref<8x128xbf16, #tpu.memory_space<vmem>>, vector<8x128xbf16>,
    } else {
    }
    %c0 = arith.constant 0 : index
    %c0_1 = arith.constant 0 : index
    %3 = vector.load %arg20[%c0, %c0_1] : memref<8x128xbf16, #tpu.memory_space<vmem>>, vector<8x128xbf16>
    %c0_2 = arith.constant 0 : index
    %c0_3 = arith.constant 0 : index
    %4 = vector.load %arg14[%c0_2, %c0_3] : memref<128x2048xbf16, #tpu.memory_space<vmem>>, vector<128x2048xbf16>
    %cst = arith.constant dense<0.000000e+00> : vector<8x2048xf32>
    %5 = tpu.matmul %3, %4, %cst {dimension_numbers = #tpu.dot_dimension_numbers<[1], [0], [0], [1], [0, 0, 1, 1], [], []>} : vector<8x128xbf16>, vector<128x2048xbf16>, vector<8x2048xf32> -> vector<8x2048xf32>
    %c0_4 = arith.constant 0 : index
    %c0_5 = arith.constant 0 : index
    %6 = vector.load %arg15[%c0_4, %c0_5] : memref<1x2048xf32, #tpu.memory_space<vmem>>, vector<1x2048xf32>
    %7 = vector.broadcast %6 : vector<1x2048xf32> to vector<8x2048xf32>
    %8 = arith.addf %5, %7 : vector<8x2048xf32>
    %cst_6 = arith.constant dense<0xFF800000> : vector<8xf32>
    %9 = vector.multi_reduction <maximumf>, %8, %cst_6 [1] : vector<8x2048xf32> to vector<8xf32>
    %10 = vector.shape_cast %9 : vector<8xf32> to vector<8x1xf32>
    %11 = vector.broadcast %10 : vector<8x1xf32> to vector<8x2048xf32>
    %12 = arith.subf %8, %11 : vector<8x2048xf32>
    %13 = math.exp %12 : vector<8x2048xf32>
    %cst_7 = arith.constant dense<0.000000e+00> : vector<8xf32>
    %14 = vector.multi_reduction <add>, %13, %cst_7 [1] : vector<8x2048xf32> to vector<8xf32>
    %15 = vector.shape_cast %14 : vector<8xf32> to vector<8x1xf32>
    %16 = math.log %15 : vector<8x1xf32>
    %17 = arith.addf %10, %16 : vector<8x1xf32>
    %18 = vector.broadcast %17 : vector<8x1xf32> to vector<8x2048xf32>
    %19 = arith.subf %8, %18 : vector<8x2048xf32>
    %c0_8 = arith.constant 0 : index
    %c0_9 = arith.constant 0 : index
    %20 = vector.load %arg16[%c0_8, %c0_9] : memref<8x2048xf32, #tpu.memory_space<vmem>>, vector<8x2048xf32>
    tpu.vector_store %arg16[%c0_8, %c0_9], %19 {strides = array<i32>} : memref<8x2048xf32, #tpu.memory_space<vmem>>, vector<8x2048xf32>,
    %c0_10 = arith.constant 0 : index
    %c0_11 = arith.constant 0 : index
    %21 = vector.load %arg17[%c0_10, %c0_11] : memref<8x1xf32, #tpu.memory_space<vmem>>, vector<8x1xf32>
    tpu.vector_store %arg17[%c0_10, %c0_11], %17 {strides = array<i32>} : memref<8x1xf32, #tpu.memory_space<vmem>>, vector<8x1xf32>,
    return
  }
  func.func @transform_0(%arg0: i32) -> (i32, i32) {
    %c0_i32 = arith.constant 0 : i32
    %c0_i32_0 = arith.constant 0 : i32
    %c0_i32_1 = arith.constant 0 : i32
    return %c0_i32, %c0_i32_0 : i32, i32
  }
  func.func @transform_1(%arg0: i32) -> (i32, i32, i32) {
    %c0_i32 = arith.constant 0 : i32
    %c0_i32_0 = arith.constant 0 : i32
    %c0_i32_1 = arith.constant 0 : i32
    %c0_i32_2 = arith.constant 0 : i32
    return %c0_i32, %c0_i32_0, %c0_i32_1 : i32, i32, i32
  }
  func.func @transform_2(%arg0: i32) -> (i32, i32, i32) {
    %c0_i32 = arith.constant 0 : i32
    %c0_i32_0 = arith.constant 0 : i32
    %c0_i32_1 = arith.constant 0 : i32
    %c0_i32_2 = arith.constant 0 : i32
    return %c0_i32, %c0_i32_0, %c0_i32_1 : i32, i32, i32
  }
  func.func @transform_3(%arg0: i32) -> (i32, i32, i32) {
    %c0_i32 = arith.constant 0 : i32
    %c0_i32_0 = arith.constant 0 : i32
    %c0_i32_1 = arith.constant 0 : i32
    %c0_i32_2 = arith.constant 0 : i32
    return %c0_i32, %c0_i32_0, %c0_i32_1 : i32, i32, i32
  }
  func.func @transform_4(%arg0: i32) -> (i32, i32) {
    %c0_i32 = arith.constant 0 : i32
    %c0_i32_0 = arith.constant 0 : i32
    %c0_i32_1 = arith.constant 0 : i32
    return %c0_i32, %c0_i32_0 : i32, i32
  }
  func.func @transform_5(%arg0: i32) -> (i32, i32) {
    %c0_i32 = arith.constant 0 : i32
    %c0_i32_0 = arith.constant 0 : i32
    %c0_i32_1 = arith.constant 0 : i32
    return %c0_i32, %c0_i32_0 : i32, i32
  }
  func.func @transform_6(%arg0: i32) -> (i32, i32) {
    %c0_i32 = arith.constant 0 : i32
    %c0_i32_0 = arith.constant 0 : i32
    %c0_i32_1 = arith.constant 0 : i32
    return %c0_i32, %c0_i32_0 : i32, i32
  }
  func.func @transform_7(%arg0: i32) -> (i32, i32) {
    %c0_i32 = arith.constant 0 : i32
    %c0_i32_0 = arith.constant 0 : i32
    %c0_i32_1 = arith.constant 0 : i32
    return %c0_i32, %c0_i32_0 : i32, i32
  }
  func.func @transform_8(%arg0: i32) -> (i32, i32) {
    %c0_i32 = arith.constant 0 : i32
    %c0_i32_0 = arith.constant 0 : i32
    %c0_i32_1 = arith.constant 0 : i32
    return %c0_i32, %c0_i32_0 : i32, i32
  }
  func.func @transform_9(%arg0: i32) -> (i32, i32) {
    %c0_i32 = arith.constant 0 : i32
    %c0_i32_0 = arith.constant 0 : i32
    %c0_i32_1 = arith.constant 0 : i32
    return %c0_i32, %c0_i32_0 : i32, i32
  }
  func.func @transform_10(%arg0: i32) -> (i32, i32, i32) {
    %c0_i32 = arith.constant 0 : i32
    %c0_i32_0 = arith.constant 0 : i32
    %c0_i32_1 = arith.constant 0 : i32
    %c0_i32_2 = arith.constant 0 : i32
    return %c0_i32, %c0_i32_0, %c0_i32_1 : i32, i32, i32
  }
  func.func @transform_11(%arg0: i32) -> (i32, i32, i32) {
    %c0_i32 = arith.constant 0 : i32
    %c0_i32_0 = arith.constant 0 : i32
    %c0_i32_1 = arith.constant 0 : i32
    %c0_i32_2 = arith.constant 0 : i32
    return %c0_i32, %c0_i32_0, %c0_i32_1 : i32, i32, i32
  }
  func.func @transform_12(%arg0: i32) -> (i32, i32, i32) {
    %c0_i32 = arith.constant 0 : i32
    %c0_i32_0 = arith.constant 0 : i32
    %c0_i32_1 = arith.constant 0 : i32
    %c0_i32_2 = arith.constant 0 : i32
    return %c0_i32, %c0_i32_0, %c0_i32_1 : i32, i32, i32
  }
  func.func @transform_13(%arg0: i32) -> (i32, i32) {
    %c0_i32 = arith.constant 0 : i32
    %c0_i32_0 = arith.constant 0 : i32
    return %c0_i32, %arg0 : i32, i32
  }
  func.func @transform_14(%arg0: i32) -> (i32, i32) {
    %c0_i32 = arith.constant 0 : i32
    %c0_i32_0 = arith.constant 0 : i32
    return %c0_i32, %arg0 : i32, i32
  }
  func.func @transform_15(%arg0: i32) -> (i32, i32) {
    %c0_i32 = arith.constant 0 : i32
    %c0_i32_0 = arith.constant 0 : i32
    return %c0_i32, %arg0 : i32, i32
  }
  func.func @transform_16(%arg0: i32) -> (i32, i32) {
    %c0_i32 = arith.constant 0 : i32
    %c0_i32_0 = arith.constant 0 : i32
    %c0_i32_1 = arith.constant 0 : i32
    return %c0_i32, %c0_i32_0 : i32, i32
  }
  func.func @transform_17(%arg0: i32) -> (i32, i32, i32) {
    %c0_i32 = arith.constant 0 : i32
    %c0_i32_0 = arith.constant 0 : i32
    %c0_i32_1 = arith.constant 0 : i32
    %c0_i32_2 = arith.constant 0 : i32
    return %c0_i32, %c0_i32_0, %c0_i32_1 : i32, i32, i32
  }
  func.func @transform_18(%arg0: i32) -> (i32, i32, i32) {
    %c0_i32 = arith.constant 0 : i32
    %c0_i32_0 = arith.constant 0 : i32
    %c0_i32_1 = arith.constant 0 : i32
    %c0_i32_2 = arith.constant 0 : i32
    return %c0_i32, %c0_i32_0, %c0_i32_1 : i32, i32, i32
  }
}

</mosaic_0001>

<llo_original>
// kernel: tpu_custom_call.1
$region0: #{tpu_custom_call.1}
  #allocation0 [shape = 'u32[]', space=smem, size = 0x4, offset = 0x4, fixed_abs, tag = 'smem constant byte address 0x4 - core index']
  #allocation1 [shape = 'u32[144,128]{1,0:T(1,128)}', space=vmem, size = 0x12000, scoped, tag = 'internal scratch']
  #allocation2 [shape = 'bf16[8,128]{1,0:T(8,128)(2,1)}', space=vmem, size = 0x800, scoped, tag = 'scratch operand']
  #allocation3 [shape = 'f32[8,1]{1,0:T(8,128)}', space=vmem, size = 0x1000, scoped, tag = 'scratch operand']
  #allocation4 [shape = 'f32[8,1]{1,0:T(8,128)}', space=vmem, size = 0x1000, scoped, tag = 'scratch operand']
  #allocation5 [shape = 'f32[1,1]{1,0:T(1,128)S(1)}', space=vmem, size = 0x200, scoped, tag = 'scoped memory for tpu_custom_call.1']
  %s0 = inlined_call_operand.hbm [shape: f32[8,128], index: 0, kind: input, shape index: {}]
  %s1 = inlined_call_operand.hbm [shape: f32[2,8,128], index: 1, kind: input, shape index: {}]
  %s2 = inlined_call_operand.hbm [shape: f32[2,8,128], index: 2, kind: input, shape index: {}]
  %s3 = inlined_call_operand.hbm [shape: f32[8,8,128], index: 3, kind: input, shape index: {}]
  %s4 = inlined_call_operand.vmem [shape: f32[1,128], index: 4, kind: input, shape index: {}]
  %s5 = inlined_call_operand.vmem [shape: f32[1,128], index: 5, kind: input, shape index: {}]
  %s6 = inlined_call_operand.<no memory space> [shape: f32[1,1], index: 6, kind: input, shape index: {}]
  %s7 = inlined_call_operand.hbm [shape: f32[128,128], index: 7, kind: input, shape index: {}]
  %s8 = inlined_call_operand.hbm [shape: f32[128,128], index: 8, kind: input, shape index: {}]
  %s9 = inlined_call_operand.vmem [shape: f32[1,128], index: 9, kind: input, shape index: {}]
  %s10 = inlined_call_operand.hbm [shape: f32[2,128,512], index: 10, kind: input, shape index: {}]
  %s11 = inlined_call_operand.hbm [shape: f32[2,128,512], index: 11, kind: input, shape index: {}]
  %s12 = inlined_call_operand.vmem [shape: f32[2,1,512], index: 12, kind: input, shape index: {}]
  %s13 = inlined_call_operand.hbm [shape: bf16[128,2048], index: 13, kind: input, shape index: {}]
  %s14 = inlined_call_operand.vmem [shape: f32[1,2048], index: 14, kind: input, shape index: {}]
  %s15 = inlined_call_operand.hbm [shape: f32[8,2048], index: 15, kind: output, shape index: {0}]
  %s16 = inlined_call_operand.vmem [shape: f32[8,1], index: 16, kind: output, shape index: {1}]
  %s17 = inlined_call_operand.hbm [shape: f32[2,8,128], index: 17, kind: output, shape index: {2}]
  %s18 = inlined_call_operand.hbm [shape: f32[2,8,128], index: 18, kind: output, shape index: {3}]
  %19 = xla_tuple %s15, %s16, %s17, %s18
  %s20 = sld [smem:[#allocation0]]
  $region134: #{tpu_custom_call.1} parent=0
    _
  %s22 = ssub.s32 1, %s20
  %s23 = scalar_select 0, %s22, %s20
  %v24 = vstv %s6
  %25 = vst [vmem:[#allocation5] sm:$0x1] %v24
  $region1: #{tpu_custom_call.1} parent=0
    #allocation6 [shape = 'u8[4096]{0}', space=vmem, size = 0x1000, scoped, tag = 'input window, operand 0, single buffered']
    #allocation7 [shape = 's32[1]{0}', space=sflag, size = 0x4, scoped, tag = 'scoped memory for tpu_custom_call.1']
    #allocation8 [shape = 's32[1]{0}', space=sflag, size = 0x4, scoped, tag = 'scoped memory for tpu_custom_call.1']
    #allocation9 [shape = 'u8[8192]{0}', space=vmem, size = 0x2000, scoped, tag = 'input window, operand 1, single buffered']
    #allocation10 [shape = 's32[1]{0}', space=sflag, size = 0x4, scoped, tag = 'scoped memory for tpu_custom_call.1']
    #allocation11 [shape = 'u8[8192]{0}', space=vmem, size = 0x2000, scoped, tag = 'input window, operand 2, single buffered']
    #allocation12 [shape = 'u8[32768]{0}', space=vmem, size = 0x8000, scoped, tag = 'input window, operand 3, single buffered']
    #allocation13 [shape = 's32[1]{0}', space=sflag, size = 0x4, scoped, tag = 'scoped memory for tpu_custom_call.1']
    #allocation14 [shape = 'u8[65536]{0}', space=vmem, size = 0x10000, scoped, tag = 'input window, operand 7, single buffered']
    #allocation15 [shape = 'u8[65536]{0}', space=vmem, size = 0x10000, scoped, tag = 'input window, operand 8, single buffered']
    #allocation16 [shape = 's32[1]{0}', space=sflag, size = 0x4, scoped, tag = 'scoped memory for tpu_custom_call.1']
    #allocation17 [shape = 'u8[524288]{0}', space=vmem, size = 0x80000, scoped, tag = 'input window, operand 10, single buffered']
    #allocation18 [shape = 'u8[524288]{0}', space=vmem, size = 0x80000, scoped, tag = 'input window, operand 11, single buffered']
    #allocation19 [shape = 's32[1]{0}', space=sflag, size = 0x4, scoped, tag = 'scoped memory for tpu_custom_call.1']
    #allocation20 [shape = 'u8[524288]{0}', space=vmem, size = 0x80000, scoped, tag = 'input window, operand 13, single buffered']
    #allocation21 [shape = 'u8[65536]{0}', space=vmem, size = 0x10000, scoped, tag = 'output window, operand 0, single buffered']
    #allocation22 [shape = 'u8[8192]{0}', space=vmem, size = 0x2000, scoped, tag = 'output window, operand 2, single buffered']
    #allocation23 [shape = 's32[1]{0}', space=sflag, size = 0x4, scoped, tag = 'scoped memory for tpu_custom_call.1']
    #allocation24 [shape = 'u8[8192]{0}', space=vmem, size = 0x2000, scoped, tag = 'output window, operand 3, single buffered']
    %26 = vsyncpa [#allocation7], 0
    %27 = vsyncpa [#allocation10], 0
    %28 = vsyncpa [#allocation13], 0
    %29 = vsyncpa [#allocation16], 0
    %30 = vsyncpa [#allocation19], 0
    %31 = vsyncpa [#allocation8], 0
    %32 = vsyncpa [#allocation23], 0
    // Predicated region
    $region2: #{tpu_custom_call.1} parent=1 // pred_check
      _
    $region3: #{tpu_custom_call.1} parent=1 // pred_check_branch
      %34 = sbr.rel (0) target = $region5
    $region4: #{tpu_custom_call.1} parent=1 // pred_region
      %s36 = ssub.s32 128, 128
      %37 = vsyncadd [#allocation7], %s36
      %s39 = sshll.u32 [#allocation6], 4
      %s40 = int_to_ptr.vmem [resolvable:$true] %s39
      %42 = dma.hbm_to_vmem [thread:$0]  %s0, 128, %s40, [#allocation7]
    $region5: #{tpu_custom_call.1} parent=1 // pred_fallthru
      _
    // Predicated region
    $region6: #{tpu_custom_call.1} parent=1 // pred_check
      _
    $region7: #{tpu_custom_call.1} parent=1 // pred_check_branch
      %44 = sbr.rel (0) target = $region9
    $region8: #{tpu_custom_call.1} parent=1 // pred_region
      %s46 = ssub.s32 256, 256
      %47 = vsyncadd [#allocation10], %s46
      %s48 = sshll.u32 [#allocation9], 4
      %s49 = int_to_ptr.vmem [resolvable:$true] %s48
      %54 = dma.hbm_to_vmem [thread:$0]  %s1, 256, %s49, [#allocation10], 128, 128, 8
    $region9: #{tpu_custom_call.1} parent=1 // pred_fallthru
      _
    // Predicated region
    $region10: #{tpu_custom_call.1} parent=1 // pred_check
      _
    $region11: #{tpu_custom_call.1} parent=1 // pred_check_branch
      %56 = sbr.rel (0) target = $region13
    $region12: #{tpu_custom_call.1} parent=1 // pred_region
      %s58 = ssub.s32 256, 256
      %59 = vsyncadd [#allocation10], %s58
      %s60 = sshll.u32 [#allocation11], 4
      %s61 = int_to_ptr.vmem [resolvable:$true] %s60
      %66 = dma.hbm_to_vmem [thread:$0]  %s2, 256, %s61, [#allocation10], 128, 128, 8
    $region13: #{tpu_custom_call.1} parent=1 // pred_fallthru
      _
    // Predicated region
    $region14: #{tpu_custom_call.1} parent=1 // pred_check
      _
    $region15: #{tpu_custom_call.1} parent=1 // pred_check_branch
      %68 = sbr.rel (0) target = $region17
    $region16: #{tpu_custom_call.1} parent=1 // pred_region
      %s70 = ssub.s32 1024, 1024
      %71 = vsyncadd [#allocation13], %s70
      %s72 = sshll.u32 [#allocation12], 4
      %s73 = int_to_ptr.vmem [resolvable:$true] %s72
      %78 = dma.hbm_to_vmem [thread:$0]  %s3, 1024, %s73, [#allocation13], 128, 128, 8
    $region17: #{tpu_custom_call.1} parent=1 // pred_fallthru
      _
    // Predicated region
    $region18: #{tpu_custom_call.1} parent=1 // pred_check
      _
    $region19: #{tpu_custom_call.1} parent=1 // pred_check_branch
      %80 = sbr.rel (0) target = $region21
    $region20: #{tpu_custom_call.1} parent=1 // pred_region
      _
    $region21: #{tpu_custom_call.1} parent=1 // pred_fallthru
      _
    // Predicated region
    $region22: #{tpu_custom_call.1} parent=1 // pred_check
      _
    $region23: #{tpu_custom_call.1} parent=1 // pred_check_branch
      %82 = sbr.rel (0) target = $region25
    $region24: #{tpu_custom_call.1} parent=1 // pred_region
      _
    $region25: #{tpu_custom_call.1} parent=1 // pred_fallthru
      _
    // Predicated region
    $region26: #{tpu_custom_call.1} parent=1 // pred_check
      _
    $region27: #{tpu_custom_call.1} parent=1 // pred_check_branch
      %84 = sbr.rel (0) target = $region29
    $region28: #{tpu_custom_call.1} parent=1 // pred_region
      _
    $region29: #{tpu_custom_call.1} parent=1 // pred_fallthru
      _
    // Predicated region
    $region30: #{tpu_custom_call.1} parent=1 // pred_check
      _
    $region31: #{tpu_custom_call.1} parent=1 // pred_check_branch
      %86 = sbr.rel (0) target = $region33
    $region32: #{tpu_custom_call.1} parent=1 // pred_region
      %s88 = ssub.s32 2048, 2048
      %89 = vsyncadd [#allocation13], %s88
      %s90 = sshll.u32 [#allocation14], 4
      %s91 = int_to_ptr.vmem [resolvable:$true] %s90
      %96 = dma.hbm_to_vmem [thread:$0]  %s7, 2048, %s91, [#allocation13], 128, 128, 8
    $region33: #{tpu_custom_call.1} parent=1 // pred_fallthru
      _
    // Predicated region
    $region34: #{tpu_custom_call.1} parent=1 // pred_check
      _
    $region35: #{tpu_custom_call.1} parent=1 // pred_check_branch
      %98 = sbr.rel (0) target = $region37
    $region36: #{tpu_custom_call.1} parent=1 // pred_region
      %s100 = ssub.s32 2048, 2048
      %101 = vsyncadd [#allocation16], %s100
      %s102 = sshll.u32 [#allocation15], 4
      %s103 = int_to_ptr.vmem [resolvable:$true] %s102
      %108 = dma.hbm_to_vmem [thread:$0]  %s8, 2048, %s103, [#allocation16], 128, 128, 8
    $region37: #{tpu_custom_call.1} parent=1 // pred_fallthru
      _
    // Predicated region
    $region38: #{tpu_custom_call.1} parent=1 // pred_check
      _
    $region39: #{tpu_custom_call.1} parent=1 // pred_check_branch
      %110 = sbr.rel (0) target = $region41
    $region40: #{tpu_custom_call.1} parent=1 // pred_region
      _
    $region41: #{tpu_custom_call.1} parent=1 // pred_fallthru
      _
    // Predicated region
    $region42: #{tpu_custom_call.1} parent=1 // pred_check
      _
    $region43: #{tpu_custom_call.1} parent=1 // pred_check_branch
      %112 = sbr.rel (0) target = $region45
    $region44: #{tpu_custom_call.1} parent=1 // pred_region
      %s114 = ssub.s32 16384, 16384
      %115 = vsyncadd [#allocation16], %s114
      %s116 = sshll.u32 [#allocation17], 4
      %s117 = int_to_ptr.vmem [resolvable:$true] %s116
      %122 = dma.hbm_to_vmem [thread:$0]  %s10, 16384, %s117, [#allocation16], 512, 512, 32
    $region45: #{tpu_custom_call.1} parent=1 // pred_fallthru
      _
    // Predicated region
    $region46: #{tpu_custom_call.1} parent=1 // pred_check
      _
    $region47: #{tpu_custom_call.1} parent=1 // pred_check_branch
      %124 = sbr.rel (0) target = $region49
    $region48: #{tpu_custom_call.1} parent=1 // pred_region
      %s126 = ssub.s32 16384, 16384
      %127 = vsyncadd [#allocation19], %s126
      %s128 = sshll.u32 [#allocation18], 4
      %s129 = int_to_ptr.vmem [resolvable:$true] %s128
      %134 = dma.hbm_to_vmem [thread:$0]  %s11, 16384, %s129, [#allocation19], 512, 512, 32
    $region49: #{tpu_custom_call.1} parent=1 // pred_fallthru
      _
    // Predicated region
    $region50: #{tpu_custom_call.1} parent=1 // pred_check
      _
    $region51: #{tpu_custom_call.1} parent=1 // pred_check_branch
      %136 = sbr.rel (0) target = $region53
    $region52: #{tpu_custom_call.1} parent=1 // pred_region
      _
    $region53: #{tpu_custom_call.1} parent=1 // pred_fallthru
      _
    // Predicated region
    $region54: #{tpu_custom_call.1} parent=1 // pred_check
      _
    $region55: #{tpu_custom_call.1} parent=1 // pred_check_branch
      %138 = sbr.rel (0) target = $region57
    $region56: #{tpu_custom_call.1} parent=1 // pred_region
      %s140 = ssub.s32 16384, 16384
      %141 = vsyncadd [#allocation19], %s140
      %s142 = sshll.u32 [#allocation20], 4
      %s143 = int_to_ptr.vmem [resolvable:$true] %s142
      %148 = dma.hbm_to_vmem [thread:$0]  %s13, 16384, %s143, [#allocation19], 1024, 1024, 64
    $region57: #{tpu_custom_call.1} parent=1 // pred_fallthru
      _
    // Predicated region
    $region58: #{tpu_custom_call.1} parent=1 // pred_check
      _
    $region59: #{tpu_custom_call.1} parent=1 // pred_check_branch
      %150 = sbr.rel (0) target = $region61
    $region60: #{tpu_custom_call.1} parent=1 // pred_region
      _
    $region61: #{tpu_custom_call.1} parent=1 // pred_fallthru
      _
    // Predicated region
    $region62: #{tpu_custom_call.1} parent=1 // pred_check
      _
    $region63: #{tpu_custom_call.1} parent=1 // pred_check_branch
      %152 = sbr.rel (0) target = $region65
    $region64: #{tpu_custom_call.1} parent=1 // pred_region
      %153 = dma.done [#allocation7], 128
    $region65: #{tpu_custom_call.1} parent=1 // pred_fallthru
      _
    // Predicated region
    $region66: #{tpu_custom_call.1} parent=1 // pred_check
      _
    $region67: #{tpu_custom_call.1} parent=1 // pred_check_branch
      %155 = sbr.rel (0) target = $region69
    $region68: #{tpu_custom_call.1} parent=1 // pred_region
      %156 = dma.done [#allocation10], 256
    $region69: #{tpu_custom_call.1} parent=1 // pred_fallthru
      _
    // Predicated region
    $region70: #{tpu_custom_call.1} parent=1 // pred_check
      _
    $region71: #{tpu_custom_call.1} parent=1 // pred_check_branch
      %158 = sbr.rel (0) target = $region73
    $region72: #{tpu_custom_call.1} parent=1 // pred_region
      %159 = dma.done [#allocation10], 256
    $region73: #{tpu_custom_call.1} parent=1 // pred_fallthru
      _
    // Predicated region
    $region74: #{tpu_custom_call.1} parent=1 // pred_check
      _
    $region75: #{tpu_custom_call.1} parent=1 // pred_check_branch
      %161 = sbr.rel (0) target = $region77
    $region76: #{tpu_custom_call.1} parent=1 // pred_region
      %162 = dma.done [#allocation13], 1024
    $region77: #{tpu_custom_call.1} parent=1 // pred_fallthru
      _
    // Predicated region
    $region78: #{tpu_custom_call.1} parent=1 // pred_check
      _
    $region79: #{tpu_custom_call.1} parent=1 // pred_check_branch
      %164 = sbr.rel (0) target = $region81
    $region80: #{tpu_custom_call.1} parent=1 // pred_region
      %165 = dma.done [#allocation13], 2048
    $region81: #{tpu_custom_call.1} parent=1 // pred_fallthru
      _
    // Predicated region
    $region82: #{tpu_custom_call.1} parent=1 // pred_check
      _
    $region83: #{tpu_custom_call.1} parent=1 // pred_check_branch
      %167 = sbr.rel (0) target = $region85
    $region84: #{tpu_custom_call.1} parent=1 // pred_region
      %168 = dma.done [#allocation16], 2048
    $region85: #{tpu_custom_call.1} parent=1 // pred_fallthru
      _
    // Predicated region
    $region86: #{tpu_custom_call.1} parent=1 // pred_check
      _
    $region87: #{tpu_custom_call.1} parent=1 // pred_check_branch
      %170 = sbr.rel (0) target = $region89
    $region88: #{tpu_custom_call.1} parent=1 // pred_region
      %171 = dma.done [#allocation16], 16384
    $region89: #{tpu_custom_call.1} parent=1 // pred_fallthru
      _
    // Predicated region
    $region90: #{tpu_custom_call.1} parent=1 // pred_check
      _
    $region91: #{tpu_custom_call.1} parent=1 // pred_check_branch
      %173 = sbr.rel (0) target = $region93
    $region92: #{tpu_custom_call.1} parent=1 // pred_region
      %174 = dma.done [#allocation19], 16384
    $region93: #{tpu_custom_call.1} parent=1 // pred_fallthru
      _
    // Predicated region
    $region94: #{tpu_custom_call.1} parent=1 // pred_check
      _
    $region95: #{tpu_custom_call.1} parent=1 // pred_check_branch
      %176 = sbr.rel (0) target = $region97
    $region96: #{tpu_custom_call.1} parent=1 // pred_region
      %177 = dma.done [#allocation19], 16384
    $region97: #{tpu_custom_call.1} parent=1 // pred_fallthru
      _
    %p179 = scmp.eq.s32.totalorder 0, 0
    // Predicated region
    $region98: #{tpu_custom_call.1} parent=1 // pred_check
      %p180 = pneg %p179
    $region99: #{tpu_custom_call.1} parent=1 // pred_check_branch
      %182 = sbr.rel (%p180) target = $region101
    $region100: #{tpu_custom_call.1} parent=1 // pred_region
      %v183 = vld [vmem:[#allocation9] sm:$0xff]
      %v184 = vld [vmem:[#allocation9 + $0x8] sm:$0xff]
      %v185 = vld [vmem:[#allocation11] sm:$0xff]
      %v186 = vld [vmem:[#allocation11 + $0x8] sm:$0xff]
      %v187 = vld [vmem:[#allocation12] sm:$0xff]
      %v188 = vld [vmem:[#allocation12 + $0x8] sm:$0xff]
      %v189 = vld [vmem:[#allocation12 + $0x10] sm:$0xff]
      %v190 = vld [vmem:[#allocation12 + $0x18] sm:$0xff]
      %v191 = vld [vmem:[#allocation12 + $0x20] sm:$0xff]
      %v192 = vld [vmem:[#allocation12 + $0x28] sm:$0xff]
      %v193 = vld [vmem:[#allocation12 + $0x30] sm:$0xff]
      %v194 = vld [vmem:[#allocation12 + $0x38] sm:$0xff]
      %v195 = vld [vmem:[#allocation6] sm:$0xff]
      %v196 = vmul.f32 %v184, %v186
      %v197 = vld [vmem:[%s4] sm:$0x1]
      %v198 = vld [vmem:[%s5] sm:$0x1]
      %v200 = vlaneseq
      %v201 = vshrl.u32 %v200, 7
      %v202 = vsub.s32 0, %v201
      %v203 = vrot.slane %v197, %v202
      %v205 = vmul.f32 %v187, %v203
      %v206 = vmul.f32 %v188, %v203
      %v207 = vmul.f32 %v189, %v203
      %v208 = vmul.f32 %v190, %v203
      %v209 = vmul.f32 %v191, %v203
      %v210 = vmul.f32 %v192, %v203
      %v211 = vmul.f32 %v193, %v203
      %v212 = vmul.f32 %v194, %v203
      %213 = vadd.xlane.f32.xlu0 %v205
      %v214 = vpop.xlane.xlu0 %213
      %215 = vadd.xlane.f32.xlu0 %v206
      %v216 = vpop.xlane.xlu0 %215
      %217 = vadd.xlane.f32.xlu0 %v207
      %v218 = vpop.xlane.xlu0 %217
      %219 = vadd.xlane.f32.xlu0 %v208
      %v220 = vpop.xlane.xlu0 %219
      %221 = vadd.xlane.f32.xlu0 %v209
      %v222 = vpop.xlane.xlu0 %221
      %223 = vadd.xlane.f32.xlu0 %v210
      %v224 = vpop.xlane.xlu0 %223
      %225 = vadd.xlane.f32.xlu0 %v211
      %v226 = vpop.xlane.xlu0 %225
      %227 = vadd.xlane.f32.xlu0 %v212
      %v228 = vpop.xlane.xlu0 %227
      %v230 = vlaneseq
      %v231 = vshrl.u32 %v230, 7
      %v232 = vsub.s32 0, %v231
      %v233 = vrot.slane %v198, %v232
      %v235 = vmul.f32 %v196, %v233
      %236 = vadd.xlane.f32.xlu0 %v235
      %v237 = vpop.xlane.xlu0 %236
      %v239 = vlaneseq
      %v240 = vshrl.u32 %v239, 7
      %v241 = vsub.s32 0, %v240
      %v242 = vrot.slane %v237, %v241
      %v243 = vlaneseq
      %v244 = vshrl.u32 %v243, 7
      %v245 = vsub.s32 1, %v244
      %v246 = vrot.slane %v237, %v245
      %v247 = vlaneseq
      %v248 = vshrl.u32 %v247, 7
      %v249 = vsub.s32 2, %v248
      %v250 = vrot.slane %v237, %v249
      %v251 = vlaneseq
      %v252 = vshrl.u32 %v251, 7
      %v253 = vsub.s32 3, %v252
      %v254 = vrot.slane %v237, %v253
      %v255 = vlaneseq
      %v256 = vshrl.u32 %v255, 7
      %v257 = vsub.s32 4, %v256
      %v258 = vrot.slane %v237, %v257
      %v259 = vlaneseq
      %v260 = vshrl.u32 %v259, 7
      %v261 = vsub.s32 5, %v260
      %v262 = vrot.slane %v237, %v261
      %v263 = vlaneseq
      %v264 = vshrl.u32 %v263, 7
      %v265 = vsub.s32 6, %v264
      %v266 = vrot.slane %v237, %v265
      %v267 = vlaneseq
      %v268 = vshrl.u32 %v267, 7
      %v269 = vsub.s32 7, %v268
      %v270 = vrot.slane %v237, %v269
      %v279 = vadd.f32 %v214, %v242
      %v280 = vadd.f32 %v216, %v246
      %v281 = vadd.f32 %v218, %v250
      %v282 = vadd.f32 %v220, %v254
      %v283 = vadd.f32 %v222, %v258
      %v284 = vadd.f32 %v224, %v262
      %v285 = vadd.f32 %v226, %v266
      %v286 = vadd.f32 %v228, %v270
      %v287 = vld [vmem:[#allocation5] sm:$0x1]
      %s288 = vtos %v287
      %v289 = vstv %s288
      %v290 = vadd.f32 %v279, %v289
      %v291 = vadd.f32 %v280, %v289
      %v292 = vadd.f32 %v281, %v289
      %v293 = vadd.f32 %v282, %v289
      %v294 = vadd.f32 %v283, %v289
      %v295 = vadd.f32 %v284, %v289
      %v296 = vadd.f32 %v285, %v289
      %v297 = vadd.f32 %v286, %v289
      %306 = vset.pattern.permute.xlu0 0
      %307 = vperm.xlu0 %306, %v290
      %v308 = vpop.permute.xlu0 %307
      %309 = vset.pattern.permute.xlu0 0
      %310 = vperm.xlu0 %309, %v291
      %v311 = vpop.permute.xlu0 %310
      %312 = vset.pattern.permute.xlu0 0
      %313 = vperm.xlu0 %312, %v292
      %v314 = vpop.permute.xlu0 %313
      %315 = vset.pattern.permute.xlu0 0
      %316 = vperm.xlu0 %315, %v293
      %v317 = vpop.permute.xlu0 %316
      %318 = vset.pattern.permute.xlu0 0
      %319 = vperm.xlu0 %318, %v294
      %v320 = vpop.permute.xlu0 %319
      %321 = vset.pattern.permute.xlu0 0
      %322 = vperm.xlu0 %321, %v295
      %v323 = vpop.permute.xlu0 %322
      %324 = vset.pattern.permute.xlu0 0
      %325 = vperm.xlu0 %324, %v296
      %v326 = vpop.permute.xlu0 %325
      %327 = vset.pattern.permute.xlu0 0
      %328 = vperm.xlu0 %327, %v297
      %v329 = vpop.permute.xlu0 %328
      %v330 = vlaneseq
      %v331 = vand.u32 %v330, 127
      %v332 = vadd.s32 %v331, 4294967295
      %v333 = vlaneseq
      %v334 = vshrl.u32 %v333, 7
      %v335 = vsub.s32 %v332, %v334
      %v336 = vrot.slane %v308, %v335
      %v337 = vlaneseq
      %v338 = vshrl.u32 %v337, 7
      %v339 = vsub.s32 %v332, %v338
      %v340 = vrot.slane %v311, %v339
      %v341 = vlaneseq
      %v342 = vshrl.u32 %v341, 7
      %v343 = vsub.s32 %v332, %v342
      %v344 = vrot.slane %v314, %v343
      %v345 = vlaneseq
      %v346 = vshrl.u32 %v345, 7
      %v347 = vsub.s32 %v332, %v346
      %v348 = vrot.slane %v317, %v347
      %v349 = vlaneseq
      %v350 = vshrl.u32 %v349, 7
      %v351 = vsub.s32 %v332, %v350
      %v352 = vrot.slane %v320, %v351
      %v353 = vlaneseq
      %v354 = vshrl.u32 %v353, 7
      %v355 = vsub.s32 %v332, %v354
      %v356 = vrot.slane %v323, %v355
      %v357 = vlaneseq
      %v358 = vshrl.u32 %v357, 7
      %v359 = vsub.s32 %v332, %v358
      %v360 = vrot.slane %v326, %v359
      %v361 = vlaneseq
      %v362 = vshrl.u32 %v361, 7
      %v363 = vsub.s32 %v332, %v362
      %v364 = vrot.slane %v329, %v363
      %vm365 = vcmask 1041409
      %v366 = vsel %vm365, %v340, %v336
      %vm367 = vcmask 1042434
      %v368 = vsel %vm367, %v344, %v366
      %vm369 = vcmask 1043459
      %v370 = vsel %vm369, %v348, %v368
      %vm371 = vcmask 1044484
      %v372 = vsel %vm371, %v352, %v370
      %vm373 = vcmask 1045509
      %v374 = vsel %vm373, %v356, %v372
      %vm375 = vcmask 1046534
      %v376 = vsel %vm375, %v360, %v374
      %vm377 = vcmask 1047559
      %v378 = vsel %vm377, %v364, %v376
      %vm380 = vcmask 7168
      %v381 = vsel %vm380, 0.0, %v378
      %vm382 = vcmask 64512
      %v383 = vsel %vm382, %v381, -inf
      %384 = vmax.xlane.f32.xlu0 %v383
      %v385 = vpop.xlane.xlu0 %384
      %v386 = vsub.f32 %v381, %v385
      %v387 = vmul.f32 %v386, 1.442695
      %v388 = vpow.pop %v387
      %v389 = vsel %vm382, %v388, 0.0
      %390 = vadd.xlane.f32.xlu0 %v389
      %v391 = vpop.xlane.xlu0 %390
      %v392 = vrcp.pop %v391
      %v393 = vmul.f32 %v388, %v392
      %v394 = vlaneseq
      %v395 = vshrl.u32 %v394, 7
      %v396 = vsub.s32 0, %v395
      %v397 = vrot.slane %v393, %v396
      %399 = vbcast.lane.b32.xlu0 %v397, 256
      %v400 = vpop.permute.xlu0 %399
      %v401 = vlaneseq
      %v402 = vshrl.u32 %v401, 7
      %v403 = vsub.s32 1, %v402
      %v404 = vrot.slane %v393, %v403
      %406 = vbcast.lane.b32.xlu0 %v404, 256
      %v407 = vpop.permute.xlu0 %406
      %v408 = vlaneseq
      %v409 = vshrl.u32 %v408, 7
      %v410 = vsub.s32 2, %v409
      %v411 = vrot.slane %v393, %v410
      %413 = vbcast.lane.b32.xlu0 %v411, 256
      %v414 = vpop.permute.xlu0 %413
      %v415 = vlaneseq
      %v416 = vshrl.u32 %v415, 7
      %v417 = vsub.s32 3, %v416
      %v418 = vrot.slane %v393, %v417
      %420 = vbcast.lane.b32.xlu0 %v418, 256
      %v421 = vpop.permute.xlu0 %420
      %v422 = vlaneseq
      %v423 = vshrl.u32 %v422, 7
      %v424 = vsub.s32 4, %v423
      %v425 = vrot.slane %v393, %v424
      %427 = vbcast.lane.b32.xlu0 %v425, 256
      %v428 = vpop.permute.xlu0 %427
      %v429 = vlaneseq
      %v430 = vshrl.u32 %v429, 7
      %v431 = vsub.s32 5, %v430
      %v432 = vrot.slane %v393, %v431
      %434 = vbcast.lane.b32.xlu0 %v432, 256
      %v435 = vpop.permute.xlu0 %434
      %v436 = vlaneseq
      %v437 = vshrl.u32 %v436, 7
      %v438 = vsub.s32 6, %v437
      %v439 = vrot.slane %v393, %v438
      %441 = vbcast.lane.b32.xlu0 %v439, 256
      %v442 = vpop.permute.xlu0 %441
      %v443 = vlaneseq
      %v444 = vshrl.u32 %v443, 7
      %v445 = vsub.s32 7, %v444
      %v446 = vrot.slane %v393, %v445
      %448 = vbcast.lane.b32.xlu0 %v446, 256
      %v449 = vpop.permute.xlu0 %448
      %v450 = vmul.f32 %v400, %v187
      %v451 = vmul.f32 %v407, %v188
      %v452 = vmul.f32 %v414, %v189
      %v453 = vmul.f32 %v421, %v190
      %v454 = vmul.f32 %v428, %v191
      %v455 = vmul.f32 %v435, %v192
      %v456 = vmul.f32 %v442, %v193
      %v457 = vmul.f32 %v449, %v194
      %v458 = vrot.slane %v450, 4
      %v459 = vadd.f32 %v450, %v458
      %v460 = vrot.slane %v459, 2
      %v461 = vadd.f32 %v459, %v460
      %v462 = vrot.slane %v461, 1
      %v463 = vadd.f32 %v461, %v462
      %v464 = vrot.slane %v451, 4
      %v465 = vadd.f32 %v451, %v464
      %v466 = vrot.slane %v465, 2
      %v467 = vadd.f32 %v465, %v466
      %v468 = vrot.slane %v467, 1
      %v469 = vadd.f32 %v467, %v468
      %v470 = vrot.slane %v452, 4
      %v471 = vadd.f32 %v452, %v470
      %v472 = vrot.slane %v471, 2
      %v473 = vadd.f32 %v471, %v472
      %v474 = vrot.slane %v473, 1
      %v475 = vadd.f32 %v473, %v474
      %v476 = vrot.slane %v453, 4
      %v477 = vadd.f32 %v453, %v476
      %v478 = vrot.slane %v477, 2
      %v479 = vadd.f32 %v477, %v478
      %v480 = vrot.slane %v479, 1
      %v481 = vadd.f32 %v479, %v480
      %v482 = vrot.slane %v454, 4
      %v483 = vadd.f32 %v454, %v482
      %v484 = vrot.slane %v483, 2
      %v485 = vadd.f32 %v483, %v484
      %v486 = vrot.slane %v485, 1
      %v487 = vadd.f32 %v485, %v486
      %v488 = vrot.slane %v455, 4
      %v489 = vadd.f32 %v455, %v488
      %v490 = vrot.slane %v489, 2
      %v491 = vadd.f32 %v489, %v490
      %v492 = vrot.slane %v491, 1
      %v493 = vadd.f32 %v491, %v492
      %v494 = vrot.slane %v456, 4
      %v495 = vadd.f32 %v456, %v494
      %v496 = vrot.slane %v495, 2
      %v497 = vadd.f32 %v495, %v496
      %v498 = vrot.slane %v497, 1
      %v499 = vadd.f32 %v497, %v498
      %v500 = vrot.slane %v457, 4
      %v501 = vadd.f32 %v457, %v500
      %v502 = vrot.slane %v501, 2
      %v503 = vadd.f32 %v501, %v502
      %v504 = vrot.slane %v503, 1
      %v505 = vadd.f32 %v503, %v504
      %v506 = vld [vmem:[#allocation14] sm:$0xff]
      %v507 = vld [vmem:[#allocation14 + $0x8] sm:$0xff]
      %v508 = vld [vmem:[#allocation14 + $0x10] sm:$0xff]
      %v509 = vld [vmem:[#allocation14 + $0x18] sm:$0xff]
      %v510 = vld [vmem:[#allocation14 + $0x20] sm:$0xff]
      %v511 = vld [vmem:[#allocation14 + $0x28] sm:$0xff]
      %v512 = vld [vmem:[#allocation14 + $0x30] sm:$0xff]
      %v513 = vld [vmem:[#allocation14 + $0x38] sm:$0xff]
      %v514 = vld [vmem:[#allocation14 + $0x40] sm:$0xff]
      %v515 = vld [vmem:[#allocation14 + $0x48] sm:$0xff]
      %v516 = vld [vmem:[#allocation14 + $0x50] sm:$0xff]
      %v517 = vld [vmem:[#allocation14 + $0x58] sm:$0xff]
      %v518 = vld [vmem:[#allocation14 + $0x60] sm:$0xff]
      %v519 = vld [vmem:[#allocation14 + $0x68] sm:$0xff]
      %v520 = vld [vmem:[#allocation14 + $0x70] sm:$0xff]
      %v521 = vld [vmem:[#allocation14 + $0x78] sm:$0xff]
      %v522 = vld [vmem:[#allocation15] sm:$0xff]
      %v523 = vld [vmem:[#allocation15 + $0x8] sm:$0xff]
      %v524 = vld [vmem:[#allocation15 + $0x10] sm:$0xff]
      %v525 = vld [vmem:[#allocation15 + $0x18] sm:$0xff]
      %v526 = vld [vmem:[#allocation15 + $0x20] sm:$0xff]
      %v527 = vld [vmem:[#allocation15 + $0x28] sm:$0xff]
      %v528 = vld [vmem:[#allocation15 + $0x30] sm:$0xff]
      %v529 = vld [vmem:[#allocation15 + $0x38] sm:$0xff]
      %v530 = vld [vmem:[#allocation15 + $0x40] sm:$0xff]
      %v531 = vld [vmem:[#allocation15 + $0x48] sm:$0xff]
      %v532 = vld [vmem:[#allocation15 + $0x50] sm:$0xff]
      %v533 = vld [vmem:[#allocation15 + $0x58] sm:$0xff]
      %v534 = vld [vmem:[#allocation15 + $0x60] sm:$0xff]
      %v535 = vld [vmem:[#allocation15 + $0x68] sm:$0xff]
      %v536 = vld [vmem:[#allocation15 + $0x70] sm:$0xff]
      %v537 = vld [vmem:[#allocation15 + $0x78] sm:$0xff]
      %538 = vmatprep.subr.mxu0 0.0
      %539 = vmatpush1.msra.mxu0 %v522
      %540 = vmatprep.subr.mxu0 0.0
      %541 = vmatpush1.msra.mxu0 %v523
      %542 = vmatprep.subr.mxu0 0.0
      %543 = vmatpush1.msra.mxu0 %v524
      %544 = vmatprep.subr.mxu0 0.0
      %545 = vmatpush1.msra.mxu0 %v525
      %546 = vmatprep.subr.mxu0 0.0
      %547 = vmatpush1.msra.mxu0 %v526
      %548 = vmatprep.subr.mxu0 0.0
      %549 = vmatpush1.msra.mxu0 %v527
      %550 = vmatprep.subr.mxu0 0.0
      %551 = vmatpush1.msra.mxu0 %v528
      %552 = vmatprep.subr.mxu0 0.0
      %553 = vmatpush1.msra.mxu0 %v529
      %554 = vmatprep.subr.mxu0 0.0
      %555 = vmatpush1.msra.mxu0 %v530
      %556 = vmatprep.subr.mxu0 0.0
      %557 = vmatpush1.msra.mxu0 %v531
      %558 = vmatprep.subr.mxu0 0.0
      %559 = vmatpush1.msra.mxu0 %v532
      %560 = vmatprep.subr.mxu0 0.0
      %561 = vmatpush1.msra.mxu0 %v533
      %562 = vmatprep.subr.mxu0 0.0
      %563 = vmatpush1.msra.mxu0 %v534
      %564 = vmatprep.subr.mxu0 0.0
      %565 = vmatpush1.msra.mxu0 %v535
      %566 = vmatprep.subr.mxu0 0.0
      %567 = vmatpush1.msra.mxu0 %v536
      %568 = vmatprep.subr.mxu0 0.0
      %569 = vmatpush1.msra.mxu0 %v537
      %570 = vmatprep.subr.mxu0 0.0
      %571 = vmatpush1.msra.mxu0 0.0
      %572 = vmatprep.subr.mxu0 0.0
      %573 = vmatpush1.msra.mxu0 0.0
      %574 = vmatprep.subr.mxu0 0.0
      %575 = vmatpush1.msra.mxu0 0.0
      %576 = vmatprep.subr.mxu0 0.0
      %577 = vmatpush1.msra.mxu0 0.0
      %578 = vmatprep.subr.mxu0 0.0
      %579 = vmatpush1.msra.mxu0 0.0
      %580 = vmatprep.subr.mxu0 0.0
      %581 = vmatpush1.msra.mxu0 0.0
      %582 = vmatprep.subr.mxu0 0.0
      %583 = vmatpush1.msra.mxu0 0.0
      %584 = vmatprep.subr.mxu0 0.0
      %585 = vmatpush1.msra.mxu0 0.0
      %586 = vmatprep.subr.mxu0 0.0
      %587 = vmatpush1.msra.mxu0 0.0
      %588 = vmatprep.subr.mxu0 0.0
      %589 = vmatpush1.msra.mxu0 0.0
      %590 = vmatprep.subr.mxu0 0.0
      %591 = vmatpush1.msra.mxu0 0.0
      %592 = vmatprep.subr.mxu0 0.0
      %593 = vmatpush1.msra.mxu0 0.0
      %594 = vmatprep.subr.mxu0 0.0
      %595 = vmatpush1.msra.mxu0 0.0
      %596 = vmatprep.subr.mxu0 0.0
      %597 = vmatpush1.msra.mxu0 0.0
      %598 = vmatprep.subr.mxu0 0.0
      %599 = vmatpush1.msra.mxu0 0.0
      %600 = vmatprep.subr.mxu0 0.0
      %601 = vmatpush1.msra.mxu0 0.0
      %602 = vmatprep.mubr.f32.mxu0 0.0
      %603 = vmatmul.mubr.f32.gmra.mrb[0].mxu0 %v195
      %v604 = vpop.f32.mrb[0].mxu0
      %v605 = vadd.f32 0.0, %v604
      %v606 = vpop.f32.mrb[0].mxu0
      %607 = vdwg.mxu0
      %v616 = vsel %vm365, %v469, %v463
      %v617 = vsel %vm367, %v475, %v616
      %v618 = vsel %vm369, %v481, %v617
      %v619 = vsel %vm371, %v487, %v618
      %v620 = vsel %vm373, %v493, %v619
      %v621 = vsel %vm375, %v499, %v620
      %v622 = vsel %vm377, %v505, %v621
      %624 = vmatprep.subr.mxu0 0.0
      %625 = vmatpush1.msra.mxu0 %v506
      %626 = vmatprep.subr.mxu0 0.0
      %627 = vmatpush1.msra.mxu0 %v507
      %628 = vmatprep.subr.mxu0 0.0
      %629 = vmatpush1.msra.mxu0 %v508
      %630 = vmatprep.subr.mxu0 0.0
      %631 = vmatpush1.msra.mxu0 %v509
      %632 = vmatprep.subr.mxu0 0.0
      %633 = vmatpush1.msra.mxu0 %v510
      %634 = vmatprep.subr.mxu0 0.0
      %635 = vmatpush1.msra.mxu0 %v511
      %636 = vmatprep.subr.mxu0 0.0
      %637 = vmatpush1.msra.mxu0 %v512
      %638 = vmatprep.subr.mxu0 0.0
      %639 = vmatpush1.msra.mxu0 %v513
      %640 = vmatprep.subr.mxu0 0.0
      %641 = vmatpush1.msra.mxu0 %v514
      %642 = vmatprep.subr.mxu0 0.0
      %643 = vmatpush1.msra.mxu0 %v515
      %644 = vmatprep.subr.mxu0 0.0
      %645 = vmatpush1.msra.mxu0 %v516
      %646 = vmatprep.subr.mxu0 0.0
      %647 = vmatpush1.msra.mxu0 %v517
      %648 = vmatprep.subr.mxu0 0.0
      %649 = vmatpush1.msra.mxu0 %v518
      %650 = vmatprep.subr.mxu0 0.0
      %651 = vmatpush1.msra.mxu0 %v519
      %652 = vmatprep.subr.mxu0 0.0
      %653 = vmatpush1.msra.mxu0 %v520
      %654 = vmatprep.subr.mxu0 0.0
      %655 = vmatpush1.msra.mxu0 %v521
      %656 = vmatprep.subr.mxu0 0.0
      %657 = vmatpush1.msra.mxu0 0.0
      %658 = vmatprep.subr.mxu0 0.0
      %659 = vmatpush1.msra.mxu0 0.0
      %660 = vmatprep.subr.mxu0 0.0
      %661 = vmatpush1.msra.mxu0 0.0
      %662 = vmatprep.subr.mxu0 0.0
      %663 = vmatpush1.msra.mxu0 0.0
      %664 = vmatprep.subr.mxu0 0.0
      %665 = vmatpush1.msra.mxu0 0.0
      %666 = vmatprep.subr.mxu0 0.0
      %667 = vmatpush1.msra.mxu0 0.0
      %668 = vmatprep.subr.mxu0 0.0
      %669 = vmatpush1.msra.mxu0 0.0
      %670 = vmatprep.subr.mxu0 0.0
      %671 = vmatpush1.msra.mxu0 0.0
      %672 = vmatprep.subr.mxu0 0.0
      %673 = vmatpush1.msra.mxu0 0.0
      %674 = vmatprep.subr.mxu0 0.0
      %675 = vmatpush1.msra.mxu0 0.0
      %676 = vmatprep.subr.mxu0 0.0
      %677 = vmatpush1.msra.mxu0 0.0
      %678 = vmatprep.subr.mxu0 0.0
      %679 = vmatpush1.msra.mxu0 0.0
      %680 = vmatprep.subr.mxu0 0.0
      %681 = vmatpush1.msra.mxu0 0.0
      %682 = vmatprep.subr.mxu0 0.0
      %683 = vmatpush1.msra.mxu0 0.0
      %684 = vmatprep.subr.mxu0 0.0
      %685 = vmatpush1.msra.mxu0 0.0
      %686 = vmatprep.subr.mxu0 0.0
      %687 = vmatpush1.msra.mxu0 0.0
      %688 = vmatprep.mubr.f32.mxu0 0.0
      %689 = vmatmul.mubr.f32.gmra.mrb[0].mxu0 %v622
      %v690 = vpop.f32.mrb[0].mxu0
      %v691 = vadd.f32 %v605, %v690
      %v692 = vpop.f32.mrb[0].mxu0
      %693 = vdwg.mxu0
      %v694 = vld [vmem:[%s9] sm:$0x1]
      %v696 = vlaneseq
      %v697 = vshrl.u32 %v696, 7
      %v698 = vsub.s32 0, %v697
      %v699 = vrot.slane %v694, %v698
      %v701 = vadd.f32 %v691, %v699
      %v702 = vld [vmem:[#allocation17] sm:$0xff]
      %v703 = vld [vmem:[#allocation17 + $0x8] sm:$0xff]
      %v704 = vld [vmem:[#allocation17 + $0x10] sm:$0xff]
      %v705 = vld [vmem:[#allocation17 + $0x18] sm:$0xff]
      %v706 = vld [vmem:[#allocation17 + $0x20] sm:$0xff]
      %v707 = vld [vmem:[#allocation17 + $0x28] sm:$0xff]
      %v708 = vld [vmem:[#allocation17 + $0x30] sm:$0xff]
      %v709 = vld [vmem:[#allocation17 + $0x38] sm:$0xff]
      %v710 = vld [vmem:[#allocation17 + $0x40] sm:$0xff]
      %v711 = vld [vmem:[#allocation17 + $0x48] sm:$0xff]
      %v712 = vld [vmem:[#allocation17 + $0x50] sm:$0xff]
      %v713 = vld [vmem:[#allocation17 + $0x58] sm:$0xff]
      %v714 = vld [vmem:[#allocation17 + $0x60] sm:$0xff]
      %v715 = vld [vmem:[#allocation17 + $0x68] sm:$0xff]
      %v716 = vld [vmem:[#allocation17 + $0x70] sm:$0xff]
      %v717 = vld [vmem:[#allocation17 + $0x78] sm:$0xff]
      %v718 = vld [vmem:[#allocation17 + $0x80] sm:$0xff]
      %v719 = vld [vmem:[#allocation17 + $0x88] sm:$0xff]
      %v720 = vld [vmem:[#allocation17 + $0x90] sm:$0xff]
      %v721 = vld [vmem:[#allocation17 + $0x98] sm:$0xff]
      %v722 = vld [vmem:[#allocation17 + $0xa0] sm:$0xff]
      %v723 = vld [vmem:[#allocation17 + $0xa8] sm:$0xff]
      %v724 = vld [vmem:[#allocation17 + $0xb0] sm:$0xff]
      %v725 = vld [vmem:[#allocation17 + $0xb8] sm:$0xff]
      %v726 = vld [vmem:[#allocation17 + $0xc0] sm:$0xff]
      %v727 = vld [vmem:[#allocation17 + $0xc8] sm:$0xff]
      %v728 = vld [vmem:[#allocation17 + $0xd0] sm:$0xff]
      %v729 = vld [vmem:[#allocation17 + $0xd8] sm:$0xff]
      %v730 = vld [vmem:[#allocation17 + $0xe0] sm:$0xff]
      %v731 = vld [vmem:[#allocation17 + $0xe8] sm:$0xff]
      %v732 = vld [vmem:[#allocation17 + $0xf0] sm:$0xff]
      %v733 = vld [vmem:[#allocation17 + $0xf8] sm:$0xff]
      %v734 = vld [vmem:[#allocation17 + $0x100] sm:$0xff]
      %v735 = vld [vmem:[#allocation17 + $0x108] sm:$0xff]
      %v736 = vld [vmem:[#allocation17 + $0x110] sm:$0xff]
      %v737 = vld [vmem:[#allocation17 + $0x118] sm:$0xff]
      %v738 = vld [vmem:[#allocation17 + $0x120] sm:$0xff]
      %v739 = vld [vmem:[#allocation17 + $0x128] sm:$0xff]
      %v740 = vld [vmem:[#allocation17 + $0x130] sm:$0xff]
      %v741 = vld [vmem:[#allocation17 + $0x138] sm:$0xff]
      %v742 = vld [vmem:[#allocation17 + $0x140] sm:$0xff]
      %v743 = vld [vmem:[#allocation17 + $0x148] sm:$0xff]
      %v744 = vld [vmem:[#allocation17 + $0x150] sm:$0xff]
      %v745 = vld [vmem:[#allocation17 + $0x158] sm:$0xff]
      %v746 = vld [vmem:[#allocation17 + $0x160] sm:$0xff]
      %v747 = vld [vmem:[#allocation17 + $0x168] sm:$0xff]
      %v748 = vld [vmem:[#allocation17 + $0x170] sm:$0xff]
      %v749 = vld [vmem:[#allocation17 + $0x178] sm:$0xff]
      %v750 = vld [vmem:[#allocation17 + $0x180] sm:$0xff]
      %v751 = vld [vmem:[#allocation17 + $0x188] sm:$0xff]
      %v752 = vld [vmem:[#allocation17 + $0x190] sm:$0xff]
      %v753 = vld [vmem:[#allocation17 + $0x198] sm:$0xff]
      %v754 = vld [vmem:[#allocation17 + $0x1a0] sm:$0xff]
      %v755 = vld [vmem:[#allocation17 + $0x1a8] sm:$0xff]
      %v756 = vld [vmem:[#allocation17 + $0x1b0] sm:$0xff]
      %v757 = vld [vmem:[#allocation17 + $0x1b8] sm:$0xff]
      %v758 = vld [vmem:[#allocation17 + $0x1c0] sm:$0xff]
      %v759 = vld [vmem:[#allocation17 + $0x1c8] sm:$0xff]
      %v760 = vld [vmem:[#allocation17 + $0x1d0] sm:$0xff]
      %v761 = vld [vmem:[#allocation17 + $0x1d8] sm:$0xff]
      %v762 = vld [vmem:[#allocation17 + $0x1e0] sm:$0xff]
      %v763 = vld [vmem:[#allocation17 + $0x1e8] sm:$0xff]
      %v764 = vld [vmem:[#allocation17 + $0x1f0] sm:$0xff]
      %v765 = vld [vmem:[#allocation17 + $0x1f8] sm:$0xff]
      %v766 = vld [vmem:[#allocation18] sm:$0xff]
      %v767 = vld [vmem:[#allocation18 + $0x8] sm:$0xff]
      %v768 = vld [vmem:[#allocation18 + $0x10] sm:$0xff]
      %v769 = vld [vmem:[#allocation18 + $0x18] sm:$0xff]
      %v770 = vld [vmem:[#allocation18 + $0x20] sm:$0xff]
      %v771 = vld [vmem:[#allocation18 + $0x28] sm:$0xff]
      %v772 = vld [vmem:[#allocation18 + $0x30] sm:$0xff]
      %v773 = vld [vmem:[#allocation18 + $0x38] sm:$0xff]
      %v774 = vld [vmem:[#allocation18 + $0x40] sm:$0xff]
      %v775 = vld [vmem:[#allocation18 + $0x48] sm:$0xff]
      %v776 = vld [vmem:[#allocation18 + $0x50] sm:$0xff]
      %v777 = vld [vmem:[#allocation18 + $0x58] sm:$0xff]
      %v778 = vld [vmem:[#allocation18 + $0x60] sm:$0xff]
      %v779 = vld [vmem:[#allocation18 + $0x68] sm:$0xff]
      %v780 = vld [vmem:[#allocation18 + $0x70] sm:$0xff]
      %v781 = vld [vmem:[#allocation18 + $0x78] sm:$0xff]
      %v782 = vld [vmem:[#allocation18 + $0x80] sm:$0xff]
      %v783 = vld [vmem:[#allocation18 + $0x88] sm:$0xff]
      %v784 = vld [vmem:[#allocation18 + $0x90] sm:$0xff]
      %v785 = vld [vmem:[#allocation18 + $0x98] sm:$0xff]
      %v786 = vld [vmem:[#allocation18 + $0xa0] sm:$0xff]
      %v787 = vld [vmem:[#allocation18 + $0xa8] sm:$0xff]
      %v788 = vld [vmem:[#allocation18 + $0xb0] sm:$0xff]
      %v789 = vld [vmem:[#allocation18 + $0xb8] sm:$0xff]
      %v790 = vld [vmem:[#allocation18 + $0xc0] sm:$0xff]
      %v791 = vld [vmem:[#allocation18 + $0xc8] sm:$0xff]
      %v792 = vld [vmem:[#allocation18 + $0xd0] sm:$0xff]
      %v793 = vld [vmem:[#allocation18 + $0xd8] sm:$0xff]
      %v794 = vld [vmem:[#allocation18 + $0xe0] sm:$0xff]
      %v795 = vld [vmem:[#allocation18 + $0xe8] sm:$0xff]
      %v796 = vld [vmem:[#allocation18 + $0xf0] sm:$0xff]
      %v797 = vld [vmem:[#allocation18 + $0xf8] sm:$0xff]
      %v798 = vld [vmem:[#allocation18 + $0x100] sm:$0xff]
      %v799 = vld [vmem:[#allocation18 + $0x108] sm:$0xff]
      %v800 = vld [vmem:[#allocation18 + $0x110] sm:$0xff]
      %v801 = vld [vmem:[#allocation18 + $0x118] sm:$0xff]
      %v802 = vld [vmem:[#allocation18 + $0x120] sm:$0xff]
      %v803 = vld [vmem:[#allocation18 + $0x128] sm:$0xff]
      %v804 = vld [vmem:[#allocation18 + $0x130] sm:$0xff]
      %v805 = vld [vmem:[#allocation18 + $0x138] sm:$0xff]
      %v806 = vld [vmem:[#allocation18 + $0x140] sm:$0xff]
      %v807 = vld [vmem:[#allocation18 + $0x148] sm:$0xff]
      %v808 = vld [vmem:[#allocation18 + $0x150] sm:$0xff]
      %v809 = vld [vmem:[#allocation18 + $0x158] sm:$0xff]
      %v810 = vld [vmem:[#allocation18 + $0x160] sm:$0xff]
      %v811 = vld [vmem:[#allocation18 + $0x168] sm:$0xff]
      %v812 = vld [vmem:[#allocation18 + $0x170] sm:$0xff]
      %v813 = vld [vmem:[#allocation18 + $0x178] sm:$0xff]
      %v814 = vld [vmem:[#allocation18 + $0x180] sm:$0xff]
      %v815 = vld [vmem:[#allocation18 + $0x188] sm:$0xff]
      %v816 = vld [vmem:[#allocation18 + $0x190] sm:$0xff]
      %v817 = vld [vmem:[#allocation18 + $0x198] sm:$0xff]
      %v818 = vld [vmem:[#allocation18 + $0x1a0] sm:$0xff]
      %v819 = vld [vmem:[#allocation18 + $0x1a8] sm:$0xff]
      %v820 = vld [vmem:[#allocation18 + $0x1b0] sm:$0xff]
      %v821 = vld [vmem:[#allocation18 + $0x1b8] sm:$0xff]
      %v822 = vld [vmem:[#allocation18 + $0x1c0] sm:$0xff]
      %v823 = vld [vmem:[#allocation18 + $0x1c8] sm:$0xff]
      %v824 = vld [vmem:[#allocation18 + $0x1d0] sm:$0xff]
      %v825 = vld [vmem:[#allocation18 + $0x1d8] sm:$0xff]
      %v826 = vld [vmem:[#allocation18 + $0x1e0] sm:$0xff]
      %v827 = vld [vmem:[#allocation18 + $0x1e8] sm:$0xff]
      %v828 = vld [vmem:[#allocation18 + $0x1f0] sm:$0xff]
      %v829 = vld [vmem:[#allocation18 + $0x1f8] sm:$0xff]
      %830 = vmatprep.subr.mxu0 %v767
      %831 = vmatpush1.msra.mxu0 %v766
      %832 = vmatprep.subr.mxu0 %v771
      %833 = vmatpush1.msra.mxu0 %v770
      %834 = vmatprep.subr.mxu0 %v775
      %835 = vmatpush1.msra.mxu0 %v774
      %836 = vmatprep.subr.mxu0 %v779
      %837 = vmatpush1.msra.mxu0 %v778
      %838 = vmatprep.subr.mxu0 %v783
      %839 = vmatpush1.msra.mxu0 %v782
      %840 = vmatprep.subr.mxu0 %v787
      %841 = vmatpush1.msra.mxu0 %v786
      %842 = vmatprep.subr.mxu0 %v791
      %843 = vmatpush1.msra.mxu0 %v790
      %844 = vmatprep.subr.mxu0 %v795
      %845 = vmatpush1.msra.mxu0 %v794
      %846 = vmatprep.subr.mxu0 %v799
      %847 = vmatpush1.msra.mxu0 %v798
      %848 = vmatprep.subr.mxu0 %v803
      %849 = vmatpush1.msra.mxu0 %v802
      %850 = vmatprep.subr.mxu0 %v807
      %851 = vmatpush1.msra.mxu0 %v806
      %852 = vmatprep.subr.mxu0 %v811
      %853 = vmatpush1.msra.mxu0 %v810
      %854 = vmatprep.subr.mxu0 %v815
      %855 = vmatpush1.msra.mxu0 %v814
      %856 = vmatprep.subr.mxu0 %v819
      %857 = vmatpush1.msra.mxu0 %v818
      %858 = vmatprep.subr.mxu0 %v823
      %859 = vmatpush1.msra.mxu0 %v822
      %860 = vmatprep.subr.mxu0 %v827
      %861 = vmatpush1.msra.mxu0 %v826
      %862 = vmatprep.subr.mxu0 0.0
      %863 = vmatpush1.msra.mxu0 0.0
      %864 = vmatprep.subr.mxu0 0.0
      %865 = vmatpush1.msra.mxu0 0.0
      %866 = vmatprep.subr.mxu0 0.0
      %867 = vmatpush1.msra.mxu0 0.0
      %868 = vmatprep.subr.mxu0 0.0
      %869 = vmatpush1.msra.mxu0 0.0
      %870 = vmatprep.subr.mxu0 0.0
      %871 = vmatpush1.msra.mxu0 0.0
      %872 = vmatprep.subr.mxu0 0.0
      %873 = vmatpush1.msra.mxu0 0.0
      %874 = vmatprep.subr.mxu0 0.0
      %875 = vmatpush1.msra.mxu0 0.0
      %876 = vmatprep.subr.mxu0 0.0
      %877 = vmatpush1.msra.mxu0 0.0
      %878 = vmatprep.subr.mxu0 0.0
      %879 = vmatpush1.msra.mxu0 0.0
      %880 = vmatprep.subr.mxu0 0.0
      %881 = vmatpush1.msra.mxu0 0.0
      %882 = vmatprep.subr.mxu0 0.0
      %883 = vmatpush1.msra.mxu0 0.0
      %884 = vmatprep.subr.mxu0 0.0
      %885 = vmatpush1.msra.mxu0 0.0
      %886 = vmatprep.subr.mxu0 0.0
      %887 = vmatpush1.msra.mxu0 0.0
      %888 = vmatprep.subr.mxu0 0.0
      %889 = vmatpush1.msra.mxu0 0.0
      %890 = vmatprep.subr.mxu0 0.0
      %891 = vmatpush1.msra.mxu0 0.0
      %892 = vmatprep.subr.mxu0 0.0
      %893 = vmatpush1.msra.mxu0 0.0
      %894 = vmatprep.mubr.f32.mxu0 0.0
      %895 = vmatmul.mubr.f32.gmra.mrb[0].mxu0 %v183
      %v896 = vpop.f32.mrb[0].mxu0
      %v897 = vadd.f32 0.0, %v896
      %v898 = vpop.f32.mrb[0].mxu0
      %v899 = vadd.f32 0.0, %v898
      %900 = vdwg.mxu0
      %901 = vmatprep.subr.mxu0 %v769
      %902 = vmatpush1.msra.mxu0 %v768
      %903 = vmatprep.subr.mxu0 %v773
      %904 = vmatpush1.msra.mxu0 %v772
      %905 = vmatprep.subr.mxu0 %v777
      %906 = vmatpush1.msra.mxu0 %v776
      %907 = vmatprep.subr.mxu0 %v781
      %908 = vmatpush1.msra.mxu0 %v780
      %909 = vmatprep.subr.mxu0 %v785
      %910 = vmatpush1.msra.mxu0 %v784
      %911 = vmatprep.subr.mxu0 %v789
      %912 = vmatpush1.msra.mxu0 %v788
      %913 = vmatprep.subr.mxu0 %v793
      %914 = vmatpush1.msra.mxu0 %v792
      %915 = vmatprep.subr.mxu0 %v797
      %916 = vmatpush1.msra.mxu0 %v796
      %917 = vmatprep.subr.mxu0 %v801
      %918 = vmatpush1.msra.mxu0 %v800
      %919 = vmatprep.subr.mxu0 %v805
      %920 = vmatpush1.msra.mxu0 %v804
      %921 = vmatprep.subr.mxu0 %v809
      %922 = vmatpush1.msra.mxu0 %v808
      %923 = vmatprep.subr.mxu0 %v813
      %924 = vmatpush1.msra.mxu0 %v812
      %925 = vmatprep.subr.mxu0 %v817
      %926 = vmatpush1.msra.mxu0 %v816
      %927 = vmatprep.subr.mxu0 %v821
      %928 = vmatpush1.msra.mxu0 %v820
      %929 = vmatprep.subr.mxu0 %v825
      %930 = vmatpush1.msra.mxu0 %v824
      %931 = vmatprep.subr.mxu0 %v829
      %932 = vmatpush1.msra.mxu0 %v828
      %933 = vmatprep.subr.mxu0 0.0
      %934 = vmatpush1.msra.mxu0 0.0
      %935 = vmatprep.subr.mxu0 0.0
      %936 = vmatpush1.msra.mxu0 0.0
      %937 = vmatprep.subr.mxu0 0.0
      %938 = vmatpush1.msra.mxu0 0.0
      %939 = vmatprep.subr.mxu0 0.0
      %940 = vmatpush1.msra.mxu0 0.0
      %941 = vmatprep.subr.mxu0 0.0
      %942 = vmatpush1.msra.mxu0 0.0
      %943 = vmatprep.subr.mxu0 0.0
      %944 = vmatpush1.msra.mxu0 0.0
      %945 = vmatprep.subr.mxu0 0.0
      %946 = vmatpush1.msra.mxu0 0.0
      %947 = vmatprep.subr.mxu0 0.0
      %948 = vmatpush1.msra.mxu0 0.0
      %949 = vmatprep.subr.mxu0 0.0
      %950 = vmatpush1.msra.mxu0 0.0
      %951 = vmatprep.subr.mxu0 0.0
      %952 = vmatpush1.msra.mxu0 0.0
      %953 = vmatprep.subr.mxu0 0.0
      %954 = vmatpush1.msra.mxu0 0.0
      %955 = vmatprep.subr.mxu0 0.0
      %956 = vmatpush1.msra.mxu0 0.0
      %957 = vmatprep.subr.mxu0 0.0
      %958 = vmatpush1.msra.mxu0 0.0
      %959 = vmatprep.subr.mxu0 0.0
      %960 = vmatpush1.msra.mxu0 0.0
      %961 = vmatprep.subr.mxu0 0.0
      %962 = vmatpush1.msra.mxu0 0.0
      %963 = vmatprep.subr.mxu0 0.0
      %964 = vmatpush1.msra.mxu0 0.0
      %965 = vmatprep.mubr.f32.mxu0 0.0
      %966 = vmatmul.mubr.f32.gmra.mrb[0].mxu0 %v183
      %v967 = vpop.f32.mrb[0].mxu0
      %v968 = vadd.f32 0.0, %v967
      %v969 = vpop.f32.mrb[0].mxu0
      %v970 = vadd.f32 0.0, %v969
      %971 = vdwg.mxu0
      %972 = vmatprep.subr.mxu0 %v703
      %973 = vmatpush1.msra.mxu0 %v702
      %974 = vmatprep.subr.mxu0 %v707
      %975 = vmatpush1.msra.mxu0 %v706
      %976 = vmatprep.subr.mxu0 %v711
      %977 = vmatpush1.msra.mxu0 %v710
      %978 = vmatprep.subr.mxu0 %v715
      %979 = vmatpush1.msra.mxu0 %v714
      %980 = vmatprep.subr.mxu0 %v719
      %981 = vmatpush1.msra.mxu0 %v718
      %982 = vmatprep.subr.mxu0 %v723
      %983 = vmatpush1.msra.mxu0 %v722
      %984 = vmatprep.subr.mxu0 %v727
      %985 = vmatpush1.msra.mxu0 %v726
      %986 = vmatprep.subr.mxu0 %v731
      %987 = vmatpush1.msra.mxu0 %v730
      %988 = vmatprep.subr.mxu0 %v735
      %989 = vmatpush1.msra.mxu0 %v734
      %990 = vmatprep.subr.mxu0 %v739
      %991 = vmatpush1.msra.mxu0 %v738
      %992 = vmatprep.subr.mxu0 %v743
      %993 = vmatpush1.msra.mxu0 %v742
      %994 = vmatprep.subr.mxu0 %v747
      %995 = vmatpush1.msra.mxu0 %v746
      %996 = vmatprep.subr.mxu0 %v751
      %997 = vmatpush1.msra.mxu0 %v750
      %998 = vmatprep.subr.mxu0 %v755
      %999 = vmatpush1.msra.mxu0 %v754
      %1000 = vmatprep.subr.mxu0 %v759
      %1001 = vmatpush1.msra.mxu0 %v758
      %1002 = vmatprep.subr.mxu0 %v763
      %1003 = vmatpush1.msra.mxu0 %v762
      %1004 = vmatprep.subr.mxu0 0.0
      %1005 = vmatpush1.msra.mxu0 0.0
      %1006 = vmatprep.subr.mxu0 0.0
      %1007 = vmatpush1.msra.mxu0 0.0
      %1008 = vmatprep.subr.mxu0 0.0
      %1009 = vmatpush1.msra.mxu0 0.0
      %1010 = vmatprep.subr.mxu0 0.0
      %1011 = vmatpush1.msra.mxu0 0.0
      %1012 = vmatprep.subr.mxu0 0.0
      %1013 = vmatpush1.msra.mxu0 0.0
      %1014 = vmatprep.subr.mxu0 0.0
      %1015 = vmatpush1.msra.mxu0 0.0
      %1016 = vmatprep.subr.mxu0 0.0
      %1017 = vmatpush1.msra.mxu0 0.0
      %1018 = vmatprep.subr.mxu0 0.0
      %1019 = vmatpush1.msra.mxu0 0.0
      %1020 = vmatprep.subr.mxu0 0.0
      %1021 = vmatpush1.msra.mxu0 0.0
      %1022 = vmatprep.subr.mxu0 0.0
      %1023 = vmatpush1.msra.mxu0 0.0
      %1024 = vmatprep.subr.mxu0 0.0
      %1025 = vmatpush1.msra.mxu0 0.0
      %1026 = vmatprep.subr.mxu0 0.0
      %1027 = vmatpush1.msra.mxu0 0.0
      %1028 = vmatprep.subr.mxu0 0.0
      %1029 = vmatpush1.msra.mxu0 0.0
      %1030 = vmatprep.subr.mxu0 0.0
      %1031 = vmatpush1.msra.mxu0 0.0
      %1032 = vmatprep.subr.mxu0 0.0
      %1033 = vmatpush1.msra.mxu0 0.0
      %1034 = vmatprep.subr.mxu0 0.0
      %1035 = vmatpush1.msra.mxu0 0.0
      %1036 = vmatprep.mubr.f32.mxu0 0.0
      %1037 = vmatmul.mubr.f32.gmra.mrb[0].mxu0 %v701
      %v1038 = vpop.f32.mrb[0].mxu0
      %v1039 = vadd.f32 %v897, %v1038
      %v1040 = vpop.f32.mrb[0].mxu0
      %v1041 = vadd.f32 %v899, %v1040
      %1042 = vdwg.mxu0
      %1043 = vmatprep.subr.mxu0 %v705
      %1044 = vmatpush1.msra.mxu0 %v704
      %1045 = vmatprep.subr.mxu0 %v709
      %1046 = vmatpush1.msra.mxu0 %v708
      %1047 = vmatprep.subr.mxu0 %v713
      %1048 = vmatpush1.msra.mxu0 %v712
      %1049 = vmatprep.subr.mxu0 %v717
      %1050 = vmatpush1.msra.mxu0 %v716
      %1051 = vmatprep.subr.mxu0 %v721
      %1052 = vmatpush1.msra.mxu0 %v720
      %1053 = vmatprep.subr.mxu0 %v725
      %1054 = vmatpush1.msra.mxu0 %v724
      %1055 = vmatprep.subr.mxu0 %v729
      %1056 = vmatpush1.msra.mxu0 %v728
      %1057 = vmatprep.subr.mxu0 %v733
      %1058 = vmatpush1.msra.mxu0 %v732
      %1059 = vmatprep.subr.mxu0 %v737
      %1060 = vmatpush1.msra.mxu0 %v736
      %1061 = vmatprep.subr.mxu0 %v741
      %1062 = vmatpush1.msra.mxu0 %v740
      %1063 = vmatprep.subr.mxu0 %v745
      %1064 = vmatpush1.msra.mxu0 %v744
      %1065 = vmatprep.subr.mxu0 %v749
      %1066 = vmatpush1.msra.mxu0 %v748
      %1067 = vmatprep.subr.mxu0 %v753
      %1068 = vmatpush1.msra.mxu0 %v752
      %1069 = vmatprep.subr.mxu0 %v757
      %1070 = vmatpush1.msra.mxu0 %v756
      %1071 = vmatprep.subr.mxu0 %v761
      %1072 = vmatpush1.msra.mxu0 %v760
      %1073 = vmatprep.subr.mxu0 %v765
      %1074 = vmatpush1.msra.mxu0 %v764
      %1075 = vmatprep.subr.mxu0 0.0
      %1076 = vmatpush1.msra.mxu0 0.0
      %1077 = vmatprep.subr.mxu0 0.0
      %1078 = vmatpush1.msra.mxu0 0.0
      %1079 = vmatprep.subr.mxu0 0.0
      %1080 = vmatpush1.msra.mxu0 0.0
      %1081 = vmatprep.subr.mxu0 0.0
      %1082 = vmatpush1.msra.mxu0 0.0
      %1083 = vmatprep.subr.mxu0 0.0
      %1084 = vmatpush1.msra.mxu0 0.0
      %1085 = vmatprep.subr.mxu0 0.0
      %1086 = vmatpush1.msra.mxu0 0.0
      %1087 = vmatprep.subr.mxu0 0.0
      %1088 = vmatpush1.msra.mxu0 0.0
      %1089 = vmatprep.subr.mxu0 0.0
      %1090 = vmatpush1.msra.mxu0 0.0
      %1091 = vmatprep.subr.mxu0 0.0
      %1092 = vmatpush1.msra.mxu0 0.0
      %1093 = vmatprep.subr.mxu0 0.0
      %1094 = vmatpush1.msra.mxu0 0.0
      %1095 = vmatprep.subr.mxu0 0.0
      %1096 = vmatpush1.msra.mxu0 0.0
      %1097 = vmatprep.subr.mxu0 0.0
      %1098 = vmatpush1.msra.mxu0 0.0
      %1099 = vmatprep.subr.mxu0 0.0
      %1100 = vmatpush1.msra.mxu0 0.0
      %1101 = vmatprep.subr.mxu0 0.0
      %1102 = vmatpush1.msra.mxu0 0.0
      %1103 = vmatprep.subr.mxu0 0.0
      %1104 = vmatpush1.msra.mxu0 0.0
      %1105 = vmatprep.subr.mxu0 0.0
      %1106 = vmatpush1.msra.mxu0 0.0
      %1107 = vmatprep.mubr.f32.mxu0 0.0
      %1108 = vmatmul.mubr.f32.gmra.mrb[0].mxu0 %v701
      %v1109 = vpop.f32.mrb[0].mxu0
      %v1110 = vadd.f32 %v968, %v1109
      %v1111 = vpop.f32.mrb[0].mxu0
      %v1112 = vadd.f32 %v970, %v1111
      %1113 = vdwg.mxu0
      %v1114 = vld [vmem:[%s12] sm:$0xf]
      %v1116 = vlaneseq
      %v1117 = vshrl.u32 %v1116, 7
      %v1118 = vsub.s32 0, %v1117
      %v1119 = vrot.slane %v1114, %v1118
      %v1120 = vlaneseq
      %v1121 = vshrl.u32 %v1120, 7
      %v1122 = vsub.s32 1, %v1121
      %v1123 = vrot.slane %v1114, %v1122
      %v1124 = vlaneseq
      %v1125 = vshrl.u32 %v1124, 7
      %v1126 = vsub.s32 2, %v1125
      %v1127 = vrot.slane %v1114, %v1126
      %v1128 = vlaneseq
      %v1129 = vshrl.u32 %v1128, 7
      %v1130 = vsub.s32 3, %v1129
      %v1131 = vrot.slane %v1114, %v1130
      %v1136 = vadd.f32 %v1039, %v1119
      %v1137 = vadd.f32 %v1041, %v1123
      %v1138 = vadd.f32 %v1110, %v1127
      %v1139 = vadd.f32 %v1112, %v1131
      %v1140 = vxor.u32 %v1136, 2147483648
      %v1141 = vmul.f32 %v1140, 1.442695
      %v1142 = vpow.pop %v1141
      %v1143 = vadd.f32 %v1142, 1.0
      %v1144 = vrcp.pop %v1143
      %v1145 = vmul.f32 1.0, %v1144
      %v1146 = vxor.u32 %v1137, 2147483648
      %v1147 = vmul.f32 %v1146, 1.442695
      %v1148 = vpow.pop %v1147
      %v1149 = vadd.f32 %v1148, 1.0
      %v1150 = vrcp.pop %v1149
      %v1151 = vmul.f32 1.0, %v1150
      %v1152 = vtanh.pop %v1138
      %v1153 = vxor.u32 %v1139, 2147483648
      %v1154 = vmul.f32 %v1153, 1.442695
      %v1155 = vpow.pop %v1154
      %v1156 = vadd.f32 %v1155, 1.0
      %v1157 = vrcp.pop %v1156
      %v1158 = vmul.f32 1.0, %v1157
      %v1159 = vmul.f32 %v1151, %v185
      %v1160 = vmul.f32 %v1145, %v1152
      %v1161 = vadd.f32 %v1159, %v1160
      %v1162 = vtanh.pop %v1161
      %v1163 = vmul.f32 %v1158, %v1162
      %1164 = vst [vmem:[#allocation22] sm:$0xff] %v1163
      %1165 = vst [vmem:[#allocation24] sm:$0xff] %v1161
      %s1166 = scalar_lea.vmem [#allocation17], 512
      %v1167 = vld [vmem:[%s1166] sm:$0xff]
      %v1168 = vld [vmem:[%s1166 + $0x8] sm:$0xff]
      %v1169 = vld [vmem:[%s1166 + $0x10] sm:$0xff]
      %v1170 = vld [vmem:[%s1166 + $0x18] sm:$0xff]
      %v1171 = vld [vmem:[%s1166 + $0x20] sm:$0xff]
      %v1172 = vld [vmem:[%s1166 + $0x28] sm:$0xff]
      %v1173 = vld [vmem:[%s1166 + $0x30] sm:$0xff]
      %v1174 = vld [vmem:[%s1166 + $0x38] sm:$0xff]
      %v1175 = vld [vmem:[%s1166 + $0x40] sm:$0xff]
      %v1176 = vld [vmem:[%s1166 + $0x48] sm:$0xff]
      %v1177 = vld [vmem:[%s1166 + $0x50] sm:$0xff]
      %v1178 = vld [vmem:[%s1166 + $0x58] sm:$0xff]
      %v1179 = vld [vmem:[%s1166 + $0x60] sm:$0xff]
      %v1180 = vld [vmem:[%s1166 + $0x68] sm:$0xff]
      %v1181 = vld [vmem:[%s1166 + $0x70] sm:$0xff]
      %v1182 = vld [vmem:[%s1166 + $0x78] sm:$0xff]
      %v1183 = vld [vmem:[%s1166 + $0x80] sm:$0xff]
      %v1184 = vld [vmem:[%s1166 + $0x88] sm:$0xff]
      %v1185 = vld [vmem:[%s1166 + $0x90] sm:$0xff]
      %v1186 = vld [vmem:[%s1166 + $0x98] sm:$0xff]
      %v1187 = vld [vmem:[%s1166 + $0xa0] sm:$0xff]
      %v1188 = vld [vmem:[%s1166 + $0xa8] sm:$0xff]
      %v1189 = vld [vmem:[%s1166 + $0xb0] sm:$0xff]
      %v1190 = vld [vmem:[%s1166 + $0xb8] sm:$0xff]
      %v1191 = vld [vmem:[%s1166 + $0xc0] sm:$0xff]
      %v1192 = vld [vmem:[%s1166 + $0xc8] sm:$0xff]
      %v1193 = vld [vmem:[%s1166 + $0xd0] sm:$0xff]
      %v1194 = vld [vmem:[%s1166 + $0xd8] sm:$0xff]
      %v1195 = vld [vmem:[%s1166 + $0xe0] sm:$0xff]
      %v1196 = vld [vmem:[%s1166 + $0xe8] sm:$0xff]
      %v1197 = vld [vmem:[%s1166 + $0xf0] sm:$0xff]
      %v1198 = vld [vmem:[%s1166 + $0xf8] sm:$0xff]
      %v1199 = vld [vmem:[%s1166 + $0x100] sm:$0xff]
      %v1200 = vld [vmem:[%s1166 + $0x108] sm:$0xff]
      %v1201 = vld [vmem:[%s1166 + $0x110] sm:$0xff]
      %v1202 = vld [vmem:[%s1166 + $0x118] sm:$0xff]
      %v1203 = vld [vmem:[%s1166 + $0x120] sm:$0xff]
      %v1204 = vld [vmem:[%s1166 + $0x128] sm:$0xff]
      %v1205 = vld [vmem:[%s1166 + $0x130] sm:$0xff]
      %v1206 = vld [vmem:[%s1166 + $0x138] sm:$0xff]
      %v1207 = vld [vmem:[%s1166 + $0x140] sm:$0xff]
      %v1208 = vld [vmem:[%s1166 + $0x148] sm:$0xff]
      %v1209 = vld [vmem:[%s1166 + $0x150] sm:$0xff]
      %v1210 = vld [vmem:[%s1166 + $0x158] sm:$0xff]
      %v1211 = vld [vmem:[%s1166 + $0x160] sm:$0xff]
      %v1212 = vld [vmem:[%s1166 + $0x168] sm:$0xff]
      %v1213 = vld [vmem:[%s1166 + $0x170] sm:$0xff]
      %v1214 = vld [vmem:[%s1166 + $0x178] sm:$0xff]
      %v1215 = vld [vmem:[%s1166 + $0x180] sm:$0xff]
      %v1216 = vld [vmem:[%s1166 + $0x188] sm:$0xff]
      %v1217 = vld [vmem:[%s1166 + $0x190] sm:$0xff]
      %v1218 = vld [vmem:[%s1166 + $0x198] sm:$0xff]
      %v1219 = vld [vmem:[%s1166 + $0x1a0] sm:$0xff]
      %v1220 = vld [vmem:[%s1166 + $0x1a8] sm:$0xff]
      %v1221 = vld [vmem:[%s1166 + $0x1b0] sm:$0xff]
      %v1222 = vld [vmem:[%s1166 + $0x1b8] sm:$0xff]
      %v1223 = vld [vmem:[%s1166 + $0x1c0] sm:$0xff]
      %v1224 = vld [vmem:[%s1166 + $0x1c8] sm:$0xff]
      %v1225 = vld [vmem:[%s1166 + $0x1d0] sm:$0xff]
      %v1226 = vld [vmem:[%s1166 + $0x1d8] sm:$0xff]
      %v1227 = vld [vmem:[%s1166 + $0x1e0] sm:$0xff]
      %v1228 = vld [vmem:[%s1166 + $0x1e8] sm:$0xff]
      %v1229 = vld [vmem:[%s1166 + $0x1f0] sm:$0xff]
      %v1230 = vld [vmem:[%s1166 + $0x1f8] sm:$0xff]
      %s1231 = scalar_lea.vmem [#allocation18], 512
      %v1232 = vld [vmem:[%s1231] sm:$0xff]
      %v1233 = vld [vmem:[%s1231 + $0x8] sm:$0xff]
      %v1234 = vld [vmem:[%s1231 + $0x10] sm:$0xff]
      %v1235 = vld [vmem:[%s1231 + $0x18] sm:$0xff]
      %v1236 = vld [vmem:[%s1231 + $0x20] sm:$0xff]
      %v1237 = vld [vmem:[%s1231 + $0x28] sm:$0xff]
      %v1238 = vld [vmem:[%s1231 + $0x30] sm:$0xff]
      %v1239 = vld [vmem:[%s1231 + $0x38] sm:$0xff]
      %v1240 = vld [vmem:[%s1231 + $0x40] sm:$0xff]
      %v1241 = vld [vmem:[%s1231 + $0x48] sm:$0xff]
      %v1242 = vld [vmem:[%s1231 + $0x50] sm:$0xff]
      %v1243 = vld [vmem:[%s1231 + $0x58] sm:$0xff]
      %v1244 = vld [vmem:[%s1231 + $0x60] sm:$0xff]
      %v1245 = vld [vmem:[%s1231 + $0x68] sm:$0xff]
      %v1246 = vld [vmem:[%s1231 + $0x70] sm:$0xff]
      %v1247 = vld [vmem:[%s1231 + $0x78] sm:$0xff]
      %v1248 = vld [vmem:[%s1231 + $0x80] sm:$0xff]
      %v1249 = vld [vmem:[%s1231 + $0x88] sm:$0xff]
      %v1250 = vld [vmem:[%s1231 + $0x90] sm:$0xff]
      %v1251 = vld [vmem:[%s1231 + $0x98] sm:$0xff]
      %v1252 = vld [vmem:[%s1231 + $0xa0] sm:$0xff]
      %v1253 = vld [vmem:[%s1231 + $0xa8] sm:$0xff]
      %v1254 = vld [vmem:[%s1231 + $0xb0] sm:$0xff]
      %v1255 = vld [vmem:[%s1231 + $0xb8] sm:$0xff]
      %v1256 = vld [vmem:[%s1231 + $0xc0] sm:$0xff]
      %v1257 = vld [vmem:[%s1231 + $0xc8] sm:$0xff]
      %v1258 = vld [vmem:[%s1231 + $0xd0] sm:$0xff]
      %v1259 = vld [vmem:[%s1231 + $0xd8] sm:$0xff]
      %v1260 = vld [vmem:[%s1231 + $0xe0] sm:$0xff]
      %v1261 = vld [vmem:[%s1231 + $0xe8] sm:$0xff]
      %v1262 = vld [vmem:[%s1231 + $0xf0] sm:$0xff]
      %v1263 = vld [vmem:[%s1231 + $0xf8] sm:$0xff]
      %v1264 = vld [vmem:[%s1231 + $0x100] sm:$0xff]
      %v1265 = vld [vmem:[%s1231 + $0x108] sm:$0xff]
      %v1266 = vld [vmem:[%s1231 + $0x110] sm:$0xff]
      %v1267 = vld [vmem:[%s1231 + $0x118] sm:$0xff]
      %v1268 = vld [vmem:[%s1231 + $0x120] sm:$0xff]
      %v1269 = vld [vmem:[%s1231 + $0x128] sm:$0xff]
      %v1270 = vld [vmem:[%s1231 + $0x130] sm:$0xff]
      %v1271 = vld [vmem:[%s1231 + $0x138] sm:$0xff]
      %v1272 = vld [vmem:[%s1231 + $0x140] sm:$0xff]
      %v1273 = vld [vmem:[%s1231 + $0x148] sm:$0xff]
      %v1274 = vld [vmem:[%s1231 + $0x150] sm:$0xff]
      %v1275 = vld [vmem:[%s1231 + $0x158] sm:$0xff]
      %v1276 = vld [vmem:[%s1231 + $0x160] sm:$0xff]
      %v1277 = vld [vmem:[%s1231 + $0x168] sm:$0xff]
      %v1278 = vld [vmem:[%s1231 + $0x170] sm:$0xff]
      %v1279 = vld [vmem:[%s1231 + $0x178] sm:$0xff]
      %v1280 = vld [vmem:[%s1231 + $0x180] sm:$0xff]
      %v1281 = vld [vmem:[%s1231 + $0x188] sm:$0xff]
      %v1282 = vld [vmem:[%s1231 + $0x190] sm:$0xff]
      %v1283 = vld [vmem:[%s1231 + $0x198] sm:$0xff]
      %v1284 = vld [vmem:[%s1231 + $0x1a0] sm:$0xff]
      %v1285 = vld [vmem:[%s1231 + $0x1a8] sm:$0xff]
      %v1286 = vld [vmem:[%s1231 + $0x1b0] sm:$0xff]
      %v1287 = vld [vmem:[%s1231 + $0x1b8] sm:$0xff]
      %v1288 = vld [vmem:[%s1231 + $0x1c0] sm:$0xff]
      %v1289 = vld [vmem:[%s1231 + $0x1c8] sm:$0xff]
      %v1290 = vld [vmem:[%s1231 + $0x1d0] sm:$0xff]
      %v1291 = vld [vmem:[%s1231 + $0x1d8] sm:$0xff]
      %v1292 = vld [vmem:[%s1231 + $0x1e0] sm:$0xff]
      %v1293 = vld [vmem:[%s1231 + $0x1e8] sm:$0xff]
      %v1294 = vld [vmem:[%s1231 + $0x1f0] sm:$0xff]
      %v1295 = vld [vmem:[%s1231 + $0x1f8] sm:$0xff]
      %1296 = vmatprep.subr.mxu0 %v1233
      %1297 = vmatpush1.msra.mxu0 %v1232
      %1298 = vmatprep.subr.mxu0 %v1237
      %1299 = vmatpush1.msra.mxu0 %v1236
      %1300 = vmatprep.subr.mxu0 %v1241
      %1301 = vmatpush1.msra.mxu0 %v1240
      %1302 = vmatprep.subr.mxu0 %v1245
      %1303 = vmatpush1.msra.mxu0 %v1244
      %1304 = vmatprep.subr.mxu0 %v1249
      %1305 = vmatpush1.msra.mxu0 %v1248
      %1306 = vmatprep.subr.mxu0 %v1253
      %1307 = vmatpush1.msra.mxu0 %v1252
      %1308 = vmatprep.subr.mxu0 %v1257
      %1309 = vmatpush1.msra.mxu0 %v1256
      %1310 = vmatprep.subr.mxu0 %v1261
      %1311 = vmatpush1.msra.mxu0 %v1260
      %1312 = vmatprep.subr.mxu0 %v1265
      %1313 = vmatpush1.msra.mxu0 %v1264
      %1314 = vmatprep.subr.mxu0 %v1269
      %1315 = vmatpush1.msra.mxu0 %v1268
      %1316 = vmatprep.subr.mxu0 %v1273
      %1317 = vmatpush1.msra.mxu0 %v1272
      %1318 = vmatprep.subr.mxu0 %v1277
      %1319 = vmatpush1.msra.mxu0 %v1276
      %1320 = vmatprep.subr.mxu0 %v1281
      %1321 = vmatpush1.msra.mxu0 %v1280
      %1322 = vmatprep.subr.mxu0 %v1285
      %1323 = vmatpush1.msra.mxu0 %v1284
      %1324 = vmatprep.subr.mxu0 %v1289
      %1325 = vmatpush1.msra.mxu0 %v1288
      %1326 = vmatprep.subr.mxu0 %v1293
      %1327 = vmatpush1.msra.mxu0 %v1292
      %1328 = vmatprep.subr.mxu0 0.0
      %1329 = vmatpush1.msra.mxu0 0.0
      %1330 = vmatprep.subr.mxu0 0.0
      %1331 = vmatpush1.msra.mxu0 0.0
      %1332 = vmatprep.subr.mxu0 0.0
      %1333 = vmatpush1.msra.mxu0 0.0
      %1334 = vmatprep.subr.mxu0 0.0
      %1335 = vmatpush1.msra.mxu0 0.0
      %1336 = vmatprep.subr.mxu0 0.0
      %1337 = vmatpush1.msra.mxu0 0.0
      %1338 = vmatprep.subr.mxu0 0.0
      %1339 = vmatpush1.msra.mxu0 0.0
      %1340 = vmatprep.subr.mxu0 0.0
      %1341 = vmatpush1.msra.mxu0 0.0
      %1342 = vmatprep.subr.mxu0 0.0
      %1343 = vmatpush1.msra.mxu0 0.0
      %1344 = vmatprep.subr.mxu0 0.0
      %1345 = vmatpush1.msra.mxu0 0.0
      %1346 = vmatprep.subr.mxu0 0.0
      %1347 = vmatpush1.msra.mxu0 0.0
      %1348 = vmatprep.subr.mxu0 0.0
      %1349 = vmatpush1.msra.mxu0 0.0
      %1350 = vmatprep.subr.mxu0 0.0
      %1351 = vmatpush1.msra.mxu0 0.0
      %1352 = vmatprep.subr.mxu0 0.0
      %1353 = vmatpush1.msra.mxu0 0.0
      %1354 = vmatprep.subr.mxu0 0.0
      %1355 = vmatpush1.msra.mxu0 0.0
      %1356 = vmatprep.subr.mxu0 0.0
      %1357 = vmatpush1.msra.mxu0 0.0
      %1358 = vmatprep.subr.mxu0 0.0
      %1359 = vmatpush1.msra.mxu0 0.0
      %1360 = vmatprep.mubr.f32.mxu0 0.0
      %1361 = vmatmul.mubr.f32.gmra.mrb[0].mxu0 %v184
      %v1362 = vpop.f32.mrb[0].mxu0
      %v1363 = vadd.f32 0.0, %v1362
      %v1364 = vpop.f32.mrb[0].mxu0
      %v1365 = vadd.f32 0.0, %v1364
      %1366 = vdwg.mxu0
      %1367 = vmatprep.subr.mxu0 %v1235
      %1368 = vmatpush1.msra.mxu0 %v1234
      %1369 = vmatprep.subr.mxu0 %v1239
      %1370 = vmatpush1.msra.mxu0 %v1238
      %1371 = vmatprep.subr.mxu0 %v1243
      %1372 = vmatpush1.msra.mxu0 %v1242
      %1373 = vmatprep.subr.mxu0 %v1247
      %1374 = vmatpush1.msra.mxu0 %v1246
      %1375 = vmatprep.subr.mxu0 %v1251
      %1376 = vmatpush1.msra.mxu0 %v1250
      %1377 = vmatprep.subr.mxu0 %v1255
      %1378 = vmatpush1.msra.mxu0 %v1254
      %1379 = vmatprep.subr.mxu0 %v1259
      %1380 = vmatpush1.msra.mxu0 %v1258
      %1381 = vmatprep.subr.mxu0 %v1263
      %1382 = vmatpush1.msra.mxu0 %v1262
      %1383 = vmatprep.subr.mxu0 %v1267
      %1384 = vmatpush1.msra.mxu0 %v1266
      %1385 = vmatprep.subr.mxu0 %v1271
      %1386 = vmatpush1.msra.mxu0 %v1270
      %1387 = vmatprep.subr.mxu0 %v1275
      %1388 = vmatpush1.msra.mxu0 %v1274
      %1389 = vmatprep.subr.mxu0 %v1279
      %1390 = vmatpush1.msra.mxu0 %v1278
      %1391 = vmatprep.subr.mxu0 %v1283
      %1392 = vmatpush1.msra.mxu0 %v1282
      %1393 = vmatprep.subr.mxu0 %v1287
      %1394 = vmatpush1.msra.mxu0 %v1286
      %1395 = vmatprep.subr.mxu0 %v1291
      %1396 = vmatpush1.msra.mxu0 %v1290
      %1397 = vmatprep.subr.mxu0 %v1295
      %1398 = vmatpush1.msra.mxu0 %v1294
      %1399 = vmatprep.subr.mxu0 0.0
      %1400 = vmatpush1.msra.mxu0 0.0
      %1401 = vmatprep.subr.mxu0 0.0
      %1402 = vmatpush1.msra.mxu0 0.0
      %1403 = vmatprep.subr.mxu0 0.0
      %1404 = vmatpush1.msra.mxu0 0.0
      %1405 = vmatprep.subr.mxu0 0.0
      %1406 = vmatpush1.msra.mxu0 0.0
      %1407 = vmatprep.subr.mxu0 0.0
      %1408 = vmatpush1.msra.mxu0 0.0
      %1409 = vmatprep.subr.mxu0 0.0
      %1410 = vmatpush1.msra.mxu0 0.0
      %1411 = vmatprep.subr.mxu0 0.0
      %1412 = vmatpush1.msra.mxu0 0.0
      %1413 = vmatprep.subr.mxu0 0.0
      %1414 = vmatpush1.msra.mxu0 0.0
      %1415 = vmatprep.subr.mxu0 0.0
      %1416 = vmatpush1.msra.mxu0 0.0
      %1417 = vmatprep.subr.mxu0 0.0
      %1418 = vmatpush1.msra.mxu0 0.0
      %1419 = vmatprep.subr.mxu0 0.0
      %1420 = vmatpush1.msra.mxu0 0.0
      %1421 = vmatprep.subr.mxu0 0.0
      %1422 = vmatpush1.msra.mxu0 0.0
      %1423 = vmatprep.subr.mxu0 0.0
      %1424 = vmatpush1.msra.mxu0 0.0
      %1425 = vmatprep.subr.mxu0 0.0
      %1426 = vmatpush1.msra.mxu0 0.0
      %1427 = vmatprep.subr.mxu0 0.0
      %1428 = vmatpush1.msra.mxu0 0.0
      %1429 = vmatprep.subr.mxu0 0.0
      %1430 = vmatpush1.msra.mxu0 0.0
      %1431 = vmatprep.mubr.f32.mxu0 0.0
      %1432 = vmatmul.mubr.f32.gmra.mrb[0].mxu0 %v184
      %v1433 = vpop.f32.mrb[0].mxu0
      %v1434 = vadd.f32 0.0, %v1433
      %v1435 = vpop.f32.mrb[0].mxu0
      %v1436 = vadd.f32 0.0, %v1435
      %1437 = vdwg.mxu0
      %1438 = vmatprep.subr.mxu0 %v1168
      %1439 = vmatpush1.msra.mxu0 %v1167
      %1440 = vmatprep.subr.mxu0 %v1172
      %1441 = vmatpush1.msra.mxu0 %v1171
      %1442 = vmatprep.subr.mxu0 %v1176
      %1443 = vmatpush1.msra.mxu0 %v1175
      %1444 = vmatprep.subr.mxu0 %v1180
      %1445 = vmatpush1.msra.mxu0 %v1179
      %1446 = vmatprep.subr.mxu0 %v1184
      %1447 = vmatpush1.msra.mxu0 %v1183
      %1448 = vmatprep.subr.mxu0 %v1188
      %1449 = vmatpush1.msra.mxu0 %v1187
      %1450 = vmatprep.subr.mxu0 %v1192
      %1451 = vmatpush1.msra.mxu0 %v1191
      %1452 = vmatprep.subr.mxu0 %v1196
      %1453 = vmatpush1.msra.mxu0 %v1195
      %1454 = vmatprep.subr.mxu0 %v1200
      %1455 = vmatpush1.msra.mxu0 %v1199
      %1456 = vmatprep.subr.mxu0 %v1204
      %1457 = vmatpush1.msra.mxu0 %v1203
      %1458 = vmatprep.subr.mxu0 %v1208
      %1459 = vmatpush1.msra.mxu0 %v1207
      %1460 = vmatprep.subr.mxu0 %v1212
      %1461 = vmatpush1.msra.mxu0 %v1211
      %1462 = vmatprep.subr.mxu0 %v1216
      %1463 = vmatpush1.msra.mxu0 %v1215
      %1464 = vmatprep.subr.mxu0 %v1220
      %1465 = vmatpush1.msra.mxu0 %v1219
      %1466 = vmatprep.subr.mxu0 %v1224
      %1467 = vmatpush1.msra.mxu0 %v1223
      %1468 = vmatprep.subr.mxu0 %v1228
      %1469 = vmatpush1.msra.mxu0 %v1227
      %1470 = vmatprep.subr.mxu0 0.0
      %1471 = vmatpush1.msra.mxu0 0.0
      %1472 = vmatprep.subr.mxu0 0.0
      %1473 = vmatpush1.msra.mxu0 0.0
      %1474 = vmatprep.subr.mxu0 0.0
      %1475 = vmatpush1.msra.mxu0 0.0
      %1476 = vmatprep.subr.mxu0 0.0
      %1477 = vmatpush1.msra.mxu0 0.0
      %1478 = vmatprep.subr.mxu0 0.0
      %1479 = vmatpush1.msra.mxu0 0.0
      %1480 = vmatprep.subr.mxu0 0.0
      %1481 = vmatpush1.msra.mxu0 0.0
      %1482 = vmatprep.subr.mxu0 0.0
      %1483 = vmatpush1.msra.mxu0 0.0
      %1484 = vmatprep.subr.mxu0 0.0
      %1485 = vmatpush1.msra.mxu0 0.0
      %1486 = vmatprep.subr.mxu0 0.0
      %1487 = vmatpush1.msra.mxu0 0.0
      %1488 = vmatprep.subr.mxu0 0.0
      %1489 = vmatpush1.msra.mxu0 0.0
      %1490 = vmatprep.subr.mxu0 0.0
      %1491 = vmatpush1.msra.mxu0 0.0
      %1492 = vmatprep.subr.mxu0 0.0
      %1493 = vmatpush1.msra.mxu0 0.0
      %1494 = vmatprep.subr.mxu0 0.0
      %1495 = vmatpush1.msra.mxu0 0.0
      %1496 = vmatprep.subr.mxu0 0.0
      %1497 = vmatpush1.msra.mxu0 0.0
      %1498 = vmatprep.subr.mxu0 0.0
      %1499 = vmatpush1.msra.mxu0 0.0
      %1500 = vmatprep.subr.mxu0 0.0
      %1501 = vmatpush1.msra.mxu0 0.0
      %1502 = vmatprep.mubr.f32.mxu0 0.0
      %1503 = vmatmul.mubr.f32.gmra.mrb[0].mxu0 %v1163
      %v1504 = vpop.f32.mrb[0].mxu0
      %v1505 = vadd.f32 %v1363, %v1504
      %v1506 = vpop.f32.mrb[0].mxu0
      %v1507 = vadd.f32 %v1365, %v1506
      %1508 = vdwg.mxu0
      %1509 = vmatprep.subr.mxu0 %v1170
      %1510 = vmatpush1.msra.mxu0 %v1169
      %1511 = vmatprep.subr.mxu0 %v1174
      %1512 = vmatpush1.msra.mxu0 %v1173
      %1513 = vmatprep.subr.mxu0 %v1178
      %1514 = vmatpush1.msra.mxu0 %v1177
      %1515 = vmatprep.subr.mxu0 %v1182
      %1516 = vmatpush1.msra.mxu0 %v1181
      %1517 = vmatprep.subr.mxu0 %v1186
      %1518 = vmatpush1.msra.mxu0 %v1185
      %1519 = vmatprep.subr.mxu0 %v1190
      %1520 = vmatpush1.msra.mxu0 %v1189
      %1521 = vmatprep.subr.mxu0 %v1194
      %1522 = vmatpush1.msra.mxu0 %v1193
      %1523 = vmatprep.subr.mxu0 %v1198
      %1524 = vmatpush1.msra.mxu0 %v1197
      %1525 = vmatprep.subr.mxu0 %v1202
      %1526 = vmatpush1.msra.mxu0 %v1201
      %1527 = vmatprep.subr.mxu0 %v1206
      %1528 = vmatpush1.msra.mxu0 %v1205
      %1529 = vmatprep.subr.mxu0 %v1210
      %1530 = vmatpush1.msra.mxu0 %v1209
      %1531 = vmatprep.subr.mxu0 %v1214
      %1532 = vmatpush1.msra.mxu0 %v1213
      %1533 = vmatprep.subr.mxu0 %v1218
      %1534 = vmatpush1.msra.mxu0 %v1217
      %1535 = vmatprep.subr.mxu0 %v1222
      %1536 = vmatpush1.msra.mxu0 %v1221
      %1537 = vmatprep.subr.mxu0 %v1226
      %1538 = vmatpush1.msra.mxu0 %v1225
      %1539 = vmatprep.subr.mxu0 %v1230
      %1540 = vmatpush1.msra.mxu0 %v1229
      %1541 = vmatprep.subr.mxu0 0.0
      %1542 = vmatpush1.msra.mxu0 0.0
      %1543 = vmatprep.subr.mxu0 0.0
      %1544 = vmatpush1.msra.mxu0 0.0
      %1545 = vmatprep.subr.mxu0 0.0
      %1546 = vmatpush1.msra.mxu0 0.0
      %1547 = vmatprep.subr.mxu0 0.0
      %1548 = vmatpush1.msra.mxu0 0.0
      %1549 = vmatprep.subr.mxu0 0.0
      %1550 = vmatpush1.msra.mxu0 0.0
      %1551 = vmatprep.subr.mxu0 0.0
      %1552 = vmatpush1.msra.mxu0 0.0
      %1553 = vmatprep.subr.mxu0 0.0
      %1554 = vmatpush1.msra.mxu0 0.0
      %1555 = vmatprep.subr.mxu0 0.0
      %1556 = vmatpush1.msra.mxu0 0.0
      %1557 = vmatprep.subr.mxu0 0.0
      %1558 = vmatpush1.msra.mxu0 0.0
      %1559 = vmatprep.subr.mxu0 0.0
      %1560 = vmatpush1.msra.mxu0 0.0
      %1561 = vmatprep.subr.mxu0 0.0
      %1562 = vmatpush1.msra.mxu0 0.0
      %1563 = vmatprep.subr.mxu0 0.0
      %1564 = vmatpush1.msra.mxu0 0.0
      %1565 = vmatprep.subr.mxu0 0.0
      %1566 = vmatpush1.msra.mxu0 0.0
      %1567 = vmatprep.subr.mxu0 0.0
      %1568 = vmatpush1.msra.mxu0 0.0
      %1569 = vmatprep.subr.mxu0 0.0
      %1570 = vmatpush1.msra.mxu0 0.0
      %1571 = vmatprep.subr.mxu0 0.0
      %1572 = vmatpush1.msra.mxu0 0.0
      %1573 = vmatprep.mubr.f32.mxu0 0.0
      %1574 = vmatmul.mubr.f32.gmra.mrb[0].mxu0 %v1163
      %v1575 = vpop.f32.mrb[0].mxu0
      %v1576 = vadd.f32 %v1434, %v1575
      %v1577 = vpop.f32.mrb[0].mxu0
      %v1578 = vadd.f32 %v1436, %v1577
      %1579 = vdwg.mxu0
      %s1580 = scalar_lea.vmem %s12, 4
      %v1581 = vld [vmem:[%s1580] sm:$0xf]
      %v1583 = vlaneseq
      %v1584 = vshrl.u32 %v1583, 7
      %v1585 = vsub.s32 0, %v1584
      %v1586 = vrot.slane %v1581, %v1585
      %v1587 = vlaneseq
      %v1588 = vshrl.u32 %v1587, 7
      %v1589 = vsub.s32 1, %v1588
      %v1590 = vrot.slane %v1581, %v1589
      %v1591 = vlaneseq
      %v1592 = vshrl.u32 %v1591, 7
      %v1593 = vsub.s32 2, %v1592
      %v1594 = vrot.slane %v1581, %v1593
      %v1595 = vlaneseq
      %v1596 = vshrl.u32 %v1595, 7
      %v1597 = vsub.s32 3, %v1596
      %v1598 = vrot.slane %v1581, %v1597
      %v1603 = vadd.f32 %v1505, %v1586
      %v1604 = vadd.f32 %v1507, %v1590
      %v1605 = vadd.f32 %v1576, %v1594
      %v1606 = vadd.f32 %v1578, %v1598
      %v1607 = vxor.u32 %v1603, 2147483648
      %v1608 = vmul.f32 %v1607, 1.442695
      %v1609 = vpow.pop %v1608
      %v1610 = vadd.f32 %v1609, 1.0
      %v1611 = vrcp.pop %v1610
      %v1612 = vmul.f32 1.0, %v1611
      %v1613 = vxor.u32 %v1604, 2147483648
      %v1614 = vmul.f32 %v1613, 1.442695
      %v1615 = vpow.pop %v1614
      %v1616 = vadd.f32 %v1615, 1.0
      %v1617 = vrcp.pop %v1616
      %v1618 = vmul.f32 1.0, %v1617
      %v1619 = vtanh.pop %v1605
      %v1620 = vxor.u32 %v1606, 2147483648
      %v1621 = vmul.f32 %v1620, 1.442695
      %v1622 = vpow.pop %v1621
      %v1623 = vadd.f32 %v1622, 1.0
      %v1624 = vrcp.pop %v1623
      %v1625 = vmul.f32 1.0, %v1624
      %v1626 = vmul.f32 %v1618, %v186
      %v1627 = vmul.f32 %v1612, %v1619
      %v1628 = vadd.f32 %v1626, %v1627
      %v1629 = vtanh.pop %v1628
      %v1630 = vmul.f32 %v1625, %v1629
      %s1631 = scalar_lea.vmem [#allocation22], 8
      %1632 = vst [vmem:[%s1631] sm:$0xff] %v1630
      %s1633 = scalar_lea.vmem [#allocation24], 8
      %1634 = vst [vmem:[%s1633] sm:$0xff] %v1628
      %v1635 = vpack.c.bf16 %v1630, %v1630
      %1636 = vst [vmem:[#allocation2] sm:$0xf] %v1635
    $region101: #{tpu_custom_call.1} parent=1 // pred_fallthru
      _
    %v1637 = vld [vmem:[#allocation2] sm:$0xf]
    %v1638 = vld [vmem:[#allocation20] sm:$0xff]
    %v1639 = vld [vmem:[#allocation20 + $0x8] sm:$0xff]
    %v1640 = vld [vmem:[#allocation20 + $0x10] sm:$0xff]
    %v1641 = vld [vmem:[#allocation20 + $0x18] sm:$0xff]
    %v1642 = vld [vmem:[#allocation20 + $0x20] sm:$0xff]
    %v1643 = vld [vmem:[#allocation20 + $0x28] sm:$0xff]
    %v1644 = vld [vmem:[#allocation20 + $0x30] sm:$0xff]
    %v1645 = vld [vmem:[#allocation20 + $0x38] sm:$0xff]
    %v1646 = vld [vmem:[#allocation20 + $0x40] sm:$0xff]
    %v1647 = vld [vmem:[#allocation20 + $0x48] sm:$0xff]
    %v1648 = vld [vmem:[#allocation20 + $0x50] sm:$0xff]
    %v1649 = vld [vmem:[#allocation20 + $0x58] sm:$0xff]
    %v1650 = vld [vmem:[#allocation20 + $0x60] sm:$0xff]
    %v1651 = vld [vmem:[#allocation20 + $0x68] sm:$0xff]
    %v1652 = vld [vmem:[#allocation20 + $0x70] sm:$0xff]
    %v1653 = vld [vmem:[#allocation20 + $0x78] sm:$0xff]
    %v1654 = vld [vmem:[#allocation20 + $0x80] sm:$0xff]
    %v1655 = vld [vmem:[#allocation20 + $0x88] sm:$0xff]
    %v1656 = vld [vmem:[#allocation20 + $0x90] sm:$0xff]
    %v1657 = vld [vmem:[#allocation20 + $0x98] sm:$0xff]
    %v1658 = vld [vmem:[#allocation20 + $0xa0] sm:$0xff]
    %v1659 = vld [vmem:[#allocation20 + $0xa8] sm:$0xff]
    %v1660 = vld [vmem:[#allocation20 + $0xb0] sm:$0xff]
    %v1661 = vld [vmem:[#allocation20 + $0xb8] sm:$0xff]
    %v1662 = vld [vmem:[#allocation20 + $0xc0] sm:$0xff]
    %v1663 = vld [vmem:[#allocation20 + $0xc8] sm:$0xff]
    %v1664 = vld [vmem:[#allocation20 + $0xd0] sm:$0xff]
    %v1665 = vld [vmem:[#allocation20 + $0xd8] sm:$0xff]
    %v1666 = vld [vmem:[#allocation20 + $0xe0] sm:$0xff]
    %v1667 = vld [vmem:[#allocation20 + $0xe8] sm:$0xff]
    %v1668 = vld [vmem:[#allocation20 + $0xf0] sm:$0xff]
    %v1669 = vld [vmem:[#allocation20 + $0xf8] sm:$0xff]
    %v1670 = vld [vmem:[#allocation20 + $0x100] sm:$0xff]
    %v1671 = vld [vmem:[#allocation20 + $0x108] sm:$0xff]
    %v1672 = vld [vmem:[#allocation20 + $0x110] sm:$0xff]
    %v1673 = vld [vmem:[#allocation20 + $0x118] sm:$0xff]
    %v1674 = vld [vmem:[#allocation20 + $0x120] sm:$0xff]
    %v1675 = vld [vmem:[#allocation20 + $0x128] sm:$0xff]
    %v1676 = vld [vmem:[#allocation20 + $0x130] sm:$0xff]
    %v1677 = vld [vmem:[#allocation20 + $0x138] sm:$0xff]
    %v1678 = vld [vmem:[#allocation20 + $0x140] sm:$0xff]
    %v1679 = vld [vmem:[#allocation20 + $0x148] sm:$0xff]
    %v1680 = vld [vmem:[#allocation20 + $0x150] sm:$0xff]
    %v1681 = vld [vmem:[#allocation20 + $0x158] sm:$0xff]
    %v1682 = vld [vmem:[#allocation20 + $0x160] sm:$0xff]
    %v1683 = vld [vmem:[#allocation20 + $0x168] sm:$0xff]
    %v1684 = vld [vmem:[#allocation20 + $0x170] sm:$0xff]
    %v1685 = vld [vmem:[#allocation20 + $0x178] sm:$0xff]
    %v1686 = vld [vmem:[#allocation20 + $0x180] sm:$0xff]
    %v1687 = vld [vmem:[#allocation20 + $0x188] sm:$0xff]
    %v1688 = vld [vmem:[#allocation20 + $0x190] sm:$0xff]
    %v1689 = vld [vmem:[#allocation20 + $0x198] sm:$0xff]
    %v1690 = vld [vmem:[#allocation20 + $0x1a0] sm:$0xff]
    %v1691 = vld [vmem:[#allocation20 + $0x1a8] sm:$0xff]
    %v1692 = vld [vmem:[#allocation20 + $0x1b0] sm:$0xff]
    %v1693 = vld [vmem:[#allocation20 + $0x1b8] sm:$0xff]
    %v1694 = vld [vmem:[#allocation20 + $0x1c0] sm:$0xff]
    %v1695 = vld [vmem:[#allocation20 + $0x1c8] sm:$0xff]
    %v1696 = vld [vmem:[#allocation20 + $0x1d0] sm:$0xff]
    %v1697 = vld [vmem:[#allocation20 + $0x1d8] sm:$0xff]
    %v1698 = vld [vmem:[#allocation20 + $0x1e0] sm:$0xff]
    %v1699 = vld [vmem:[#allocation20 + $0x1e8] sm:$0xff]
    %v1700 = vld [vmem:[#allocation20 + $0x1f0] sm:$0xff]
    %v1701 = vld [vmem:[#allocation20 + $0x1f8] sm:$0xff]
    %v1702 = vld [vmem:[#allocation20 + $0x200] sm:$0xff]
    %v1703 = vld [vmem:[#allocation20 + $0x208] sm:$0xff]
    %v1704 = vld [vmem:[#allocation20 + $0x210] sm:$0xff]
    %v1705 = vld [vmem:[#allocation20 + $0x218] sm:$0xff]
    %v1706 = vld [vmem:[#allocation20 + $0x220] sm:$0xff]
    %v1707 = vld [vmem:[#allocation20 + $0x228] sm:$0xff]
    %v1708 = vld [vmem:[#allocation20 + $0x230] sm:$0xff]
    %v1709 = vld [vmem:[#allocation20 + $0x238] sm:$0xff]
    %v1710 = vld [vmem:[#allocation20 + $0x240] sm:$0xff]
    %v1711 = vld [vmem:[#allocation20 + $0x248] sm:$0xff]
    %v1712 = vld [vmem:[#allocation20 + $0x250] sm:$0xff]
    %v1713 = vld [vmem:[#allocation20 + $0x258] sm:$0xff]
    %v1714 = vld [vmem:[#allocation20 + $0x260] sm:$0xff]
    %v1715 = vld [vmem:[#allocation20 + $0x268] sm:$0xff]
    %v1716 = vld [vmem:[#allocation20 + $0x270] sm:$0xff]
    %v1717 = vld [vmem:[#allocation20 + $0x278] sm:$0xff]
    %v1718 = vld [vmem:[#allocation20 + $0x280] sm:$0xff]
    %v1719 = vld [vmem:[#allocation20 + $0x288] sm:$0xff]
    %v1720 = vld [vmem:[#allocation20 + $0x290] sm:$0xff]
    %v1721 = vld [vmem:[#allocation20 + $0x298] sm:$0xff]
    %v1722 = vld [vmem:[#allocation20 + $0x2a0] sm:$0xff]
    %v1723 = vld [vmem:[#allocation20 + $0x2a8] sm:$0xff]
    %v1724 = vld [vmem:[#allocation20 + $0x2b0] sm:$0xff]
    %v1725 = vld [vmem:[#allocation20 + $0x2b8] sm:$0xff]
    %v1726 = vld [vmem:[#allocation20 + $0x2c0] sm:$0xff]
    %v1727 = vld [vmem:[#allocation20 + $0x2c8] sm:$0xff]
    %v1728 = vld [vmem:[#allocation20 + $0x2d0] sm:$0xff]
    %v1729 = vld [vmem:[#allocation20 + $0x2d8] sm:$0xff]
    %v1730 = vld [vmem:[#allocation20 + $0x2e0] sm:$0xff]
    %v1731 = vld [vmem:[#allocation20 + $0x2e8] sm:$0xff]
    %v1732 = vld [vmem:[#allocation20 + $0x2f0] sm:$0xff]
    %v1733 = vld [vmem:[#allocation20 + $0x2f8] sm:$0xff]
    %v1734 = vld [vmem:[#allocation20 + $0x300] sm:$0xff]
    %v1735 = vld [vmem:[#allocation20 + $0x308] sm:$0xff]
    %v1736 = vld [vmem:[#allocation20 + $0x310] sm:$0xff]
    %v1737 = vld [vmem:[#allocation20 + $0x318] sm:$0xff]
    %v1738 = vld [vmem:[#allocation20 + $0x320] sm:$0xff]
    %v1739 = vld [vmem:[#allocation20 + $0x328] sm:$0xff]
    %v1740 = vld [vmem:[#allocation20 + $0x330] sm:$0xff]
    %v1741 = vld [vmem:[#allocation20 + $0x338] sm:$0xff]
    %v1742 = vld [vmem:[#allocation20 + $0x340] sm:$0xff]
    %v1743 = vld [vmem:[#allocation20 + $0x348] sm:$0xff]
    %v1744 = vld [vmem:[#allocation20 + $0x350] sm:$0xff]
    %v1745 = vld [vmem:[#allocation20 + $0x358] sm:$0xff]
    %v1746 = vld [vmem:[#allocation20 + $0x360] sm:$0xff]
    %v1747 = vld [vmem:[#allocation20 + $0x368] sm:$0xff]
    %v1748 = vld [vmem:[#allocation20 + $0x370] sm:$0xff]
    %v1749 = vld [vmem:[#allocation20 + $0x378] sm:$0xff]
    %v1750 = vld [vmem:[#allocation20 + $0x380] sm:$0xff]
    %v1751 = vld [vmem:[#allocation20 + $0x388] sm:$0xff]
    %v1752 = vld [vmem:[#allocation20 + $0x390] sm:$0xff]
    %v1753 = vld [vmem:[#allocation20 + $0x398] sm:$0xff]
    %v1754 = vld [vmem:[#allocation20 + $0x3a0] sm:$0xff]
    %v1755 = vld [vmem:[#allocation20 + $0x3a8] sm:$0xff]
    %v1756 = vld [vmem:[#allocation20 + $0x3b0] sm:$0xff]
    %v1757 = vld [vmem:[#allocation20 + $0x3b8] sm:$0xff]
    %v1758 = vld [vmem:[#allocation20 + $0x3c0] sm:$0xff]
    %v1759 = vld [vmem:[#allocation20 + $0x3c8] sm:$0xff]
    %v1760 = vld [vmem:[#allocation20 + $0x3d0] sm:$0xff]
    %v1761 = vld [vmem:[#allocation20 + $0x3d8] sm:$0xff]
    %v1762 = vld [vmem:[#allocation20 + $0x3e0] sm:$0xff]
    %v1763 = vld [vmem:[#allocation20 + $0x3e8] sm:$0xff]
    %v1764 = vld [vmem:[#allocation20 + $0x3f0] sm:$0xff]
    %v1765 = vld [vmem:[#allocation20 + $0x3f8] sm:$0xff]
    %v1766 = vld [vmem:[%s14] sm:$0xff]
    %v1767 = vld [vmem:[%s14 + $0x8] sm:$0xff]
    %v1770 = vlaneseq
    %v1771 = vshrl.u32 %v1770, 7
    %v1772 = vsub.s32 0, %v1771
    %v1773 = vrot.slane %v1766, %v1772
    %v1774 = vlaneseq
    %v1775 = vshrl.u32 %v1774, 7
    %v1776 = vsub.s32 1, %v1775
    %v1777 = vrot.slane %v1766, %v1776
    %v1778 = vlaneseq
    %v1779 = vshrl.u32 %v1778, 7
    %v1780 = vsub.s32 2, %v1779
    %v1781 = vrot.slane %v1766, %v1780
    %v1782 = vlaneseq
    %v1783 = vshrl.u32 %v1782, 7
    %v1784 = vsub.s32 3, %v1783
    %v1785 = vrot.slane %v1766, %v1784
    %v1786 = vlaneseq
    %v1787 = vshrl.u32 %v1786, 7
    %v1788 = vsub.s32 4, %v1787
    %v1789 = vrot.slane %v1766, %v1788
    %v1790 = vlaneseq
    %v1791 = vshrl.u32 %v1790, 7
    %v1792 = vsub.s32 5, %v1791
    %v1793 = vrot.slane %v1766, %v1792
    %v1794 = vlaneseq
    %v1795 = vshrl.u32 %v1794, 7
    %v1796 = vsub.s32 6, %v1795
    %v1797 = vrot.slane %v1766, %v1796
    %v1798 = vlaneseq
    %v1799 = vshrl.u32 %v1798, 7
    %v1800 = vsub.s32 7, %v1799
    %v1801 = vrot.slane %v1766, %v1800
    %v1802 = vlaneseq
    %v1803 = vshrl.u32 %v1802, 7
    %v1804 = vsub.s32 0, %v1803
    %v1805 = vrot.slane %v1767, %v1804
    %v1806 = vlaneseq
    %v1807 = vshrl.u32 %v1806, 7
    %v1808 = vsub.s32 1, %v1807
    %v1809 = vrot.slane %v1767, %v1808
    %v1810 = vlaneseq
    %v1811 = vshrl.u32 %v1810, 7
    %v1812 = vsub.s32 2, %v1811
    %v1813 = vrot.slane %v1767, %v1812
    %v1814 = vlaneseq
    %v1815 = vshrl.u32 %v1814, 7
    %v1816 = vsub.s32 3, %v1815
    %v1817 = vrot.slane %v1767, %v1816
    %v1818 = vlaneseq
    %v1819 = vshrl.u32 %v1818, 7
    %v1820 = vsub.s32 4, %v1819
    %v1821 = vrot.slane %v1767, %v1820
    %v1822 = vlaneseq
    %v1823 = vshrl.u32 %v1822, 7
    %v1824 = vsub.s32 5, %v1823
    %v1825 = vrot.slane %v1767, %v1824
    %v1826 = vlaneseq
    %v1827 = vshrl.u32 %v1826, 7
    %v1828 = vsub.s32 6, %v1827
    %v1829 = vrot.slane %v1767, %v1828
    %v1830 = vlaneseq
    %v1831 = vshrl.u32 %v1830, 7
    %v1832 = vsub.s32 7, %v1831
    %v1833 = vrot.slane %v1767, %v1832
    %v1978 = vunpack.c.l.b16 %v1638
    %v1979 = vunpack.c.h.b16 %v1638
    %v1980 = vunpack.c.l.b16 %v1639
    %v1981 = vunpack.c.h.b16 %v1639
    %v1982 = vunpack.c.l.b16 %v1640
    %v1983 = vunpack.c.h.b16 %v1640
    %v1984 = vunpack.c.l.b16 %v1641
    %v1985 = vunpack.c.h.b16 %v1641
    %v1986 = vunpack.c.l.b16 %v1642
    %v1987 = vunpack.c.h.b16 %v1642
    %v1988 = vunpack.c.l.b16 %v1643
    %v1989 = vunpack.c.h.b16 %v1643
    %v1990 = vunpack.c.l.b16 %v1644
    %v1991 = vunpack.c.h.b16 %v1644
    %v1992 = vunpack.c.l.b16 %v1645
    %v1993 = vunpack.c.h.b16 %v1645
    %v1994 = vunpack.c.l.b16 %v1646
    %v1995 = vunpack.c.h.b16 %v1646
    %v1996 = vunpack.c.l.b16 %v1647
    %v1997 = vunpack.c.h.b16 %v1647
    %v1998 = vunpack.c.l.b16 %v1648
    %v1999 = vunpack.c.h.b16 %v1648
    %v2000 = vunpack.c.l.b16 %v1649
    %v2001 = vunpack.c.h.b16 %v1649
    %v2002 = vunpack.c.l.b16 %v1650
    %v2003 = vunpack.c.h.b16 %v1650
    %v2004 = vunpack.c.l.b16 %v1651
    %v2005 = vunpack.c.h.b16 %v1651
    %v2006 = vunpack.c.l.b16 %v1652
    %v2007 = vunpack.c.h.b16 %v1652
    %v2008 = vunpack.c.l.b16 %v1653
    %v2009 = vunpack.c.h.b16 %v1653
    %v2010 = vunpack.c.l.b16 %v1654
    %v2011 = vunpack.c.h.b16 %v1654
    %v2012 = vunpack.c.l.b16 %v1655
    %v2013 = vunpack.c.h.b16 %v1655
    %v2014 = vunpack.c.l.b16 %v1656
    %v2015 = vunpack.c.h.b16 %v1656
    %v2016 = vunpack.c.l.b16 %v1657
    %v2017 = vunpack.c.h.b16 %v1657
    %v2018 = vunpack.c.l.b16 %v1658
    %v2019 = vunpack.c.h.b16 %v1658
    %v2020 = vunpack.c.l.b16 %v1659
    %v2021 = vunpack.c.h.b16 %v1659
    %v2022 = vunpack.c.l.b16 %v1660
    %v2023 = vunpack.c.h.b16 %v1660
    %v2024 = vunpack.c.l.b16 %v1661
    %v2025 = vunpack.c.h.b16 %v1661
    %v2026 = vunpack.c.l.b16 %v1662
    %v2027 = vunpack.c.h.b16 %v1662
    %v2028 = vunpack.c.l.b16 %v1663
    %v2029 = vunpack.c.h.b16 %v1663
    %v2030 = vunpack.c.l.b16 %v1664
    %v2031 = vunpack.c.h.b16 %v1664
    %v2032 = vunpack.c.l.b16 %v1665
    %v2033 = vunpack.c.h.b16 %v1665
    %v2034 = vunpack.c.l.b16 %v1666
    %v2035 = vunpack.c.h.b16 %v1666
    %v2036 = vunpack.c.l.b16 %v1667
    %v2037 = vunpack.c.h.b16 %v1667
    %v2038 = vunpack.c.l.b16 %v1668
    %v2039 = vunpack.c.h.b16 %v1668
    %v2040 = vunpack.c.l.b16 %v1669
    %v2041 = vunpack.c.h.b16 %v1669
    %v2042 = vunpack.c.l.b16 %v1670
    %v2043 = vunpack.c.h.b16 %v1670
    %v2044 = vunpack.c.l.b16 %v1671
    %v2045 = vunpack.c.h.b16 %v1671
    %v2046 = vunpack.c.l.b16 %v1672
    %v2047 = vunpack.c.h.b16 %v1672
    %v2048 = vunpack.c.l.b16 %v1673
    %v2049 = vunpack.c.h.b16 %v1673
    %v2050 = vunpack.c.l.b16 %v1674
    %v2051 = vunpack.c.h.b16 %v1674
    %v2052 = vunpack.c.l.b16 %v1675
    %v2053 = vunpack.c.h.b16 %v1675
    %v2054 = vunpack.c.l.b16 %v1676
    %v2055 = vunpack.c.h.b16 %v1676
    %v2056 = vunpack.c.l.b16 %v1677
    %v2057 = vunpack.c.h.b16 %v1677
    %v2058 = vunpack.c.l.b16 %v1678
    %v2059 = vunpack.c.h.b16 %v1678
    %v2060 = vunpack.c.l.b16 %v1679
    %v2061 = vunpack.c.h.b16 %v1679
    %v2062 = vunpack.c.l.b16 %v1680
    %v2063 = vunpack.c.h.b16 %v1680
    %v2064 = vunpack.c.l.b16 %v1681
    %v2065 = vunpack.c.h.b16 %v1681
    %v2066 = vunpack.c.l.b16 %v1682
    %v2067 = vunpack.c.h.b16 %v1682
    %v2068 = vunpack.c.l.b16 %v1683
    %v2069 = vunpack.c.h.b16 %v1683
    %v2070 = vunpack.c.l.b16 %v1684
    %v2071 = vunpack.c.h.b16 %v1684
    %v2072 = vunpack.c.l.b16 %v1685
    %v2073 = vunpack.c.h.b16 %v1685
    %v2074 = vunpack.c.l.b16 %v1686
    %v2075 = vunpack.c.h.b16 %v1686
    %v2076 = vunpack.c.l.b16 %v1687
    %v2077 = vunpack.c.h.b16 %v1687
    %v2078 = vunpack.c.l.b16 %v1688
    %v2079 = vunpack.c.h.b16 %v1688
    %v2080 = vunpack.c.l.b16 %v1689
    %v2081 = vunpack.c.h.b16 %v1689
    %v2082 = vunpack.c.l.b16 %v1690
    %v2083 = vunpack.c.h.b16 %v1690
    %v2084 = vunpack.c.l.b16 %v1691
    %v2085 = vunpack.c.h.b16 %v1691
    %v2086 = vunpack.c.l.b16 %v1692
    %v2087 = vunpack.c.h.b16 %v1692
    %v2088 = vunpack.c.l.b16 %v1693
    %v2089 = vunpack.c.h.b16 %v1693
    %v2090 = vunpack.c.l.b16 %v1694
    %v2091 = vunpack.c.h.b16 %v1694
    %v2092 = vunpack.c.l.b16 %v1695
    %v2093 = vunpack.c.h.b16 %v1695
    %v2094 = vunpack.c.l.b16 %v1696
    %v2095 = vunpack.c.h.b16 %v1696
    %v2096 = vunpack.c.l.b16 %v1697
    %v2097 = vunpack.c.h.b16 %v1697
    %v2098 = vunpack.c.l.b16 %v1698
    %v2099 = vunpack.c.h.b16 %v1698
    %v2100 = vunpack.c.l.b16 %v1699
    %v2101 = vunpack.c.h.b16 %v1699
    %v2102 = vunpack.c.l.b16 %v1700
    %v2103 = vunpack.c.h.b16 %v1700
    %v2104 = vunpack.c.l.b16 %v1701
    %v2105 = vunpack.c.h.b16 %v1701
    %v2106 = vunpack.c.l.b16 %v1702
    %v2107 = vunpack.c.h.b16 %v1702
    %v2108 = vunpack.c.l.b16 %v1703
    %v2109 = vunpack.c.h.b16 %v1703
    %v2110 = vunpack.c.l.b16 %v1704
    %v2111 = vunpack.c.h.b16 %v1704
    %v2112 = vunpack.c.l.b16 %v1705
    %v2113 = vunpack.c.h.b16 %v1705
    %v2114 = vunpack.c.l.b16 %v1706
    %v2115 = vunpack.c.h.b16 %v1706
    %v2116 = vunpack.c.l.b16 %v1707
    %v2117 = vunpack.c.h.b16 %v1707
    %v2118 = vunpack.c.l.b16 %v1708
    %v2119 = vunpack.c.h.b16 %v1708
    %v2120 = vunpack.c.l.b16 %v1709
    %v2121 = vunpack.c.h.b16 %v1709
    %v2122 = vunpack.c.l.b16 %v1710
    %v2123 = vunpack.c.h.b16 %v1710
    %v2124 = vunpack.c.l.b16 %v1711
    %v2125 = vunpack.c.h.b16 %v1711
    %v2126 = vunpack.c.l.b16 %v1712
    %v2127 = vunpack.c.h.b16 %v1712
    %v2128 = vunpack.c.l.b16 %v1713
    %v2129 = vunpack.c.h.b16 %v1713
    %v2130 = vunpack.c.l.b16 %v1714
    %v2131 = vunpack.c.h.b16 %v1714
    %v2132 = vunpack.c.l.b16 %v1715
    %v2133 = vunpack.c.h.b16 %v1715
    %v2134 = vunpack.c.l.b16 %v1716
    %v2135 = vunpack.c.h.b16 %v1716
    %v2136 = vunpack.c.l.b16 %v1717
    %v2137 = vunpack.c.h.b16 %v1717
    %v2138 = vunpack.c.l.b16 %v1718
    %v2139 = vunpack.c.h.b16 %v1718
    %v2140 = vunpack.c.l.b16 %v1719
    %v2141 = vunpack.c.h.b16 %v1719
    %v2142 = vunpack.c.l.b16 %v1720
    %v2143 = vunpack.c.h.b16 %v1720
    %v2144 = vunpack.c.l.b16 %v1721
    %v2145 = vunpack.c.h.b16 %v1721
    %v2146 = vunpack.c.l.b16 %v1722
    %v2147 = vunpack.c.h.b16 %v1722
    %v2148 = vunpack.c.l.b16 %v1723
    %v2149 = vunpack.c.h.b16 %v1723
    %v2150 = vunpack.c.l.b16 %v1724
    %v2151 = vunpack.c.h.b16 %v1724
    %v2152 = vunpack.c.l.b16 %v1725
    %v2153 = vunpack.c.h.b16 %v1725
    %v2154 = vunpack.c.l.b16 %v1726
    %v2155 = vunpack.c.h.b16 %v1726
    %v2156 = vunpack.c.l.b16 %v1727
    %v2157 = vunpack.c.h.b16 %v1727
    %v2158 = vunpack.c.l.b16 %v1728
    %v2159 = vunpack.c.h.b16 %v1728
    %v2160 = vunpack.c.l.b16 %v1729
    %v2161 = vunpack.c.h.b16 %v1729
    %v2162 = vunpack.c.l.b16 %v1730
    %v2163 = vunpack.c.h.b16 %v1730
    %v2164 = vunpack.c.l.b16 %v1731
    %v2165 = vunpack.c.h.b16 %v1731
    %v2166 = vunpack.c.l.b16 %v1732
    %v2167 = vunpack.c.h.b16 %v1732
    %v2168 = vunpack.c.l.b16 %v1733
    %v2169 = vunpack.c.h.b16 %v1733
    %v2170 = vunpack.c.l.b16 %v1734
    %v2171 = vunpack.c.h.b16 %v1734
    %v2172 = vunpack.c.l.b16 %v1735
    %v2173 = vunpack.c.h.b16 %v1735
    %v2174 = vunpack.c.l.b16 %v1736
    %v2175 = vunpack.c.h.b16 %v1736
    %v2176 = vunpack.c.l.b16 %v1737
    %v2177 = vunpack.c.h.b16 %v1737
    %v2178 = vunpack.c.l.b16 %v1738
    %v2179 = vunpack.c.h.b16 %v1738
    %v2180 = vunpack.c.l.b16 %v1739
    %v2181 = vunpack.c.h.b16 %v1739
    %v2182 = vunpack.c.l.b16 %v1740
    %v2183 = vunpack.c.h.b16 %v1740
    %v2184 = vunpack.c.l.b16 %v1741
    %v2185 = vunpack.c.h.b16 %v1741
    %v2186 = vunpack.c.l.b16 %v1742
    %v2187 = vunpack.c.h.b16 %v1742
    %v2188 = vunpack.c.l.b16 %v1743
    %v2189 = vunpack.c.h.b16 %v1743
    %v2190 = vunpack.c.l.b16 %v1744
    %v2191 = vunpack.c.h.b16 %v1744
    %v2192 = vunpack.c.l.b16 %v1745
    %v2193 = vunpack.c.h.b16 %v1745
    %v2194 = vunpack.c.l.b16 %v1746
    %v2195 = vunpack.c.h.b16 %v1746
    %v2196 = vunpack.c.l.b16 %v1747
    %v2197 = vunpack.c.h.b16 %v1747
    %v2198 = vunpack.c.l.b16 %v1748
    %v2199 = vunpack.c.h.b16 %v1748
    %v2200 = vunpack.c.l.b16 %v1749
    %v2201 = vunpack.c.h.b16 %v1749
    %v2202 = vunpack.c.l.b16 %v1750
    %v2203 = vunpack.c.h.b16 %v1750
    %v2204 = vunpack.c.l.b16 %v1751
    %v2205 = vunpack.c.h.b16 %v1751
    %v2206 = vunpack.c.l.b16 %v1752
    %v2207 = vunpack.c.h.b16 %v1752
    %v2208 = vunpack.c.l.b16 %v1753
    %v2209 = vunpack.c.h.b16 %v1753
    %v2210 = vunpack.c.l.b16 %v1754
    %v2211 = vunpack.c.h.b16 %v1754
    %v2212 = vunpack.c.l.b16 %v1755
    %v2213 = vunpack.c.h.b16 %v1755
    %v2214 = vunpack.c.l.b16 %v1756
    %v2215 = vunpack.c.h.b16 %v1756
    %v2216 = vunpack.c.l.b16 %v1757
    %v2217 = vunpack.c.h.b16 %v1757
    %v2218 = vunpack.c.l.b16 %v1758
    %v2219 = vunpack.c.h.b16 %v1758
    %v2220 = vunpack.c.l.b16 %v1759
    %v2221 = vunpack.c.h.b16 %v1759
    %v2222 = vunpack.c.l.b16 %v1760
    %v2223 = vunpack.c.h.b16 %v1760
    %v2224 = vunpack.c.l.b16 %v1761
    %v2225 = vunpack.c.h.b16 %v1761
    %v2226 = vunpack.c.l.b16 %v1762
    %v2227 = vunpack.c.h.b16 %v1762
    %v2228 = vunpack.c.l.b16 %v1763
    %v2229 = vunpack.c.h.b16 %v1763
    %v2230 = vunpack.c.l.b16 %v1764
    %v2231 = vunpack.c.h.b16 %v1764
    %v2232 = vunpack.c.l.b16 %v1765
    %v2233 = vunpack.c.h.b16 %v1765
    %v2234 = vpack.c.b16 %v1994, %v1978
    %v2235 = vpack.c.b16 %v1995, %v1979
    %v2236 = vpack.c.b16 %v1996, %v1980
    %v2237 = vpack.c.b16 %v1997, %v1981
    %v2238 = vpack.c.b16 %v1998, %v1982
    %v2239 = vpack.c.b16 %v1999, %v1983
    %v2240 = vpack.c.b16 %v2000, %v1984
    %v2241 = vpack.c.b16 %v2001, %v1985
    %v2242 = vpack.c.b16 %v2002, %v1986
    %v2243 = vpack.c.b16 %v2003, %v1987
    %v2244 = vpack.c.b16 %v2004, %v1988
    %v2245 = vpack.c.b16 %v2005, %v1989
    %v2246 = vpack.c.b16 %v2006, %v1990
    %v2247 = vpack.c.b16 %v2007, %v1991
    %v2248 = vpack.c.b16 %v2008, %v1992
    %v2249 = vpack.c.b16 %v2009, %v1993
    %v2250 = vpack.c.b16 %v2026, %v2010
    %v2251 = vpack.c.b16 %v2027, %v2011
    %v2252 = vpack.c.b16 %v2028, %v2012
    %v2253 = vpack.c.b16 %v2029, %v2013
    %v2254 = vpack.c.b16 %v2030, %v2014
    %v2255 = vpack.c.b16 %v2031, %v2015
    %v2256 = vpack.c.b16 %v2032, %v2016
    %v2257 = vpack.c.b16 %v2033, %v2017
    %v2258 = vpack.c.b16 %v2034, %v2018
    %v2259 = vpack.c.b16 %v2035, %v2019
    %v2260 = vpack.c.b16 %v2036, %v2020
    %v2261 = vpack.c.b16 %v2037, %v2021
    %v2262 = vpack.c.b16 %v2038, %v2022
    %v2263 = vpack.c.b16 %v2039, %v2023
    %v2264 = vpack.c.b16 %v2040, %v2024
    %v2265 = vpack.c.b16 %v2041, %v2025
    %v2266 = vpack.c.b16 %v2058, %v2042
    %v2267 = vpack.c.b16 %v2059, %v2043
    %v2268 = vpack.c.b16 %v2060, %v2044
    %v2269 = vpack.c.b16 %v2061, %v2045
    %v2270 = vpack.c.b16 %v2062, %v2046
    %v2271 = vpack.c.b16 %v2063, %v2047
    %v2272 = vpack.c.b16 %v2064, %v2048
    %v2273 = vpack.c.b16 %v2065, %v2049
    %v2274 = vpack.c.b16 %v2066, %v2050
    %v2275 = vpack.c.b16 %v2067, %v2051
    %v2276 = vpack.c.b16 %v2068, %v2052
    %v2277 = vpack.c.b16 %v2069, %v2053
    %v2278 = vpack.c.b16 %v2070, %v2054
    %v2279 = vpack.c.b16 %v2071, %v2055
    %v2280 = vpack.c.b16 %v2072, %v2056
    %v2281 = vpack.c.b16 %v2073, %v2057
    %v2282 = vpack.c.b16 %v2090, %v2074
    %v2283 = vpack.c.b16 %v2091, %v2075
    %v2284 = vpack.c.b16 %v2092, %v2076
    %v2285 = vpack.c.b16 %v2093, %v2077
    %v2286 = vpack.c.b16 %v2094, %v2078
    %v2287 = vpack.c.b16 %v2095, %v2079
    %v2288 = vpack.c.b16 %v2096, %v2080
    %v2289 = vpack.c.b16 %v2097, %v2081
    %v2290 = vpack.c.b16 %v2098, %v2082
    %v2291 = vpack.c.b16 %v2099, %v2083
    %v2292 = vpack.c.b16 %v2100, %v2084
    %v2293 = vpack.c.b16 %v2101, %v2085
    %v2294 = vpack.c.b16 %v2102, %v2086
    %v2295 = vpack.c.b16 %v2103, %v2087
    %v2296 = vpack.c.b16 %v2104, %v2088
    %v2297 = vpack.c.b16 %v2105, %v2089
    %v2298 = vpack.c.b16 %v2122, %v2106
    %v2299 = vpack.c.b16 %v2123, %v2107
    %v2300 = vpack.c.b16 %v2124, %v2108
    %v2301 = vpack.c.b16 %v2125, %v2109
    %v2302 = vpack.c.b16 %v2126, %v2110
    %v2303 = vpack.c.b16 %v2127, %v2111
    %v2304 = vpack.c.b16 %v2128, %v2112
    %v2305 = vpack.c.b16 %v2129, %v2113
    %v2306 = vpack.c.b16 %v2130, %v2114
    %v2307 = vpack.c.b16 %v2131, %v2115
    %v2308 = vpack.c.b16 %v2132, %v2116
    %v2309 = vpack.c.b16 %v2133, %v2117
    %v2310 = vpack.c.b16 %v2134, %v2118
    %v2311 = vpack.c.b16 %v2135, %v2119
    %v2312 = vpack.c.b16 %v2136, %v2120
    %v2313 = vpack.c.b16 %v2137, %v2121
    %v2314 = vpack.c.b16 %v2154, %v2138
    %v2315 = vpack.c.b16 %v2155, %v2139
    %v2316 = vpack.c.b16 %v2156, %v2140
    %v2317 = vpack.c.b16 %v2157, %v2141
    %v2318 = vpack.c.b16 %v2158, %v2142
    %v2319 = vpack.c.b16 %v2159, %v2143
    %v2320 = vpack.c.b16 %v2160, %v2144
    %v2321 = vpack.c.b16 %v2161, %v2145
    %v2322 = vpack.c.b16 %v2162, %v2146
    %v2323 = vpack.c.b16 %v2163, %v2147
    %v2324 = vpack.c.b16 %v2164, %v2148
    %v2325 = vpack.c.b16 %v2165, %v2149
    %v2326 = vpack.c.b16 %v2166, %v2150
    %v2327 = vpack.c.b16 %v2167, %v2151
    %v2328 = vpack.c.b16 %v2168, %v2152
    %v2329 = vpack.c.b16 %v2169, %v2153
    %v2330 = vpack.c.b16 %v2186, %v2170
    %v2331 = vpack.c.b16 %v2187, %v2171
    %v2332 = vpack.c.b16 %v2188, %v2172
    %v2333 = vpack.c.b16 %v2189, %v2173
    %v2334 = vpack.c.b16 %v2190, %v2174
    %v2335 = vpack.c.b16 %v2191, %v2175
    %v2336 = vpack.c.b16 %v2192, %v2176
    %v2337 = vpack.c.b16 %v2193, %v2177
    %v2338 = vpack.c.b16 %v2194, %v2178
    %v2339 = vpack.c.b16 %v2195, %v2179
    %v2340 = vpack.c.b16 %v2196, %v2180
    %v2341 = vpack.c.b16 %v2197, %v2181
    %v2342 = vpack.c.b16 %v2198, %v2182
    %v2343 = vpack.c.b16 %v2199, %v2183
    %v2344 = vpack.c.b16 %v2200, %v2184
    %v2345 = vpack.c.b16 %v2201, %v2185
    %v2346 = vpack.c.b16 %v2218, %v2202
    %v2347 = vpack.c.b16 %v2219, %v2203
    %v2348 = vpack.c.b16 %v2220, %v2204
    %v2349 = vpack.c.b16 %v2221, %v2205
    %v2350 = vpack.c.b16 %v2222, %v2206
    %v2351 = vpack.c.b16 %v2223, %v2207
    %v2352 = vpack.c.b16 %v2224, %v2208
    %v2353 = vpack.c.b16 %v2225, %v2209
    %v2354 = vpack.c.b16 %v2226, %v2210
    %v2355 = vpack.c.b16 %v2227, %v2211
    %v2356 = vpack.c.b16 %v2228, %v2212
    %v2357 = vpack.c.b16 %v2229, %v2213
    %v2358 = vpack.c.b16 %v2230, %v2214
    %v2359 = vpack.c.b16 %v2231, %v2215
    %v2360 = vpack.c.b16 %v2232, %v2216
    %v2361 = vpack.c.b16 %v2233, %v2217
    %2490 = vmatprep.subr.bf16.mxu0 %v2235
    %2491 = vmatpush1.bf16.msra.mxu0 %v2234
    %2492 = vmatprep.subr.bf16.mxu0 %v2251
    %2493 = vmatpush1.bf16.msra.mxu0 %v2250
    %2494 = vmatprep.subr.bf16.mxu0 %v2267
    %2495 = vmatpush1.bf16.msra.mxu0 %v2266
    %2496 = vmatprep.subr.bf16.mxu0 %v2283
    %2497 = vmatpush1.bf16.msra.mxu0 %v2282
    %2498 = vmatprep.subr.bf16.mxu0 %v2299
    %2499 = vmatpush1.bf16.msra.mxu0 %v2298
    %2500 = vmatprep.subr.bf16.mxu0 %v2315
    %2501 = vmatpush1.bf16.msra.mxu0 %v2314
    %2502 = vmatprep.subr.bf16.mxu0 %v2331
    %2503 = vmatpush1.bf16.msra.mxu0 %v2330
    %2504 = vmatprep.subr.bf16.mxu0 %v2347
    %2505 = vmatpush1.bf16.msra.mxu0 %v2346
    %2506 = vmatprep.subr.bf16.mxu0 0
    %2507 = vmatpush1.bf16.msra.mxu0 0
    %2508 = vmatprep.subr.bf16.mxu0 0
    %2509 = vmatpush1.bf16.msra.mxu0 0
    %2510 = vmatprep.subr.bf16.mxu0 0
    %2511 = vmatpush1.bf16.msra.mxu0 0
    %2512 = vmatprep.subr.bf16.mxu0 0
    %2513 = vmatpush1.bf16.msra.mxu0 0
    %2514 = vmatprep.subr.bf16.mxu0 0
    %2515 = vmatpush1.bf16.msra.mxu0 0
    %2516 = vmatprep.subr.bf16.mxu0 0
    %2517 = vmatpush1.bf16.msra.mxu0 0
    %2518 = vmatprep.subr.bf16.mxu0 0
    %2519 = vmatpush1.bf16.msra.mxu0 0
    %2520 = vmatprep.subr.bf16.mxu0 0
    %2521 = vmatpush1.bf16.msra.mxu0 0
    %2522 = vmatprep.mubr.bf16.mxu0 0
    %2523 = vmatmul.mubr.bf16.gmra.mrb[0].mxu0 %v1637
    %v2524 = vpop.f32.mrb[0].mxu0
    %v2525 = vadd.f32 %v1773, %v2524
    %v2526 = vpop.f32.mrb[0].mxu0
    %v2527 = vadd.f32 %v1777, %v2526
    %v2528 = vpop.f32.mrb[0].mxu0
    %v2529 = vpop.f32.mrb[0].mxu0
    %2530 = vdwg.mxu0
    %2531 = vmatprep.subr.bf16.mxu0 %v2237
    %2532 = vmatpush1.bf16.msra.mxu0 %v2236
    %2533 = vmatprep.subr.bf16.mxu0 %v2253
    %2534 = vmatpush1.bf16.msra.mxu0 %v2252
    %2535 = vmatprep.subr.bf16.mxu0 %v2269
    %2536 = vmatpush1.bf16.msra.mxu0 %v2268
    %2537 = vmatprep.subr.bf16.mxu0 %v2285
    %2538 = vmatpush1.bf16.msra.mxu0 %v2284
    %2539 = vmatprep.subr.bf16.mxu0 %v2301
    %2540 = vmatpush1.bf16.msra.mxu0 %v2300
    %2541 = vmatprep.subr.bf16.mxu0 %v2317
    %2542 = vmatpush1.bf16.msra.mxu0 %v2316
    %2543 = vmatprep.subr.bf16.mxu0 %v2333
    %2544 = vmatpush1.bf16.msra.mxu0 %v2332
    %2545 = vmatprep.subr.bf16.mxu0 %v2349
    %2546 = vmatpush1.bf16.msra.mxu0 %v2348
    %2547 = vmatprep.subr.bf16.mxu0 0
    %2548 = vmatpush1.bf16.msra.mxu0 0
    %2549 = vmatprep.subr.bf16.mxu0 0
    %2550 = vmatpush1.bf16.msra.mxu0 0
    %2551 = vmatprep.subr.bf16.mxu0 0
    %2552 = vmatpush1.bf16.msra.mxu0 0
    %2553 = vmatprep.subr.bf16.mxu0 0
    %2554 = vmatpush1.bf16.msra.mxu0 0
    %2555 = vmatprep.subr.bf16.mxu0 0
    %2556 = vmatpush1.bf16.msra.mxu0 0
    %2557 = vmatprep.subr.bf16.mxu0 0
    %2558 = vmatpush1.bf16.msra.mxu0 0
    %2559 = vmatprep.subr.bf16.mxu0 0
    %2560 = vmatpush1.bf16.msra.mxu0 0
    %2561 = vmatprep.subr.bf16.mxu0 0
    %2562 = vmatpush1.bf16.msra.mxu0 0
    %2563 = vmatprep.mubr.bf16.mxu0 0
    %2564 = vmatmul.mubr.bf16.gmra.mrb[0].mxu0 %v1637
    %v2565 = vpop.f32.mrb[0].mxu0
    %v2566 = vadd.f32 %v1781, %v2565
    %v2567 = vpop.f32.mrb[0].mxu0
    %v2568 = vadd.f32 %v1785, %v2567
    %v2569 = vpop.f32.mrb[0].mxu0
    %v2570 = vpop.f32.mrb[0].mxu0
    %2571 = vdwg.mxu0
    %2572 = vmatprep.subr.bf16.mxu0 %v2239
    %2573 = vmatpush1.bf16.msra.mxu0 %v2238
    %2574 = vmatprep.subr.bf16.mxu0 %v2255
    %2575 = vmatpush1.bf16.msra.mxu0 %v2254
    %2576 = vmatprep.subr.bf16.mxu0 %v2271
    %2577 = vmatpush1.bf16.msra.mxu0 %v2270
    %2578 = vmatprep.subr.bf16.mxu0 %v2287
    %2579 = vmatpush1.bf16.msra.mxu0 %v2286
    %2580 = vmatprep.subr.bf16.mxu0 %v2303
    %2581 = vmatpush1.bf16.msra.mxu0 %v2302
    %2582 = vmatprep.subr.bf16.mxu0 %v2319
    %2583 = vmatpush1.bf16.msra.mxu0 %v2318
    %2584 = vmatprep.subr.bf16.mxu0 %v2335
    %2585 = vmatpush1.bf16.msra.mxu0 %v2334
    %2586 = vmatprep.subr.bf16.mxu0 %v2351
    %2587 = vmatpush1.bf16.msra.mxu0 %v2350
    %2588 = vmatprep.subr.bf16.mxu0 0
    %2589 = vmatpush1.bf16.msra.mxu0 0
    %2590 = vmatprep.subr.bf16.mxu0 0
    %2591 = vmatpush1.bf16.msra.mxu0 0
    %2592 = vmatprep.subr.bf16.mxu0 0
    %2593 = vmatpush1.bf16.msra.mxu0 0
    %2594 = vmatprep.subr.bf16.mxu0 0
    %2595 = vmatpush1.bf16.msra.mxu0 0
    %2596 = vmatprep.subr.bf16.mxu0 0
    %2597 = vmatpush1.bf16.msra.mxu0 0
    %2598 = vmatprep.subr.bf16.mxu0 0
    %2599 = vmatpush1.bf16.msra.mxu0 0
    %2600 = vmatprep.subr.bf16.mxu0 0
    %2601 = vmatpush1.bf16.msra.mxu0 0
    %2602 = vmatprep.subr.bf16.mxu0 0
    %2603 = vmatpush1.bf16.msra.mxu0 0
    %2604 = vmatprep.mubr.bf16.mxu0 0
    %2605 = vmatmul.mubr.bf16.gmra.mrb[0].mxu0 %v1637
    %v2606 = vpop.f32.mrb[0].mxu0
    %v2607 = vadd.f32 %v1789, %v2606
    %v2608 = vpop.f32.mrb[0].mxu0
    %v2609 = vadd.f32 %v1793, %v2608
    %v2610 = vpop.f32.mrb[0].mxu0
    %v2611 = vpop.f32.mrb[0].mxu0
    %2612 = vdwg.mxu0
    %2613 = vmatprep.subr.bf16.mxu0 %v2241
    %2614 = vmatpush1.bf16.msra.mxu0 %v2240
    %2615 = vmatprep.subr.bf16.mxu0 %v2257
    %2616 = vmatpush1.bf16.msra.mxu0 %v2256
    %2617 = vmatprep.subr.bf16.mxu0 %v2273
    %2618 = vmatpush1.bf16.msra.mxu0 %v2272
    %2619 = vmatprep.subr.bf16.mxu0 %v2289
    %2620 = vmatpush1.bf16.msra.mxu0 %v2288
    %2621 = vmatprep.subr.bf16.mxu0 %v2305
    %2622 = vmatpush1.bf16.msra.mxu0 %v2304
    %2623 = vmatprep.subr.bf16.mxu0 %v2321
    %2624 = vmatpush1.bf16.msra.mxu0 %v2320
    %2625 = vmatprep.subr.bf16.mxu0 %v2337
    %2626 = vmatpush1.bf16.msra.mxu0 %v2336
    %2627 = vmatprep.subr.bf16.mxu0 %v2353
    %2628 = vmatpush1.bf16.msra.mxu0 %v2352
    %2629 = vmatprep.subr.bf16.mxu0 0
    %2630 = vmatpush1.bf16.msra.mxu0 0
    %2631 = vmatprep.subr.bf16.mxu0 0
    %2632 = vmatpush1.bf16.msra.mxu0 0
    %2633 = vmatprep.subr.bf16.mxu0 0
    %2634 = vmatpush1.bf16.msra.mxu0 0
    %2635 = vmatprep.subr.bf16.mxu0 0
    %2636 = vmatpush1.bf16.msra.mxu0 0
    %2637 = vmatprep.subr.bf16.mxu0 0
    %2638 = vmatpush1.bf16.msra.mxu0 0
    %2639 = vmatprep.subr.bf16.mxu0 0
    %2640 = vmatpush1.bf16.msra.mxu0 0
    %2641 = vmatprep.subr.bf16.mxu0 0
    %2642 = vmatpush1.bf16.msra.mxu0 0
    %2643 = vmatprep.subr.bf16.mxu0 0
    %2644 = vmatpush1.bf16.msra.mxu0 0
    %2645 = vmatprep.mubr.bf16.mxu0 0
    %2646 = vmatmul.mubr.bf16.gmra.mrb[0].mxu0 %v1637
    %v2647 = vpop.f32.mrb[0].mxu0
    %v2648 = vadd.f32 %v1797, %v2647
    %v2649 = vpop.f32.mrb[0].mxu0
    %v2650 = vadd.f32 %v1801, %v2649
    %v2651 = vpop.f32.mrb[0].mxu0
    %v2652 = vpop.f32.mrb[0].mxu0
    %2653 = vdwg.mxu0
    %2654 = vmatprep.subr.bf16.mxu0 %v2243
    %2655 = vmatpush1.bf16.msra.mxu0 %v2242
    %2656 = vmatprep.subr.bf16.mxu0 %v2259
    %2657 = vmatpush1.bf16.msra.mxu0 %v2258
    %2658 = vmatprep.subr.bf16.mxu0 %v2275
    %2659 = vmatpush1.bf16.msra.mxu0 %v2274
    %2660 = vmatprep.subr.bf16.mxu0 %v2291
    %2661 = vmatpush1.bf16.msra.mxu0 %v2290
    %2662 = vmatprep.subr.bf16.mxu0 %v2307
    %2663 = vmatpush1.bf16.msra.mxu0 %v2306
    %2664 = vmatprep.subr.bf16.mxu0 %v2323
    %2665 = vmatpush1.bf16.msra.mxu0 %v2322
    %2666 = vmatprep.subr.bf16.mxu0 %v2339
    %2667 = vmatpush1.bf16.msra.mxu0 %v2338
    %2668 = vmatprep.subr.bf16.mxu0 %v2355
    %2669 = vmatpush1.bf16.msra.mxu0 %v2354
    %2670 = vmatprep.subr.bf16.mxu0 0
    %2671 = vmatpush1.bf16.msra.mxu0 0
    %2672 = vmatprep.subr.bf16.mxu0 0
    %2673 = vmatpush1.bf16.msra.mxu0 0
    %2674 = vmatprep.subr.bf16.mxu0 0
    %2675 = vmatpush1.bf16.msra.mxu0 0
    %2676 = vmatprep.subr.bf16.mxu0 0
    %2677 = vmatpush1.bf16.msra.mxu0 0
    %2678 = vmatprep.subr.bf16.mxu0 0
    %2679 = vmatpush1.bf16.msra.mxu0 0
    %2680 = vmatprep.subr.bf16.mxu0 0
    %2681 = vmatpush1.bf16.msra.mxu0 0
    %2682 = vmatprep.subr.bf16.mxu0 0
    %2683 = vmatpush1.bf16.msra.mxu0 0
    %2684 = vmatprep.subr.bf16.mxu0 0
    %2685 = vmatpush1.bf16.msra.mxu0 0
    %2686 = vmatprep.mubr.bf16.mxu0 0
    %2687 = vmatmul.mubr.bf16.gmra.mrb[0].mxu0 %v1637
    %v2688 = vpop.f32.mrb[0].mxu0
    %v2689 = vadd.f32 %v1805, %v2688
    %v2690 = vpop.f32.mrb[0].mxu0
    %v2691 = vadd.f32 %v1809, %v2690
    %v2692 = vpop.f32.mrb[0].mxu0
    %v2693 = vpop.f32.mrb[0].mxu0
    %2694 = vdwg.mxu0
    %2695 = vmatprep.subr.bf16.mxu0 %v2245
    %2696 = vmatpush1.bf16.msra.mxu0 %v2244
    %2697 = vmatprep.subr.bf16.mxu0 %v2261
    %2698 = vmatpush1.bf16.msra.mxu0 %v2260
    %2699 = vmatprep.subr.bf16.mxu0 %v2277
    %2700 = vmatpush1.bf16.msra.mxu0 %v2276
    %2701 = vmatprep.subr.bf16.mxu0 %v2293
    %2702 = vmatpush1.bf16.msra.mxu0 %v2292
    %2703 = vmatprep.subr.bf16.mxu0 %v2309
    %2704 = vmatpush1.bf16.msra.mxu0 %v2308
    %2705 = vmatprep.subr.bf16.mxu0 %v2325
    %2706 = vmatpush1.bf16.msra.mxu0 %v2324
    %2707 = vmatprep.subr.bf16.mxu0 %v2341
    %2708 = vmatpush1.bf16.msra.mxu0 %v2340
    %2709 = vmatprep.subr.bf16.mxu0 %v2357
    %2710 = vmatpush1.bf16.msra.mxu0 %v2356
    %2711 = vmatprep.subr.bf16.mxu0 0
    %2712 = vmatpush1.bf16.msra.mxu0 0
    %2713 = vmatprep.subr.bf16.mxu0 0
    %2714 = vmatpush1.bf16.msra.mxu0 0
    %2715 = vmatprep.subr.bf16.mxu0 0
    %2716 = vmatpush1.bf16.msra.mxu0 0
    %2717 = vmatprep.subr.bf16.mxu0 0
    %2718 = vmatpush1.bf16.msra.mxu0 0
    %2719 = vmatprep.subr.bf16.mxu0 0
    %2720 = vmatpush1.bf16.msra.mxu0 0
    %2721 = vmatprep.subr.bf16.mxu0 0
    %2722 = vmatpush1.bf16.msra.mxu0 0
    %2723 = vmatprep.subr.bf16.mxu0 0
    %2724 = vmatpush1.bf16.msra.mxu0 0
    %2725 = vmatprep.subr.bf16.mxu0 0
    %2726 = vmatpush1.bf16.msra.mxu0 0
    %2727 = vmatprep.mubr.bf16.mxu0 0
    %2728 = vmatmul.mubr.bf16.gmra.mrb[0].mxu0 %v1637
    %v2729 = vpop.f32.mrb[0].mxu0
    %v2730 = vadd.f32 %v1813, %v2729
    %v2731 = vpop.f32.mrb[0].mxu0
    %v2732 = vadd.f32 %v1817, %v2731
    %v2733 = vpop.f32.mrb[0].mxu0
    %v2734 = vpop.f32.mrb[0].mxu0
    %2735 = vdwg.mxu0
    %2736 = vmatprep.subr.bf16.mxu0 %v2247
    %2737 = vmatpush1.bf16.msra.mxu0 %v2246
    %2738 = vmatprep.subr.bf16.mxu0 %v2263
    %2739 = vmatpush1.bf16.msra.mxu0 %v2262
    %2740 = vmatprep.subr.bf16.mxu0 %v2279
    %2741 = vmatpush1.bf16.msra.mxu0 %v2278
    %2742 = vmatprep.subr.bf16.mxu0 %v2295
    %2743 = vmatpush1.bf16.msra.mxu0 %v2294
    %2744 = vmatprep.subr.bf16.mxu0 %v2311
    %2745 = vmatpush1.bf16.msra.mxu0 %v2310
    %2746 = vmatprep.subr.bf16.mxu0 %v2327
    %2747 = vmatpush1.bf16.msra.mxu0 %v2326
    %2748 = vmatprep.subr.bf16.mxu0 %v2343
    %2749 = vmatpush1.bf16.msra.mxu0 %v2342
    %2750 = vmatprep.subr.bf16.mxu0 %v2359
    %2751 = vmatpush1.bf16.msra.mxu0 %v2358
    %2752 = vmatprep.subr.bf16.mxu0 0
    %2753 = vmatpush1.bf16.msra.mxu0 0
    %2754 = vmatprep.subr.bf16.mxu0 0
    %2755 = vmatpush1.bf16.msra.mxu0 0
    %2756 = vmatprep.subr.bf16.mxu0 0
    %2757 = vmatpush1.bf16.msra.mxu0 0
    %2758 = vmatprep.subr.bf16.mxu0 0
    %2759 = vmatpush1.bf16.msra.mxu0 0
    %2760 = vmatprep.subr.bf16.mxu0 0
    %2761 = vmatpush1.bf16.msra.mxu0 0
    %2762 = vmatprep.subr.bf16.mxu0 0
    %2763 = vmatpush1.bf16.msra.mxu0 0
    %2764 = vmatprep.subr.bf16.mxu0 0
    %2765 = vmatpush1.bf16.msra.mxu0 0
    %2766 = vmatprep.subr.bf16.mxu0 0
    %2767 = vmatpush1.bf16.msra.mxu0 0
    %2768 = vmatprep.mubr.bf16.mxu0 0
    %2769 = vmatmul.mubr.bf16.gmra.mrb[0].mxu0 %v1637
    %v2770 = vpop.f32.mrb[0].mxu0
    %v2771 = vadd.f32 %v1821, %v2770
    %v2772 = vpop.f32.mrb[0].mxu0
    %v2773 = vadd.f32 %v1825, %v2772
    %v2774 = vpop.f32.mrb[0].mxu0
    %v2775 = vpop.f32.mrb[0].mxu0
    %2776 = vdwg.mxu0
    %2777 = vmatprep.subr.bf16.mxu0 %v2249
    %2778 = vmatpush1.bf16.msra.mxu0 %v2248
    %2779 = vmatprep.subr.bf16.mxu0 %v2265
    %2780 = vmatpush1.bf16.msra.mxu0 %v2264
    %2781 = vmatprep.subr.bf16.mxu0 %v2281
    %2782 = vmatpush1.bf16.msra.mxu0 %v2280
    %2783 = vmatprep.subr.bf16.mxu0 %v2297
    %2784 = vmatpush1.bf16.msra.mxu0 %v2296
    %2785 = vmatprep.subr.bf16.mxu0 %v2313
    %2786 = vmatpush1.bf16.msra.mxu0 %v2312
    %2787 = vmatprep.subr.bf16.mxu0 %v2329
    %2788 = vmatpush1.bf16.msra.mxu0 %v2328
    %2789 = vmatprep.subr.bf16.mxu0 %v2345
    %2790 = vmatpush1.bf16.msra.mxu0 %v2344
    %2791 = vmatprep.subr.bf16.mxu0 %v2361
    %2792 = vmatpush1.bf16.msra.mxu0 %v2360
    %2793 = vmatprep.subr.bf16.mxu0 0
    %2794 = vmatpush1.bf16.msra.mxu0 0
    %2795 = vmatprep.subr.bf16.mxu0 0
    %2796 = vmatpush1.bf16.msra.mxu0 0
    %2797 = vmatprep.subr.bf16.mxu0 0
    %2798 = vmatpush1.bf16.msra.mxu0 0
    %2799 = vmatprep.subr.bf16.mxu0 0
    %2800 = vmatpush1.bf16.msra.mxu0 0
    %2801 = vmatprep.subr.bf16.mxu0 0
    %2802 = vmatpush1.bf16.msra.mxu0 0
    %2803 = vmatprep.subr.bf16.mxu0 0
    %2804 = vmatpush1.bf16.msra.mxu0 0
    %2805 = vmatprep.subr.bf16.mxu0 0
    %2806 = vmatpush1.bf16.msra.mxu0 0
    %2807 = vmatprep.subr.bf16.mxu0 0
    %2808 = vmatpush1.bf16.msra.mxu0 0
    %2809 = vmatprep.mubr.bf16.mxu0 0
    %2810 = vmatmul.mubr.bf16.gmra.mrb[0].mxu0 %v1637
    %v2811 = vpop.f32.mrb[0].mxu0
    %v2812 = vadd.f32 %v1829, %v2811
    %v2813 = vpop.f32.mrb[0].mxu0
    %v2814 = vadd.f32 %v1833, %v2813
    %v2815 = vpop.f32.mrb[0].mxu0
    %v2816 = vpop.f32.mrb[0].mxu0
    %2817 = vdwg.mxu0
    %v2818 = vmax.f32 %v2525, %v2607
    %v2819 = vmax.f32 %v2527, %v2609
    %v2820 = vmax.f32 %v2566, %v2648
    %v2821 = vmax.f32 %v2568, %v2650
    %v2822 = vmax.f32 %v2818, %v2689
    %v2823 = vmax.f32 %v2819, %v2691
    %v2824 = vmax.f32 %v2820, %v2730
    %v2825 = vmax.f32 %v2821, %v2732
    %v2826 = vmax.f32 %v2822, %v2771
    %v2827 = vmax.f32 %v2823, %v2773
    %v2828 = vmax.f32 %v2824, %v2812
    %v2829 = vmax.f32 %v2825, %v2814
    %v2830 = vmax.f32 %v2826, %v2827
    %v2831 = vmax.f32 %v2828, %v2829
    %v2832 = vmax.f32 %v2830, %v2831
    %2833 = vmax.xlane.f32.xlu0 %v2832
    %v2834 = vpop.xlane.xlu0 %2833
    %v2835 = vsub.f32 %v2525, %v2834
    %v2836 = vsub.f32 %v2527, %v2834
    %v2837 = vsub.f32 %v2566, %v2834
    %v2838 = vsub.f32 %v2568, %v2834
    %v2839 = vsub.f32 %v2607, %v2834
    %v2840 = vsub.f32 %v2609, %v2834
    %v2841 = vsub.f32 %v2648, %v2834
    %v2842 = vsub.f32 %v2650, %v2834
    %v2843 = vsub.f32 %v2689, %v2834
    %v2844 = vsub.f32 %v2691, %v2834
    %v2845 = vsub.f32 %v2730, %v2834
    %v2846 = vsub.f32 %v2732, %v2834
    %v2847 = vsub.f32 %v2771, %v2834
    %v2848 = vsub.f32 %v2773, %v2834
    %v2849 = vsub.f32 %v2812, %v2834
    %v2850 = vsub.f32 %v2814, %v2834
    %v2851 = vmul.f32 %v2835, 1.442695
    %v2852 = vpow.pop %v2851
    %v2853 = vmul.f32 %v2836, 1.442695
    %v2854 = vpow.pop %v2853
    %v2855 = vmul.f32 %v2837, 1.442695
    %v2856 = vpow.pop %v2855
    %v2857 = vmul.f32 %v2838, 1.442695
    %v2858 = vpow.pop %v2857
    %v2859 = vmul.f32 %v2839, 1.442695
    %v2860 = vpow.pop %v2859
    %v2861 = vmul.f32 %v2840, 1.442695
    %v2862 = vpow.pop %v2861
    %v2863 = vmul.f32 %v2841, 1.442695
    %v2864 = vpow.pop %v2863
    %v2865 = vmul.f32 %v2842, 1.442695
    %v2866 = vpow.pop %v2865
    %v2867 = vmul.f32 %v2843, 1.442695
    %v2868 = vpow.pop %v2867
    %v2869 = vmul.f32 %v2844, 1.442695
    %v2870 = vpow.pop %v2869
    %v2871 = vmul.f32 %v2845, 1.442695
    %v2872 = vpow.pop %v2871
    %v2873 = vmul.f32 %v2846, 1.442695
    %v2874 = vpow.pop %v2873
    %v2875 = vmul.f32 %v2847, 1.442695
    %v2876 = vpow.pop %v2875
    %v2877 = vmul.f32 %v2848, 1.442695
    %v2878 = vpow.pop %v2877
    %v2879 = vmul.f32 %v2849, 1.442695
    %v2880 = vpow.pop %v2879
    %v2881 = vmul.f32 %v2850, 1.442695
    %v2882 = vpow.pop %v2881
    %v2883 = vadd.f32 %v2852, %v2854
    %v2884 = vadd.f32 %v2883, %v2856
    %v2885 = vadd.f32 %v2884, %v2858
    %v2886 = vadd.f32 %v2885, %v2860
    %v2887 = vadd.f32 %v2886, %v2862
    %v2888 = vadd.f32 %v2887, %v2864
    %v2889 = vadd.f32 %v2888, %v2866
    %v2890 = vadd.f32 %v2889, %v2868
    %v2891 = vadd.f32 %v2890, %v2870
    %v2892 = vadd.f32 %v2891, %v2872
    %v2893 = vadd.f32 %v2892, %v2874
    %v2894 = vadd.f32 %v2893, %v2876
    %v2895 = vadd.f32 %v2894, %v2878
    %v2896 = vadd.f32 %v2895, %v2880
    %v2897 = vadd.f32 %v2896, %v2882
    %2898 = vadd.xlane.f32.xlu0 %v2897
    %v2899 = vpop.xlane.xlu0 %2898
    %v2900 = vlog2.pop %v2899
    %v2901 = vmul.f32 %v2900, 0.6931472
    %v2902 = vadd.f32 %v2834, %v2901
    %v2903 = vsub.f32 %v2525, %v2902
    %v2904 = vsub.f32 %v2527, %v2902
    %v2905 = vsub.f32 %v2566, %v2902
    %v2906 = vsub.f32 %v2568, %v2902
    %v2907 = vsub.f32 %v2607, %v2902
    %v2908 = vsub.f32 %v2609, %v2902
    %v2909 = vsub.f32 %v2648, %v2902
    %v2910 = vsub.f32 %v2650, %v2902
    %v2911 = vsub.f32 %v2689, %v2902
    %v2912 = vsub.f32 %v2691, %v2902
    %v2913 = vsub.f32 %v2730, %v2902
    %v2914 = vsub.f32 %v2732, %v2902
    %v2915 = vsub.f32 %v2771, %v2902
    %v2916 = vsub.f32 %v2773, %v2902
    %v2917 = vsub.f32 %v2812, %v2902
    %v2918 = vsub.f32 %v2814, %v2902
    %2919 = vst [vmem:[#allocation21] sm:$0xff] %v2903
    %2920 = vst [vmem:[#allocation21 + $0x8] sm:$0xff] %v2904
    %2921 = vst [vmem:[#allocation21 + $0x10] sm:$0xff] %v2905
    %2922 = vst [vmem:[#allocation21 + $0x18] sm:$0xff] %v2906
    %2923 = vst [vmem:[#allocation21 + $0x20] sm:$0xff] %v2907
    %2924 = vst [vmem:[#allocation21 + $0x28] sm:$0xff] %v2908
    %2925 = vst [vmem:[#allocation21 + $0x30] sm:$0xff] %v2909
    %2926 = vst [vmem:[#allocation21 + $0x38] sm:$0xff] %v2910
    %2927 = vst [vmem:[#allocation21 + $0x40] sm:$0xff] %v2911
    %2928 = vst [vmem:[#allocation21 + $0x48] sm:$0xff] %v2912
    %2929 = vst [vmem:[#allocation21 + $0x50] sm:$0xff] %v2913
    %2930 = vst [vmem:[#allocation21 + $0x58] sm:$0xff] %v2914
    %2931 = vst [vmem:[#allocation21 + $0x60] sm:$0xff] %v2915
    %2932 = vst [vmem:[#allocation21 + $0x68] sm:$0xff] %v2916
    %2933 = vst [vmem:[#allocation21 + $0x70] sm:$0xff] %v2917
    %2934 = vst [vmem:[#allocation21 + $0x78] sm:$0xff] %v2918
    %vm2935 = vcmask 7168
    %2936 = vst.msk [vmem:[%s16] sm:$0xff] %vm2935, %v2902
    // Predicated region
    $region102: #{tpu_custom_call.1} parent=1 // pred_check
      _
    $region103: #{tpu_custom_call.1} parent=1 // pred_check_branch
      %2938 = sbr.rel (0) target = $region105
    $region104: #{tpu_custom_call.1} parent=1 // pred_region
      %s2940 = ssub.s32 2048, 2048
      %2941 = vsyncadd [#allocation8], %s2940
      %s2943 = sshll.u32 [#allocation21], 4
      %s2944 = int_to_ptr.vmem [resolvable:$true] %s2943
      %2946 = dma.vmem_to_hbm [thread:$0]  %s2944, 2048, %s15, [#allocation8]
    $region105: #{tpu_custom_call.1} parent=1 // pred_fallthru
      _
    // Predicated region
    $region106: #{tpu_custom_call.1} parent=1 // pred_check
      _
    $region107: #{tpu_custom_call.1} parent=1 // pred_check_branch
      %2948 = sbr.rel (0) target = $region109
    $region108: #{tpu_custom_call.1} parent=1 // pred_region
      _
    $region109: #{tpu_custom_call.1} parent=1 // pred_fallthru
      _
    // Predicated region
    $region110: #{tpu_custom_call.1} parent=1 // pred_check
      _
    $region111: #{tpu_custom_call.1} parent=1 // pred_check_branch
      %2950 = sbr.rel (0) target = $region113
    $region112: #{tpu_custom_call.1} parent=1 // pred_region
      %s2952 = ssub.s32 256, 256
      %2953 = vsyncadd [#allocation23], %s2952
      %s2954 = sshll.u32 [#allocation22], 4
      %s2955 = int_to_ptr.vmem [resolvable:$true] %s2954
      %2960 = dma.vmem_to_hbm [thread:$0]  %s2955, 256, %s17, [#allocation23], 128, 128, 8
    $region113: #{tpu_custom_call.1} parent=1 // pred_fallthru
      _
    // Predicated region
    $region114: #{tpu_custom_call.1} parent=1 // pred_check
      _
    $region115: #{tpu_custom_call.1} parent=1 // pred_check_branch
      %2962 = sbr.rel (0) target = $region117
    $region116: #{tpu_custom_call.1} parent=1 // pred_region
      %s2964 = ssub.s32 256, 256
      %2965 = vsyncadd [#allocation23], %s2964
      %s2966 = sshll.u32 [#allocation24], 4
      %s2967 = int_to_ptr.vmem [resolvable:$true] %s2966
      %2972 = dma.vmem_to_hbm [thread:$0]  %s2967, 256, %s18, [#allocation23], 128, 128, 8
    $region117: #{tpu_custom_call.1} parent=1 // pred_fallthru
      _
    // Predicated region
    $region118: #{tpu_custom_call.1} parent=1 // pred_check
      _
    $region119: #{tpu_custom_call.1} parent=1 // pred_check_branch
      %2974 = sbr.rel (0) target = $region121
    $region120: #{tpu_custom_call.1} parent=1 // pred_region
      %2975 = dma.done [#allocation8], 2048
    $region121: #{tpu_custom_call.1} parent=1 // pred_fallthru
      _
    // Predicated region
    $region122: #{tpu_custom_call.1} parent=1 // pred_check
      _
    $region123: #{tpu_custom_call.1} parent=1 // pred_check_branch
      %2977 = sbr.rel (0) target = $region125
    $region124: #{tpu_custom_call.1} parent=1 // pred_region
      _
    $region125: #{tpu_custom_call.1} parent=1 // pred_fallthru
      _
    // Predicated region
    $region126: #{tpu_custom_call.1} parent=1 // pred_check
      _
    $region127: #{tpu_custom_call.1} parent=1 // pred_check_branch
      %2979 = sbr.rel (0) target = $region129
    $region128: #{tpu_custom_call.1} parent=1 // pred_region
      %2980 = dma.done [#allocation23], 256
    $region129: #{tpu_custom_call.1} parent=1 // pred_fallthru
      _
    // Predicated region
    $region130: #{tpu_custom_call.1} parent=1 // pred_check
      _
    $region131: #{tpu_custom_call.1} parent=1 // pred_check_branch
      %2982 = sbr.rel (0) target = $region133
    $region132: #{tpu_custom_call.1} parent=1 // pred_region
      %2983 = dma.done [#allocation23], 256
    $region133: #{tpu_custom_call.1} parent=1 // pred_fallthru
      _
    %2984 = vsyncpa [#allocation7], 1
    %2985 = vsyncpa [#allocation10], 1
    %2986 = vsyncpa [#allocation13], 1
    %2987 = vsyncpa [#allocation16], 1
    %2988 = vsyncpa [#allocation19], 1
    %2989 = vsyncpa [#allocation8], 1
    %2990 = vsyncpa [#allocation23], 1

</llo_original>
